<compile_context>
chip_gen: v7x
topology: tpu7x:2x2x1
jax: 0.10.0
libtpu: 0.0.40
codegen_flags: <defaults>
</compile_context>

<pallas_src>
import functools

import jax
import jax.numpy as jnp
from jax.experimental import pallas as pl
from jax.experimental.pallas import tpu as pltpu

# ----------------------- model hyper-params (scaled-down ViT-B/16) -----------
IMG = 16
PATCH = 8
IN_CH = 3
HIDDEN = 64            # "in_features" (768 in the real vit_b_16)
HEADS = 4
HEAD_DIM = HIDDEN // HEADS
MLP_DIM = 128
LAYERS = 2
HEAD_CH = 32           # 512 in the real head
NUM_CLASSES = 16
SE_REDUCTION = 16
SE_HID = max(NUM_CLASSES // SE_REDUCTION, 1)
LN_EPS = 1e-6
BN_EPS = 1e-5

N_PATCH = (IMG // PATCH) ** 2          # 4
SEQ = N_PATCH + 1                      # 5 (cls + patches)
PATCH_DIM = IN_CH * PATCH * PATCH      # 192


# ------------------------------- in-kernel helpers ----------------------------
def _mxu_dot(a, w):
    # bf16 operands on the MXU, f32 accumulation.
    return jnp.dot(a.astype(jnp.bfloat16), w.astype(jnp.bfloat16),
                   preferred_element_type=jnp.float32)


def _layernorm(x, g, b, eps=LN_EPS):
    mu = jnp.mean(x, axis=-1, keepdims=True)
    var = jnp.mean((x - mu) ** 2, axis=-1, keepdims=True)
    return (x - mu) * jax.lax.rsqrt(var + eps) * g + b


def _gelu(y):
    # TODO(synk): torch nn.GELU is the exact erf-GELU; Mosaic has no erf
    # lowering, so we use the tanh approximation here.
    c = jnp.float32(0.7978845608028654)  # sqrt(2/pi)
    return 0.5 * y * (1.0 + jnp.tanh(c * (y + 0.044715 * y * y * y)))


# ------------------------------- fused forward kernel ------------------------
def fused_forward_kernel(p_ref,
                         patch_w, patch_b, cls_tok, pos_emb,
                         ln1_g, ln1_b, qkv_w, qkv_b, out_w, out_b,
                         ln2_g, ln2_b, fc1_w, fc1_b, fc2_w, fc2_b,
                         lnf_g, lnf_b, cw, cb, bn_g, bn_b, bn_m, bn_v,
                         fw, fb, sw1, sb1, sw2, sb2,
                         o_ref, *, scale):
    # ---- patch embed (stride-PATCH conv as matmul) + cls token + pos emb ----
    tok = _mxu_dot(p_ref[0], patch_w[...]) + patch_b[...]       # (N_PATCH, HIDDEN)
    x = jnp.concatenate([cls_tok[...], tok], axis=0) + pos_emb[...]  # (SEQ, HIDDEN)

    # ---- transformer encoder layers (static unroll; stacked weights) ----
    for li in range(LAYERS):
        # self-attention block: x = x + MHA(LN1(x))
        h = _layernorm(x, ln1_g[li], ln1_b[li])
        qkv = _mxu_dot(h, qkv_w[li]) + qkv_b[li]                # (SEQ, 3*HIDDEN)

        head_outs = []
        for hi in range(HEADS):                                 # static unroll
            q = qkv[:, hi * HEAD_DIM:(hi + 1) * HEAD_DIM]
            k = qkv[:, HIDDEN + hi * HEAD_DIM:HIDDEN + (hi + 1) * HEAD_DIM]
            v = qkv[:, 2 * HIDDEN + hi * HEAD_DIM:2 * HIDDEN + (hi + 1) * HEAD_DIM]
            s = jax.lax.dot_general(
                q.astype(jnp.bfloat16), k.astype(jnp.bfloat16),
                (((1,), (1,)), ((), ())),
                preferred_element_type=jnp.float32) * scale     # (SEQ, SEQ)
            s = s - jnp.max(s, axis=-1, keepdims=True)
            p = jnp.exp(s)
            p = p * pl.reciprocal(jnp.sum(p, axis=-1, keepdims=True), approx=True)
            head_outs.append(_mxu_dot(p, v))                    # (SEQ, HEAD_DIM)
        attn = jnp.concatenate(head_outs, axis=-1)              # (SEQ, HIDDEN)

        x = x + _mxu_dot(attn, out_w[li]) + out_b[li]

        # MLP block: x = x + MLP(LN2(x))
        h2 = _layernorm(x, ln2_g[li], ln2_b[li])
        m = _gelu(_mxu_dot(h2, fc1_w[li]) + fc1_b[li])          # (SEQ, MLP_DIM)
        x = x + _mxu_dot(m, fc2_w[li]) + fc2_b[li]

    # ---- classifier head on the class token ----
    c = _layernorm(x[0:1, :], lnf_g[...], lnf_b[...])           # (1, HIDDEN)

    # heads: Conv2d(HIDDEN->HEAD_CH, 1x1) on a (1,1) map == Linear.
    h = _mxu_dot(c, cw[...]) + cb[...]                          # (1, HEAD_CH)
    # BatchNorm2d (eval, running stats) + ReLU.
    h = (h - bn_m[...]) * jax.lax.rsqrt(bn_v[...] + BN_EPS) * bn_g[...] + bn_b[...]
    h = jnp.maximum(h, 0.0)
    # Flatten (1x1 map) + Linear(HEAD_CH, NUM_CLASSES).
    logits = _mxu_dot(h, fw[...]) + fb[...]                     # (1, NUM_CLASSES)

    # SEBlock on (B, NUM_CLASSES, 1, 1): AdaptiveAvgPool2d(1) of a 1x1 map is
    # identity, so: logits * sigmoid(fc2(relu(fc1(logits)))).
    se = jnp.dot(logits, sw1[...], preferred_element_type=jnp.float32) + sb1[...]
    se = jnp.maximum(se, 0.0)
    se = jnp.dot(se, sw2[...], preferred_element_type=jnp.float32) + sb2[...]
    se = 1.0 / (1.0 + jnp.exp(-se))
    o_ref[0] = logits * se


# ------------------------------- wrapper --------------------------------------
def _full_spec(a):
    # Full-array, grid-invariant block: DMA'd once, stays VMEM-resident.
    return pl.BlockSpec(a.shape, lambda b, _n=a.ndim: (0,) * _n)


def sp_model_forward(x, params):
    B = x.shape[0]
    hp = IMG // PATCH

    # Unpack NCHW image into (B, n_patches, C*p*p) so the stride-p patch conv
    # becomes a matmul (pure layout glue, done once in XLA).
    patches = x.reshape(B, IN_CH, hp, PATCH, hp, PATCH)
    patches = patches.transpose(0, 2, 4, 1, 3, 5)              # (B, hp, hp, C, p, p)
    patches = patches.reshape(B, hp * hp, PATCH_DIM)

    weights = (
        params["patch_w"], params["patch_b"], params["cls_token"], params["pos_emb"],
        params["ln1_g"], params["ln1_b"], params["qkv_w"], params["qkv_b"],
        params["out_w"], params["out_b"], params["ln2_g"], params["ln2_b"],
        params["fc1_w"], params["fc1_b"], params["fc2_w"], params["fc2_b"],
        params["ln_f_g"], params["ln_f_b"],
        params["head_conv_w"], params["head_conv_b"],
        params["bn_g"], params["bn_b"], params["bn_m"], params["bn_v"],
        params["head_fc_w"], params["head_fc_b"],
        params["se_w1"], params["se_b1"], params["se_w2"], params["se_b2"],
    )

    p_spec = pl.BlockSpec((1, N_PATCH, PATCH_DIM), lambda b: (b, 0, 0))
    o_spec = pl.BlockSpec((1, 1, NUM_CLASSES), lambda b: (b, 0, 0))

    out = pl.pallas_call(
        functools.partial(fused_forward_kernel,
                          scale=1.0 / float(HEAD_DIM) ** 0.5),
        out_shape=jax.ShapeDtypeStruct((B, 1, NUM_CLASSES), jnp.float32),
        grid=(B,),
        in_specs=[p_spec] + [_full_spec(a) for a in weights],
        out_specs=o_spec,
        compiler_params=pltpu.CompilerParams(dimension_semantics=("parallel",)),
    )(patches, *weights)
    return out.reshape(B, NUM_CLASSES)


# ------------------------------- params ---------------------------------------
def init_params(key):
    ks = iter(jax.random.split(key, 64))

    def nrm(shape, scale=0.02):
        return scale * jax.random.normal(next(ks), shape, dtype=jnp.float32)

    def bf16(a):
        return a.astype(jnp.bfloat16)

    params = {
        # MXU weights stored in bf16 (f32 accumulation in-kernel).
        "patch_w": bf16(nrm((PATCH_DIM, HIDDEN))),
        "patch_b": nrm((1, HIDDEN)),
        "cls_token": nrm((1, HIDDEN)),
        "pos_emb": nrm((SEQ, HIDDEN)),
        # Per-layer weights stacked on a leading LAYERS axis.
        "ln1_g": jnp.ones((LAYERS, 1, HIDDEN), jnp.float32),
        "ln1_b": jnp.zeros((LAYERS, 1, HIDDEN), jnp.float32),
        "qkv_w": bf16(nrm((LAYERS, HIDDEN, 3 * HIDDEN))),
        "qkv_b": nrm((LAYERS, 1, 3 * HIDDEN)),
        "out_w": bf16(nrm((LAYERS, HIDDEN, HIDDEN))),
        "out_b": nrm((LAYERS, 1, HIDDEN)),
        "ln2_g": jnp.ones((LAYERS, 1, HIDDEN), jnp.float32),
        "ln2_b": jnp.zeros((LAYERS, 1, HIDDEN), jnp.float32),
        "fc1_w": bf16(nrm((LAYERS, HIDDEN, MLP_DIM))),
        "fc1_b": nrm((LAYERS, 1, MLP_DIM)),
        "fc2_w": bf16(nrm((LAYERS, MLP_DIM, HIDDEN))),
        "fc2_b": nrm((LAYERS, 1, HIDDEN)),
        # Final LN + custom head + SEBlock.
        "ln_f_g": jnp.ones((1, HIDDEN), jnp.float32),
        "ln_f_b": jnp.zeros((1, HIDDEN), jnp.float32),
        "head_conv_w": bf16(nrm((HIDDEN, HEAD_CH))),
        "head_conv_b": nrm((1, HEAD_CH)),
        "bn_g": jnp.ones((1, HEAD_CH), jnp.float32),
        "bn_b": jnp.zeros((1, HEAD_CH), jnp.float32),
        "bn_m": jnp.zeros((1, HEAD_CH), jnp.float32),
        "bn_v": jnp.ones((1, HEAD_CH), jnp.float32),
        "head_fc_w": bf16(nrm((HEAD_CH, NUM_CLASSES))),
        "head_fc_b": nrm((1, NUM_CLASSES)),
        "se_w1": nrm((NUM_CLASSES, SE_HID)),
        "se_b1": nrm((1, SE_HID)),
        "se_w2": nrm((SE_HID, NUM_CLASSES)),
        "se_b2": nrm((1, NUM_CLASSES)),
    }
    return params


if __name__ == "__main__":
    key = jax.random.PRNGKey(0)
    pkey, xkey = jax.random.split(key)
    params = init_params(pkey)
    x = jax.random.normal(xkey, (2, IN_CH, IMG, IMG), dtype=jnp.float32)

    out = jax.jit(sp_model_forward)(x, params)
    jax.block_until_ready(out)
    assert out.shape == (2, NUM_CLASSES)
    assert jnp.all(jnp.isfinite(out))
    print("KERNEL_OK")
</pallas_src>

<mosaic_0001>
module attributes {stable_mosaic.version = 11 : i64} {
  func.func @fused_forward_kernel(%arg0: i32, %arg1: memref<1x4x192xf32, #tpu.memory_space<vmem>>, %arg2: memref<192x64xbf16, #tpu.memory_space<vmem>>, %arg3: memref<1x64xf32, #tpu.memory_space<vmem>>, %arg4: memref<1x64xf32, #tpu.memory_space<vmem>>, %arg5: memref<5x64xf32, #tpu.memory_space<vmem>>, %arg6: memref<2x1x64xf32, #tpu.memory_space<vmem>>, %arg7: memref<2x1x64xf32, #tpu.memory_space<vmem>>, %arg8: memref<2x64x192xbf16, #tpu.memory_space<vmem>>, %arg9: memref<2x1x192xf32, #tpu.memory_space<vmem>>, %arg10: memref<2x64x64xbf16, #tpu.memory_space<vmem>>, %arg11: memref<2x1x64xf32, #tpu.memory_space<vmem>>, %arg12: memref<2x1x64xf32, #tpu.memory_space<vmem>>, %arg13: memref<2x1x64xf32, #tpu.memory_space<vmem>>, %arg14: memref<2x64x128xbf16, #tpu.memory_space<vmem>>, %arg15: memref<2x1x128xf32, #tpu.memory_space<vmem>>, %arg16: memref<2x128x64xbf16, #tpu.memory_space<vmem>>, %arg17: memref<2x1x64xf32, #tpu.memory_space<vmem>>, %arg18: memref<1x64xf32, #tpu.memory_space<vmem>>, %arg19: memref<1x64xf32, #tpu.memory_space<vmem>>, %arg20: memref<64x32xbf16, #tpu.memory_space<vmem>>, %arg21: memref<1x32xf32, #tpu.memory_space<vmem>>, %arg22: memref<1x32xf32, #tpu.memory_space<vmem>>, %arg23: memref<1x32xf32, #tpu.memory_space<vmem>>, %arg24: memref<1x32xf32, #tpu.memory_space<vmem>>, %arg25: memref<1x32xf32, #tpu.memory_space<vmem>>, %arg26: memref<32x16xbf16, #tpu.memory_space<vmem>>, %arg27: memref<1x16xf32, #tpu.memory_space<vmem>>, %arg28: memref<16x1xf32, #tpu.memory_space<vmem>>, %arg29: memref<1x1xf32, #tpu.memory_space<vmem>>, %arg30: memref<1x16xf32, #tpu.memory_space<vmem>>, %arg31: memref<1x16xf32, #tpu.memory_space<vmem>>, %arg32: memref<1x1x16xf32, #tpu.memory_space<vmem>>) attributes {dimension_semantics = [#tpu.dimension_semantics<parallel>], iteration_bounds = array<i64: 2>, scalar_prefetch = 0 : i64, scratch_operands = 0 : i64, tpu.core_type = #tpu.core_type<tc>, window_params = [{transform_indices = @transform_0, window_bounds = array<i64: 1, 4, 192>}, {pipeline_mode = #tpu.pipeline_mode<synchronous>, transform_indices = @transform_1, window_bounds = array<i64: 192, 64>}, {pipeline_mode = #tpu.pipeline_mode<synchronous>, transform_indices = @transform_2, window_bounds = array<i64: 1, 64>}, {pipeline_mode = #tpu.pipeline_mode<synchronous>, transform_indices = @transform_3, window_bounds = array<i64: 1, 64>}, {pipeline_mode = #tpu.pipeline_mode<synchronous>, transform_indices = @transform_4, window_bounds = array<i64: 5, 64>}, {pipeline_mode = #tpu.pipeline_mode<synchronous>, transform_indices = @transform_5, window_bounds = array<i64: 2, 1, 64>}, {pipeline_mode = #tpu.pipeline_mode<synchronous>, transform_indices = @transform_6, window_bounds = array<i64: 2, 1, 64>}, {pipeline_mode = #tpu.pipeline_mode<synchronous>, transform_indices = @transform_7, window_bounds = array<i64: 2, 64, 192>}, {pipeline_mode = #tpu.pipeline_mode<synchronous>, transform_indices = @transform_8, window_bounds = array<i64: 2, 1, 192>}, {pipeline_mode = #tpu.pipeline_mode<synchronous>, transform_indices = @transform_9, window_bounds = array<i64: 2, 64, 64>}, {pipeline_mode = #tpu.pipeline_mode<synchronous>, transform_indices = @transform_10, window_bounds = array<i64: 2, 1, 64>}, {pipeline_mode = #tpu.pipeline_mode<synchronous>, transform_indices = @transform_11, window_bounds = array<i64: 2, 1, 64>}, {pipeline_mode = #tpu.pipeline_mode<synchronous>, transform_indices = @transform_12, window_bounds = array<i64: 2, 1, 64>}, {pipeline_mode = #tpu.pipeline_mode<synchronous>, transform_indices = @transform_13, window_bounds = array<i64: 2, 64, 128>}, {pipeline_mode = #tpu.pipeline_mode<synchronous>, transform_indices = @transform_14, window_bounds = array<i64: 2, 1, 128>}, {pipeline_mode = #tpu.pipeline_mode<synchronous>, transform_indices = @transform_15, window_bounds = array<i64: 2, 128, 64>}, {pipeline_mode = #tpu.pipeline_mode<synchronous>, transform_indices = @transform_16, window_bounds = array<i64: 2, 1, 64>}, {pipeline_mode = #tpu.pipeline_mode<synchronous>, transform_indices = @transform_17, window_bounds = array<i64: 1, 64>}, {pipeline_mode = #tpu.pipeline_mode<synchronous>, transform_indices = @transform_18, window_bounds = array<i64: 1, 64>}, {pipeline_mode = #tpu.pipeline_mode<synchronous>, transform_indices = @transform_19, window_bounds = array<i64: 64, 32>}, {pipeline_mode = #tpu.pipeline_mode<synchronous>, transform_indices = @transform_20, window_bounds = array<i64: 1, 32>}, {pipeline_mode = #tpu.pipeline_mode<synchronous>, transform_indices = @transform_21, window_bounds = array<i64: 1, 32>}, {pipeline_mode = #tpu.pipeline_mode<synchronous>, transform_indices = @transform_22, window_bounds = array<i64: 1, 32>}, {pipeline_mode = #tpu.pipeline_mode<synchronous>, transform_indices = @transform_23, window_bounds = array<i64: 1, 32>}, {pipeline_mode = #tpu.pipeline_mode<synchronous>, transform_indices = @transform_24, window_bounds = array<i64: 1, 32>}, {pipeline_mode = #tpu.pipeline_mode<synchronous>, transform_indices = @transform_25, window_bounds = array<i64: 32, 16>}, {pipeline_mode = #tpu.pipeline_mode<synchronous>, transform_indices = @transform_26, window_bounds = array<i64: 1, 16>}, {pipeline_mode = #tpu.pipeline_mode<synchronous>, transform_indices = @transform_27, window_bounds = array<i64: 16, 1>}, {pipeline_mode = #tpu.pipeline_mode<synchronous>, transform_indices = @transform_28, window_bounds = array<i64: 1, 1>}, {pipeline_mode = #tpu.pipeline_mode<synchronous>, transform_indices = @transform_29, window_bounds = array<i64: 1, 16>}, {pipeline_mode = #tpu.pipeline_mode<synchronous>, transform_indices = @transform_30, window_bounds = array<i64: 1, 16>}, {transform_indices = @transform_31, window_bounds = array<i64: 1, 1, 16>}]} {
    %c0 = arith.constant 0 : index
    %c0_0 = arith.constant 0 : index
    %c0_1 = arith.constant 0 : index
    %0 = vector.load %arg1[%c0, %c0_0, %c0_1] : memref<1x4x192xf32, #tpu.memory_space<vmem>>, vector<1x4x192xf32>
    %1 = vector.shape_cast %0 : vector<1x4x192xf32> to vector<4x192xf32>
    %c0_2 = arith.constant 0 : index
    %c0_3 = arith.constant 0 : index
    %2 = vector.load %arg2[%c0_2, %c0_3] : memref<192x64xbf16, #tpu.memory_space<vmem>>, vector<192x64xbf16>
    %3 = arith.truncf %1 : vector<4x192xf32> to vector<4x192xbf16>
    %cst = arith.constant dense<0.000000e+00> : vector<4x64xf32>
    %4 = tpu.matmul %3, %2, %cst {dimension_numbers = #tpu.dot_dimension_numbers<[1], [0], [0], [1], [0, 0, 1, 1], [], []>} : vector<4x192xbf16>, vector<192x64xbf16>, vector<4x64xf32> -> vector<4x64xf32>
    %c0_4 = arith.constant 0 : index
    %c0_5 = arith.constant 0 : index
    %5 = vector.load %arg3[%c0_4, %c0_5] : memref<1x64xf32, #tpu.memory_space<vmem>>, vector<1x64xf32>
    %6 = vector.broadcast %5 : vector<1x64xf32> to vector<4x64xf32>
    %7 = arith.addf %4, %6 : vector<4x64xf32>
    %c0_6 = arith.constant 0 : index
    %c0_7 = arith.constant 0 : index
    %8 = vector.load %arg4[%c0_6, %c0_7] : memref<1x64xf32, #tpu.memory_space<vmem>>, vector<1x64xf32>
    %9 = tpu.concatenate %8, %7 in 0 : vector<1x64xf32>, vector<4x64xf32> -> vector<5x64xf32>
    %c0_8 = arith.constant 0 : index
    %c0_9 = arith.constant 0 : index
    %10 = vector.load %arg5[%c0_8, %c0_9] : memref<5x64xf32, #tpu.memory_space<vmem>>, vector<5x64xf32>
    %11 = arith.addf %9, %10 : vector<5x64xf32>
    %c0_10 = arith.constant 0 : index
    %c0_11 = arith.constant 0 : index
    %c0_12 = arith.constant 0 : index
    %12 = vector.load %arg6[%c0_10, %c0_11, %c0_12] : memref<2x1x64xf32, #tpu.memory_space<vmem>>, vector<1x1x64xf32>
    %13 = vector.shape_cast %12 : vector<1x1x64xf32> to vector<1x64xf32>
    %c0_13 = arith.constant 0 : index
    %c0_14 = arith.constant 0 : index
    %c0_15 = arith.constant 0 : index
    %14 = vector.load %arg7[%c0_13, %c0_14, %c0_15] : memref<2x1x64xf32, #tpu.memory_space<vmem>>, vector<1x1x64xf32>
    %15 = vector.shape_cast %14 : vector<1x1x64xf32> to vector<1x64xf32>
    %cst_16 = arith.constant dense<0.000000e+00> : vector<5xf32>
    %16 = vector.multi_reduction <add>, %11, %cst_16 [1] : vector<5x64xf32> to vector<5xf32>
    %17 = vector.shape_cast %16 : vector<5xf32> to vector<5x1xf32>
    %cst_17 = arith.constant 6.400000e+01 : f32
    %18 = vector.broadcast %cst_17 : f32 to vector<5x1xf32>
    %19 = arith.divf %17, %18 : vector<5x1xf32>
    %20 = vector.broadcast %19 : vector<5x1xf32> to vector<5x64xf32>
    %21 = arith.subf %11, %20 : vector<5x64xf32>
    %22 = arith.mulf %21, %21 : vector<5x64xf32>
    %cst_18 = arith.constant dense<0.000000e+00> : vector<5xf32>
    %23 = vector.multi_reduction <add>, %22, %cst_18 [1] : vector<5x64xf32> to vector<5xf32>
    %24 = vector.shape_cast %23 : vector<5xf32> to vector<5x1xf32>
    %cst_19 = arith.constant 6.400000e+01 : f32
    %25 = vector.broadcast %cst_19 : f32 to vector<5x1xf32>
    %26 = arith.divf %24, %25 : vector<5x1xf32>
    %27 = vector.broadcast %19 : vector<5x1xf32> to vector<5x64xf32>
    %28 = arith.subf %11, %27 : vector<5x64xf32>
    %cst_20 = arith.constant 9.99999997E-7 : f32
    %29 = vector.broadcast %cst_20 : f32 to vector<5x1xf32>
    %30 = arith.addf %26, %29 : vector<5x1xf32>
    %31 = math.rsqrt %30 : vector<5x1xf32>
    %32 = vector.broadcast %31 : vector<5x1xf32> to vector<5x64xf32>
    %33 = arith.mulf %28, %32 : vector<5x64xf32>
    %34 = vector.broadcast %13 : vector<1x64xf32> to vector<5x64xf32>
    %35 = arith.mulf %33, %34 : vector<5x64xf32>
    %36 = vector.broadcast %15 : vector<1x64xf32> to vector<5x64xf32>
    %37 = arith.addf %35, %36 : vector<5x64xf32>
    %c0_21 = arith.constant 0 : index
    %c0_22 = arith.constant 0 : index
    %c0_23 = arith.constant 0 : index
    %38 = vector.load %arg8[%c0_21, %c0_22, %c0_23] : memref<2x64x192xbf16, #tpu.memory_space<vmem>>, vector<1x64x192xbf16>
    %39 = vector.shape_cast %38 : vector<1x64x192xbf16> to vector<64x192xbf16>
    %40 = arith.truncf %37 : vector<5x64xf32> to vector<5x64xbf16>
    %cst_24 = arith.constant dense<0.000000e+00> : vector<5x192xf32>
    %41 = tpu.matmul %40, %39, %cst_24 {dimension_numbers = #tpu.dot_dimension_numbers<[1], [0], [0], [1], [0, 0, 1, 1], [], []>} : vector<5x64xbf16>, vector<64x192xbf16>, vector<5x192xf32> -> vector<5x192xf32>
    %c0_25 = arith.constant 0 : index
    %c0_26 = arith.constant 0 : index
    %c0_27 = arith.constant 0 : index
    %42 = vector.load %arg9[%c0_25, %c0_26, %c0_27] : memref<2x1x192xf32, #tpu.memory_space<vmem>>, vector<1x1x192xf32>
    %43 = vector.shape_cast %42 : vector<1x1x192xf32> to vector<1x192xf32>
    %44 = vector.broadcast %43 : vector<1x192xf32> to vector<5x192xf32>
    %45 = arith.addf %41, %44 : vector<5x192xf32>
    %46 = vector.extract_strided_slice %45 {offsets = [0, 0], sizes = [5, 16], strides = [1, 1]} : vector<5x192xf32> to vector<5x16xf32>
    %47 = vector.extract_strided_slice %45 {offsets = [0, 64], sizes = [5, 16], strides = [1, 1]} : vector<5x192xf32> to vector<5x16xf32>
    %48 = vector.extract_strided_slice %45 {offsets = [0, 128], sizes = [5, 16], strides = [1, 1]} : vector<5x192xf32> to vector<5x16xf32>
    %49 = arith.truncf %46 : vector<5x16xf32> to vector<5x16xbf16>
    %50 = arith.truncf %47 : vector<5x16xf32> to vector<5x16xbf16>
    %cst_28 = arith.constant dense<0.000000e+00> : vector<5x5xf32>
    %51 = tpu.matmul %49, %50, %cst_28 {dimension_numbers = #tpu.dot_dimension_numbers<[1], [1], [0], [0], [0, 0, 1, 0], [], []>} : vector<5x16xbf16>, vector<5x16xbf16>, vector<5x5xf32> -> vector<5x5xf32>
    %cst_29 = arith.constant 2.500000e-01 : f32
    %52 = vector.broadcast %cst_29 : f32 to vector<5x5xf32>
    %53 = arith.mulf %51, %52 : vector<5x5xf32>
    %cst_30 = arith.constant dense<0xFF800000> : vector<5xf32>
    %54 = vector.multi_reduction <maximumf>, %53, %cst_30 [1] : vector<5x5xf32> to vector<5xf32>
    %55 = vector.shape_cast %54 : vector<5xf32> to vector<5x1xf32>
    %56 = vector.broadcast %55 : vector<5x1xf32> to vector<5x5xf32>
    %57 = arith.subf %53, %56 : vector<5x5xf32>
    %58 = math.exp %57 : vector<5x5xf32>
    %cst_31 = arith.constant dense<0.000000e+00> : vector<5xf32>
    %59 = vector.multi_reduction <add>, %58, %cst_31 [1] : vector<5x5xf32> to vector<5xf32>
    %60 = vector.shape_cast %59 : vector<5xf32> to vector<5x1xf32>
    %61 = tpu.reciprocal %60 {approx = true} : vector<5x1xf32> -> vector<5x1xf32>
    %62 = vector.broadcast %61 : vector<5x1xf32> to vector<5x5xf32>
    %63 = arith.mulf %58, %62 : vector<5x5xf32>
    %64 = arith.truncf %63 : vector<5x5xf32> to vector<5x5xbf16>
    %65 = arith.truncf %48 : vector<5x16xf32> to vector<5x16xbf16>
    %cst_32 = arith.constant dense<0.000000e+00> : vector<5x16xf32>
    %66 = tpu.matmul %64, %65, %cst_32 {dimension_numbers = #tpu.dot_dimension_numbers<[1], [0], [0], [1], [0, 0, 1, 1], [], []>} : vector<5x5xbf16>, vector<5x16xbf16>, vector<5x16xf32> -> vector<5x16xf32>
    %67 = vector.extract_strided_slice %45 {offsets = [0, 16], sizes = [5, 16], strides = [1, 1]} : vector<5x192xf32> to vector<5x16xf32>
    %68 = vector.extract_strided_slice %45 {offsets = [0, 80], sizes = [5, 16], strides = [1, 1]} : vector<5x192xf32> to vector<5x16xf32>
    %69 = vector.extract_strided_slice %45 {offsets = [0, 144], sizes = [5, 16], strides = [1, 1]} : vector<5x192xf32> to vector<5x16xf32>
    %70 = arith.truncf %67 : vector<5x16xf32> to vector<5x16xbf16>
    %71 = arith.truncf %68 : vector<5x16xf32> to vector<5x16xbf16>
    %cst_33 = arith.constant dense<0.000000e+00> : vector<5x5xf32>
    %72 = tpu.matmul %70, %71, %cst_33 {dimension_numbers = #tpu.dot_dimension_numbers<[1], [1], [0], [0], [0, 0, 1, 0], [], []>} : vector<5x16xbf16>, vector<5x16xbf16>, vector<5x5xf32> -> vector<5x5xf32>
    %cst_34 = arith.constant 2.500000e-01 : f32
    %73 = vector.broadcast %cst_34 : f32 to vector<5x5xf32>
    %74 = arith.mulf %72, %73 : vector<5x5xf32>
    %cst_35 = arith.constant dense<0xFF800000> : vector<5xf32>
    %75 = vector.multi_reduction <maximumf>, %74, %cst_35 [1] : vector<5x5xf32> to vector<5xf32>
    %76 = vector.shape_cast %75 : vector<5xf32> to vector<5x1xf32>
    %77 = vector.broadcast %76 : vector<5x1xf32> to vector<5x5xf32>
    %78 = arith.subf %74, %77 : vector<5x5xf32>
    %79 = math.exp %78 : vector<5x5xf32>
    %cst_36 = arith.constant dense<0.000000e+00> : vector<5xf32>
    %80 = vector.multi_reduction <add>, %79, %cst_36 [1] : vector<5x5xf32> to vector<5xf32>
    %81 = vector.shape_cast %80 : vector<5xf32> to vector<5x1xf32>
    %82 = tpu.reciprocal %81 {approx = true} : vector<5x1xf32> -> vector<5x1xf32>
    %83 = vector.broadcast %82 : vector<5x1xf32> to vector<5x5xf32>
    %84 = arith.mulf %79, %83 : vector<5x5xf32>
    %85 = arith.truncf %84 : vector<5x5xf32> to vector<5x5xbf16>
    %86 = arith.truncf %69 : vector<5x16xf32> to vector<5x16xbf16>
    %cst_37 = arith.constant dense<0.000000e+00> : vector<5x16xf32>
    %87 = tpu.matmul %85, %86, %cst_37 {dimension_numbers = #tpu.dot_dimension_numbers<[1], [0], [0], [1], [0, 0, 1, 1], [], []>} : vector<5x5xbf16>, vector<5x16xbf16>, vector<5x16xf32> -> vector<5x16xf32>
    %88 = vector.extract_strided_slice %45 {offsets = [0, 32], sizes = [5, 16], strides = [1, 1]} : vector<5x192xf32> to vector<5x16xf32>
    %89 = vector.extract_strided_slice %45 {offsets = [0, 96], sizes = [5, 16], strides = [1, 1]} : vector<5x192xf32> to vector<5x16xf32>
    %90 = vector.extract_strided_slice %45 {offsets = [0, 160], sizes = [5, 16], strides = [1, 1]} : vector<5x192xf32> to vector<5x16xf32>
    %91 = arith.truncf %88 : vector<5x16xf32> to vector<5x16xbf16>
    %92 = arith.truncf %89 : vector<5x16xf32> to vector<5x16xbf16>
    %cst_38 = arith.constant dense<0.000000e+00> : vector<5x5xf32>
    %93 = tpu.matmul %91, %92, %cst_38 {dimension_numbers = #tpu.dot_dimension_numbers<[1], [1], [0], [0], [0, 0, 1, 0], [], []>} : vector<5x16xbf16>, vector<5x16xbf16>, vector<5x5xf32> -> vector<5x5xf32>
    %cst_39 = arith.constant 2.500000e-01 : f32
    %94 = vector.broadcast %cst_39 : f32 to vector<5x5xf32>
    %95 = arith.mulf %93, %94 : vector<5x5xf32>
    %cst_40 = arith.constant dense<0xFF800000> : vector<5xf32>
    %96 = vector.multi_reduction <maximumf>, %95, %cst_40 [1] : vector<5x5xf32> to vector<5xf32>
    %97 = vector.shape_cast %96 : vector<5xf32> to vector<5x1xf32>
    %98 = vector.broadcast %97 : vector<5x1xf32> to vector<5x5xf32>
    %99 = arith.subf %95, %98 : vector<5x5xf32>
    %100 = math.exp %99 : vector<5x5xf32>
    %cst_41 = arith.constant dense<0.000000e+00> : vector<5xf32>
    %101 = vector.multi_reduction <add>, %100, %cst_41 [1] : vector<5x5xf32> to vector<5xf32>
    %102 = vector.shape_cast %101 : vector<5xf32> to vector<5x1xf32>
    %103 = tpu.reciprocal %102 {approx = true} : vector<5x1xf32> -> vector<5x1xf32>
    %104 = vector.broadcast %103 : vector<5x1xf32> to vector<5x5xf32>
    %105 = arith.mulf %100, %104 : vector<5x5xf32>
    %106 = arith.truncf %105 : vector<5x5xf32> to vector<5x5xbf16>
    %107 = arith.truncf %90 : vector<5x16xf32> to vector<5x16xbf16>
    %cst_42 = arith.constant dense<0.000000e+00> : vector<5x16xf32>
    %108 = tpu.matmul %106, %107, %cst_42 {dimension_numbers = #tpu.dot_dimension_numbers<[1], [0], [0], [1], [0, 0, 1, 1], [], []>} : vector<5x5xbf16>, vector<5x16xbf16>, vector<5x16xf32> -> vector<5x16xf32>
    %109 = vector.extract_strided_slice %45 {offsets = [0, 48], sizes = [5, 16], strides = [1, 1]} : vector<5x192xf32> to vector<5x16xf32>
    %110 = vector.extract_strided_slice %45 {offsets = [0, 112], sizes = [5, 16], strides = [1, 1]} : vector<5x192xf32> to vector<5x16xf32>
    %111 = vector.extract_strided_slice %45 {offsets = [0, 176], sizes = [5, 16], strides = [1, 1]} : vector<5x192xf32> to vector<5x16xf32>
    %112 = arith.truncf %109 : vector<5x16xf32> to vector<5x16xbf16>
    %113 = arith.truncf %110 : vector<5x16xf32> to vector<5x16xbf16>
    %cst_43 = arith.constant dense<0.000000e+00> : vector<5x5xf32>
    %114 = tpu.matmul %112, %113, %cst_43 {dimension_numbers = #tpu.dot_dimension_numbers<[1], [1], [0], [0], [0, 0, 1, 0], [], []>} : vector<5x16xbf16>, vector<5x16xbf16>, vector<5x5xf32> -> vector<5x5xf32>
    %cst_44 = arith.constant 2.500000e-01 : f32
    %115 = vector.broadcast %cst_44 : f32 to vector<5x5xf32>
    %116 = arith.mulf %114, %115 : vector<5x5xf32>
    %cst_45 = arith.constant dense<0xFF800000> : vector<5xf32>
    %117 = vector.multi_reduction <maximumf>, %116, %cst_45 [1] : vector<5x5xf32> to vector<5xf32>
    %118 = vector.shape_cast %117 : vector<5xf32> to vector<5x1xf32>
    %119 = vector.broadcast %118 : vector<5x1xf32> to vector<5x5xf32>
    %120 = arith.subf %116, %119 : vector<5x5xf32>
    %121 = math.exp %120 : vector<5x5xf32>
    %cst_46 = arith.constant dense<0.000000e+00> : vector<5xf32>
    %122 = vector.multi_reduction <add>, %121, %cst_46 [1] : vector<5x5xf32> to vector<5xf32>
    %123 = vector.shape_cast %122 : vector<5xf32> to vector<5x1xf32>
    %124 = tpu.reciprocal %123 {approx = true} : vector<5x1xf32> -> vector<5x1xf32>
    %125 = vector.broadcast %124 : vector<5x1xf32> to vector<5x5xf32>
    %126 = arith.mulf %121, %125 : vector<5x5xf32>
    %127 = arith.truncf %126 : vector<5x5xf32> to vector<5x5xbf16>
    %128 = arith.truncf %111 : vector<5x16xf32> to vector<5x16xbf16>
    %cst_47 = arith.constant dense<0.000000e+00> : vector<5x16xf32>
    %129 = tpu.matmul %127, %128, %cst_47 {dimension_numbers = #tpu.dot_dimension_numbers<[1], [0], [0], [1], [0, 0, 1, 1], [], []>} : vector<5x5xbf16>, vector<5x16xbf16>, vector<5x16xf32> -> vector<5x16xf32>
    %130 = tpu.concatenate %66, %87, %108, %129 in 1 : vector<5x16xf32>, vector<5x16xf32>, vector<5x16xf32>, vector<5x16xf32> -> vector<5x64xf32>
    %c0_48 = arith.constant 0 : index
    %c0_49 = arith.constant 0 : index
    %c0_50 = arith.constant 0 : index
    %131 = vector.load %arg10[%c0_48, %c0_49, %c0_50] : memref<2x64x64xbf16, #tpu.memory_space<vmem>>, vector<1x64x64xbf16>
    %132 = vector.shape_cast %131 : vector<1x64x64xbf16> to vector<64x64xbf16>
    %133 = arith.truncf %130 : vector<5x64xf32> to vector<5x64xbf16>
    %cst_51 = arith.constant dense<0.000000e+00> : vector<5x64xf32>
    %134 = tpu.matmul %133, %132, %cst_51 {dimension_numbers = #tpu.dot_dimension_numbers<[1], [0], [0], [1], [0, 0, 1, 1], [], []>} : vector<5x64xbf16>, vector<64x64xbf16>, vector<5x64xf32> -> vector<5x64xf32>
    %135 = arith.addf %11, %134 : vector<5x64xf32>
    %c0_52 = arith.constant 0 : index
    %c0_53 = arith.constant 0 : index
    %c0_54 = arith.constant 0 : index
    %136 = vector.load %arg11[%c0_52, %c0_53, %c0_54] : memref<2x1x64xf32, #tpu.memory_space<vmem>>, vector<1x1x64xf32>
    %137 = vector.shape_cast %136 : vector<1x1x64xf32> to vector<1x64xf32>
    %138 = vector.broadcast %137 : vector<1x64xf32> to vector<5x64xf32>
    %139 = arith.addf %135, %138 : vector<5x64xf32>
    %c0_55 = arith.constant 0 : index
    %c0_56 = arith.constant 0 : index
    %c0_57 = arith.constant 0 : index
    %140 = vector.load %arg12[%c0_55, %c0_56, %c0_57] : memref<2x1x64xf32, #tpu.memory_space<vmem>>, vector<1x1x64xf32>
    %141 = vector.shape_cast %140 : vector<1x1x64xf32> to vector<1x64xf32>
    %c0_58 = arith.constant 0 : index
    %c0_59 = arith.constant 0 : index
    %c0_60 = arith.constant 0 : index
    %142 = vector.load %arg13[%c0_58, %c0_59, %c0_60] : memref<2x1x64xf32, #tpu.memory_space<vmem>>, vector<1x1x64xf32>
    %143 = vector.shape_cast %142 : vector<1x1x64xf32> to vector<1x64xf32>
    %cst_61 = arith.constant dense<0.000000e+00> : vector<5xf32>
    %144 = vector.multi_reduction <add>, %139, %cst_61 [1] : vector<5x64xf32> to vector<5xf32>
    %145 = vector.shape_cast %144 : vector<5xf32> to vector<5x1xf32>
    %cst_62 = arith.constant 6.400000e+01 : f32
    %146 = vector.broadcast %cst_62 : f32 to vector<5x1xf32>
    %147 = arith.divf %145, %146 : vector<5x1xf32>
    %148 = vector.broadcast %147 : vector<5x1xf32> to vector<5x64xf32>
    %149 = arith.subf %139, %148 : vector<5x64xf32>
    %150 = arith.mulf %149, %149 : vector<5x64xf32>
    %cst_63 = arith.constant dense<0.000000e+00> : vector<5xf32>
    %151 = vector.multi_reduction <add>, %150, %cst_63 [1] : vector<5x64xf32> to vector<5xf32>
    %152 = vector.shape_cast %151 : vector<5xf32> to vector<5x1xf32>
    %cst_64 = arith.constant 6.400000e+01 : f32
    %153 = vector.broadcast %cst_64 : f32 to vector<5x1xf32>
    %154 = arith.divf %152, %153 : vector<5x1xf32>
    %155 = vector.broadcast %147 : vector<5x1xf32> to vector<5x64xf32>
    %156 = arith.subf %139, %155 : vector<5x64xf32>
    %cst_65 = arith.constant 9.99999997E-7 : f32
    %157 = vector.broadcast %cst_65 : f32 to vector<5x1xf32>
    %158 = arith.addf %154, %157 : vector<5x1xf32>
    %159 = math.rsqrt %158 : vector<5x1xf32>
    %160 = vector.broadcast %159 : vector<5x1xf32> to vector<5x64xf32>
    %161 = arith.mulf %156, %160 : vector<5x64xf32>
    %162 = vector.broadcast %141 : vector<1x64xf32> to vector<5x64xf32>
    %163 = arith.mulf %161, %162 : vector<5x64xf32>
    %164 = vector.broadcast %143 : vector<1x64xf32> to vector<5x64xf32>
    %165 = arith.addf %163, %164 : vector<5x64xf32>
    %c0_66 = arith.constant 0 : index
    %c0_67 = arith.constant 0 : index
    %c0_68 = arith.constant 0 : index
    %166 = vector.load %arg14[%c0_66, %c0_67, %c0_68] : memref<2x64x128xbf16, #tpu.memory_space<vmem>>, vector<1x64x128xbf16>
    %167 = vector.shape_cast %166 : vector<1x64x128xbf16> to vector<64x128xbf16>
    %168 = arith.truncf %165 : vector<5x64xf32> to vector<5x64xbf16>
    %cst_69 = arith.constant dense<0.000000e+00> : vector<5x128xf32>
    %169 = tpu.matmul %168, %167, %cst_69 {dimension_numbers = #tpu.dot_dimension_numbers<[1], [0], [0], [1], [0, 0, 1, 1], [], []>} : vector<5x64xbf16>, vector<64x128xbf16>, vector<5x128xf32> -> vector<5x128xf32>
    %c0_70 = arith.constant 0 : index
    %c0_71 = arith.constant 0 : index
    %c0_72 = arith.constant 0 : index
    %170 = vector.load %arg15[%c0_70, %c0_71, %c0_72] : memref<2x1x128xf32, #tpu.memory_space<vmem>>, vector<1x1x128xf32>
    %171 = vector.shape_cast %170 : vector<1x1x128xf32> to vector<1x128xf32>
    %172 = vector.broadcast %171 : vector<1x128xf32> to vector<5x128xf32>
    %173 = arith.addf %169, %172 : vector<5x128xf32>
    %cst_73 = arith.constant 5.000000e-01 : f32
    %174 = vector.broadcast %cst_73 : f32 to vector<5x128xf32>
    %175 = arith.mulf %174, %173 : vector<5x128xf32>
    %cst_74 = arith.constant 4.471500e-02 : f32
    %176 = vector.broadcast %cst_74 : f32 to vector<5x128xf32>
    %177 = arith.mulf %176, %173 : vector<5x128xf32>
    %178 = arith.mulf %177, %173 : vector<5x128xf32>
    %179 = arith.mulf %178, %173 : vector<5x128xf32>
    %180 = arith.addf %173, %179 : vector<5x128xf32>
    %cst_75 = arith.constant 0.797884583 : f32
    %181 = vector.broadcast %cst_75 : f32 to vector<5x128xf32>
    %182 = arith.mulf %181, %180 : vector<5x128xf32>
    %183 = math.tanh %182 : vector<5x128xf32>
    %cst_76 = arith.constant 1.000000e+00 : f32
    %184 = vector.broadcast %cst_76 : f32 to vector<5x128xf32>
    %185 = arith.addf %184, %183 : vector<5x128xf32>
    %186 = arith.mulf %175, %185 : vector<5x128xf32>
    %c0_77 = arith.constant 0 : index
    %c0_78 = arith.constant 0 : index
    %c0_79 = arith.constant 0 : index
    %187 = vector.load %arg16[%c0_77, %c0_78, %c0_79] : memref<2x128x64xbf16, #tpu.memory_space<vmem>>, vector<1x128x64xbf16>
    %188 = vector.shape_cast %187 : vector<1x128x64xbf16> to vector<128x64xbf16>
    %189 = arith.truncf %186 : vector<5x128xf32> to vector<5x128xbf16>
    %cst_80 = arith.constant dense<0.000000e+00> : vector<5x64xf32>
    %190 = tpu.matmul %189, %188, %cst_80 {dimension_numbers = #tpu.dot_dimension_numbers<[1], [0], [0], [1], [0, 0, 1, 1], [], []>} : vector<5x128xbf16>, vector<128x64xbf16>, vector<5x64xf32> -> vector<5x64xf32>
    %191 = arith.addf %139, %190 : vector<5x64xf32>
    %c0_81 = arith.constant 0 : index
    %c0_82 = arith.constant 0 : index
    %c0_83 = arith.constant 0 : index
    %192 = vector.load %arg17[%c0_81, %c0_82, %c0_83] : memref<2x1x64xf32, #tpu.memory_space<vmem>>, vector<1x1x64xf32>
    %193 = vector.shape_cast %192 : vector<1x1x64xf32> to vector<1x64xf32>
    %194 = vector.broadcast %193 : vector<1x64xf32> to vector<5x64xf32>
    %195 = arith.addf %191, %194 : vector<5x64xf32>
    %c1 = arith.constant 1 : index
    %c0_84 = arith.constant 0 : index
    %c0_85 = arith.constant 0 : index
    %196 = vector.load %arg6[%c1, %c0_84, %c0_85] : memref<2x1x64xf32, #tpu.memory_space<vmem>>, vector<1x1x64xf32>
    %197 = vector.shape_cast %196 : vector<1x1x64xf32> to vector<1x64xf32>
    %c1_86 = arith.constant 1 : index
    %c0_87 = arith.constant 0 : index
    %c0_88 = arith.constant 0 : index
    %198 = vector.load %arg7[%c1_86, %c0_87, %c0_88] : memref<2x1x64xf32, #tpu.memory_space<vmem>>, vector<1x1x64xf32>
    %199 = vector.shape_cast %198 : vector<1x1x64xf32> to vector<1x64xf32>
    %cst_89 = arith.constant dense<0.000000e+00> : vector<5xf32>
    %200 = vector.multi_reduction <add>, %195, %cst_89 [1] : vector<5x64xf32> to vector<5xf32>
    %201 = vector.shape_cast %200 : vector<5xf32> to vector<5x1xf32>
    %cst_90 = arith.constant 6.400000e+01 : f32
    %202 = vector.broadcast %cst_90 : f32 to vector<5x1xf32>
    %203 = arith.divf %201, %202 : vector<5x1xf32>
    %204 = vector.broadcast %203 : vector<5x1xf32> to vector<5x64xf32>
    %205 = arith.subf %195, %204 : vector<5x64xf32>
    %206 = arith.mulf %205, %205 : vector<5x64xf32>
    %cst_91 = arith.constant dense<0.000000e+00> : vector<5xf32>
    %207 = vector.multi_reduction <add>, %206, %cst_91 [1] : vector<5x64xf32> to vector<5xf32>
    %208 = vector.shape_cast %207 : vector<5xf32> to vector<5x1xf32>
    %cst_92 = arith.constant 6.400000e+01 : f32
    %209 = vector.broadcast %cst_92 : f32 to vector<5x1xf32>
    %210 = arith.divf %208, %209 : vector<5x1xf32>
    %211 = vector.broadcast %203 : vector<5x1xf32> to vector<5x64xf32>
    %212 = arith.subf %195, %211 : vector<5x64xf32>
    %cst_93 = arith.constant 9.99999997E-7 : f32
    %213 = vector.broadcast %cst_93 : f32 to vector<5x1xf32>
    %214 = arith.addf %210, %213 : vector<5x1xf32>
    %215 = math.rsqrt %214 : vector<5x1xf32>
    %216 = vector.broadcast %215 : vector<5x1xf32> to vector<5x64xf32>
    %217 = arith.mulf %212, %216 : vector<5x64xf32>
    %218 = vector.broadcast %197 : vector<1x64xf32> to vector<5x64xf32>
    %219 = arith.mulf %217, %218 : vector<5x64xf32>
    %220 = vector.broadcast %199 : vector<1x64xf32> to vector<5x64xf32>
    %221 = arith.addf %219, %220 : vector<5x64xf32>
    %c1_94 = arith.constant 1 : index
    %c0_95 = arith.constant 0 : index
    %c0_96 = arith.constant 0 : index
    %222 = vector.load %arg8[%c1_94, %c0_95, %c0_96] : memref<2x64x192xbf16, #tpu.memory_space<vmem>>, vector<1x64x192xbf16>
    %223 = vector.shape_cast %222 : vector<1x64x192xbf16> to vector<64x192xbf16>
    %224 = arith.truncf %221 : vector<5x64xf32> to vector<5x64xbf16>
    %cst_97 = arith.constant dense<0.000000e+00> : vector<5x192xf32>
    %225 = tpu.matmul %224, %223, %cst_97 {dimension_numbers = #tpu.dot_dimension_numbers<[1], [0], [0], [1], [0, 0, 1, 1], [], []>} : vector<5x64xbf16>, vector<64x192xbf16>, vector<5x192xf32> -> vector<5x192xf32>
    %c1_98 = arith.constant 1 : index
    %c0_99 = arith.constant 0 : index
    %c0_100 = arith.constant 0 : index
    %226 = vector.load %arg9[%c1_98, %c0_99, %c0_100] : memref<2x1x192xf32, #tpu.memory_space<vmem>>, vector<1x1x192xf32>
    %227 = vector.shape_cast %226 : vector<1x1x192xf32> to vector<1x192xf32>
    %228 = vector.broadcast %227 : vector<1x192xf32> to vector<5x192xf32>
    %229 = arith.addf %225, %228 : vector<5x192xf32>
    %230 = vector.extract_strided_slice %229 {offsets = [0, 0], sizes = [5, 16], strides = [1, 1]} : vector<5x192xf32> to vector<5x16xf32>
    %231 = vector.extract_strided_slice %229 {offsets = [0, 64], sizes = [5, 16], strides = [1, 1]} : vector<5x192xf32> to vector<5x16xf32>
    %232 = vector.extract_strided_slice %229 {offsets = [0, 128], sizes = [5, 16], strides = [1, 1]} : vector<5x192xf32> to vector<5x16xf32>
    %233 = arith.truncf %230 : vector<5x16xf32> to vector<5x16xbf16>
    %234 = arith.truncf %231 : vector<5x16xf32> to vector<5x16xbf16>
    %cst_101 = arith.constant dense<0.000000e+00> : vector<5x5xf32>
    %235 = tpu.matmul %233, %234, %cst_101 {dimension_numbers = #tpu.dot_dimension_numbers<[1], [1], [0], [0], [0, 0, 1, 0], [], []>} : vector<5x16xbf16>, vector<5x16xbf16>, vector<5x5xf32> -> vector<5x5xf32>
    %cst_102 = arith.constant 2.500000e-01 : f32
    %236 = vector.broadcast %cst_102 : f32 to vector<5x5xf32>
    %237 = arith.mulf %235, %236 : vector<5x5xf32>
    %cst_103 = arith.constant dense<0xFF800000> : vector<5xf32>
    %238 = vector.multi_reduction <maximumf>, %237, %cst_103 [1] : vector<5x5xf32> to vector<5xf32>
    %239 = vector.shape_cast %238 : vector<5xf32> to vector<5x1xf32>
    %240 = vector.broadcast %239 : vector<5x1xf32> to vector<5x5xf32>
    %241 = arith.subf %237, %240 : vector<5x5xf32>
    %242 = math.exp %241 : vector<5x5xf32>
    %cst_104 = arith.constant dense<0.000000e+00> : vector<5xf32>
    %243 = vector.multi_reduction <add>, %242, %cst_104 [1] : vector<5x5xf32> to vector<5xf32>
    %244 = vector.shape_cast %243 : vector<5xf32> to vector<5x1xf32>
    %245 = tpu.reciprocal %244 {approx = true} : vector<5x1xf32> -> vector<5x1xf32>
    %246 = vector.broadcast %245 : vector<5x1xf32> to vector<5x5xf32>
    %247 = arith.mulf %242, %246 : vector<5x5xf32>
    %248 = arith.truncf %247 : vector<5x5xf32> to vector<5x5xbf16>
    %249 = arith.truncf %232 : vector<5x16xf32> to vector<5x16xbf16>
    %cst_105 = arith.constant dense<0.000000e+00> : vector<5x16xf32>
    %250 = tpu.matmul %248, %249, %cst_105 {dimension_numbers = #tpu.dot_dimension_numbers<[1], [0], [0], [1], [0, 0, 1, 1], [], []>} : vector<5x5xbf16>, vector<5x16xbf16>, vector<5x16xf32> -> vector<5x16xf32>
    %251 = vector.extract_strided_slice %229 {offsets = [0, 16], sizes = [5, 16], strides = [1, 1]} : vector<5x192xf32> to vector<5x16xf32>
    %252 = vector.extract_strided_slice %229 {offsets = [0, 80], sizes = [5, 16], strides = [1, 1]} : vector<5x192xf32> to vector<5x16xf32>
    %253 = vector.extract_strided_slice %229 {offsets = [0, 144], sizes = [5, 16], strides = [1, 1]} : vector<5x192xf32> to vector<5x16xf32>
    %254 = arith.truncf %251 : vector<5x16xf32> to vector<5x16xbf16>
    %255 = arith.truncf %252 : vector<5x16xf32> to vector<5x16xbf16>
    %cst_106 = arith.constant dense<0.000000e+00> : vector<5x5xf32>
    %256 = tpu.matmul %254, %255, %cst_106 {dimension_numbers = #tpu.dot_dimension_numbers<[1], [1], [0], [0], [0, 0, 1, 0], [], []>} : vector<5x16xbf16>, vector<5x16xbf16>, vector<5x5xf32> -> vector<5x5xf32>
    %cst_107 = arith.constant 2.500000e-01 : f32
    %257 = vector.broadcast %cst_107 : f32 to vector<5x5xf32>
    %258 = arith.mulf %256, %257 : vector<5x5xf32>
    %cst_108 = arith.constant dense<0xFF800000> : vector<5xf32>
    %259 = vector.multi_reduction <maximumf>, %258, %cst_108 [1] : vector<5x5xf32> to vector<5xf32>
    %260 = vector.shape_cast %259 : vector<5xf32> to vector<5x1xf32>
    %261 = vector.broadcast %260 : vector<5x1xf32> to vector<5x5xf32>
    %262 = arith.subf %258, %261 : vector<5x5xf32>
    %263 = math.exp %262 : vector<5x5xf32>
    %cst_109 = arith.constant dense<0.000000e+00> : vector<5xf32>
    %264 = vector.multi_reduction <add>, %263, %cst_109 [1] : vector<5x5xf32> to vector<5xf32>
    %265 = vector.shape_cast %264 : vector<5xf32> to vector<5x1xf32>
    %266 = tpu.reciprocal %265 {approx = true} : vector<5x1xf32> -> vector<5x1xf32>
    %267 = vector.broadcast %266 : vector<5x1xf32> to vector<5x5xf32>
    %268 = arith.mulf %263, %267 : vector<5x5xf32>
    %269 = arith.truncf %268 : vector<5x5xf32> to vector<5x5xbf16>
    %270 = arith.truncf %253 : vector<5x16xf32> to vector<5x16xbf16>
    %cst_110 = arith.constant dense<0.000000e+00> : vector<5x16xf32>
    %271 = tpu.matmul %269, %270, %cst_110 {dimension_numbers = #tpu.dot_dimension_numbers<[1], [0], [0], [1], [0, 0, 1, 1], [], []>} : vector<5x5xbf16>, vector<5x16xbf16>, vector<5x16xf32> -> vector<5x16xf32>
    %272 = vector.extract_strided_slice %229 {offsets = [0, 32], sizes = [5, 16], strides = [1, 1]} : vector<5x192xf32> to vector<5x16xf32>
    %273 = vector.extract_strided_slice %229 {offsets = [0, 96], sizes = [5, 16], strides = [1, 1]} : vector<5x192xf32> to vector<5x16xf32>
    %274 = vector.extract_strided_slice %229 {offsets = [0, 160], sizes = [5, 16], strides = [1, 1]} : vector<5x192xf32> to vector<5x16xf32>
    %275 = arith.truncf %272 : vector<5x16xf32> to vector<5x16xbf16>
    %276 = arith.truncf %273 : vector<5x16xf32> to vector<5x16xbf16>
    %cst_111 = arith.constant dense<0.000000e+00> : vector<5x5xf32>
    %277 = tpu.matmul %275, %276, %cst_111 {dimension_numbers = #tpu.dot_dimension_numbers<[1], [1], [0], [0], [0, 0, 1, 0], [], []>} : vector<5x16xbf16>, vector<5x16xbf16>, vector<5x5xf32> -> vector<5x5xf32>
    %cst_112 = arith.constant 2.500000e-01 : f32
    %278 = vector.broadcast %cst_112 : f32 to vector<5x5xf32>
    %279 = arith.mulf %277, %278 : vector<5x5xf32>
    %cst_113 = arith.constant dense<0xFF800000> : vector<5xf32>
    %280 = vector.multi_reduction <maximumf>, %279, %cst_113 [1] : vector<5x5xf32> to vector<5xf32>
    %281 = vector.shape_cast %280 : vector<5xf32> to vector<5x1xf32>
    %282 = vector.broadcast %281 : vector<5x1xf32> to vector<5x5xf32>
    %283 = arith.subf %279, %282 : vector<5x5xf32>
    %284 = math.exp %283 : vector<5x5xf32>
    %cst_114 = arith.constant dense<0.000000e+00> : vector<5xf32>
    %285 = vector.multi_reduction <add>, %284, %cst_114 [1] : vector<5x5xf32> to vector<5xf32>
    %286 = vector.shape_cast %285 : vector<5xf32> to vector<5x1xf32>
    %287 = tpu.reciprocal %286 {approx = true} : vector<5x1xf32> -> vector<5x1xf32>
    %288 = vector.broadcast %287 : vector<5x1xf32> to vector<5x5xf32>
    %289 = arith.mulf %284, %288 : vector<5x5xf32>
    %290 = arith.truncf %289 : vector<5x5xf32> to vector<5x5xbf16>
    %291 = arith.truncf %274 : vector<5x16xf32> to vector<5x16xbf16>
    %cst_115 = arith.constant dense<0.000000e+00> : vector<5x16xf32>
    %292 = tpu.matmul %290, %291, %cst_115 {dimension_numbers = #tpu.dot_dimension_numbers<[1], [0], [0], [1], [0, 0, 1, 1], [], []>} : vector<5x5xbf16>, vector<5x16xbf16>, vector<5x16xf32> -> vector<5x16xf32>
    %293 = vector.extract_strided_slice %229 {offsets = [0, 48], sizes = [5, 16], strides = [1, 1]} : vector<5x192xf32> to vector<5x16xf32>
    %294 = vector.extract_strided_slice %229 {offsets = [0, 112], sizes = [5, 16], strides = [1, 1]} : vector<5x192xf32> to vector<5x16xf32>
    %295 = vector.extract_strided_slice %229 {offsets = [0, 176], sizes = [5, 16], strides = [1, 1]} : vector<5x192xf32> to vector<5x16xf32>
    %296 = arith.truncf %293 : vector<5x16xf32> to vector<5x16xbf16>
    %297 = arith.truncf %294 : vector<5x16xf32> to vector<5x16xbf16>
    %cst_116 = arith.constant dense<0.000000e+00> : vector<5x5xf32>
    %298 = tpu.matmul %296, %297, %cst_116 {dimension_numbers = #tpu.dot_dimension_numbers<[1], [1], [0], [0], [0, 0, 1, 0], [], []>} : vector<5x16xbf16>, vector<5x16xbf16>, vector<5x5xf32> -> vector<5x5xf32>
    %cst_117 = arith.constant 2.500000e-01 : f32
    %299 = vector.broadcast %cst_117 : f32 to vector<5x5xf32>
    %300 = arith.mulf %298, %299 : vector<5x5xf32>
    %cst_118 = arith.constant dense<0xFF800000> : vector<5xf32>
    %301 = vector.multi_reduction <maximumf>, %300, %cst_118 [1] : vector<5x5xf32> to vector<5xf32>
    %302 = vector.shape_cast %301 : vector<5xf32> to vector<5x1xf32>
    %303 = vector.broadcast %302 : vector<5x1xf32> to vector<5x5xf32>
    %304 = arith.subf %300, %303 : vector<5x5xf32>
    %305 = math.exp %304 : vector<5x5xf32>
    %cst_119 = arith.constant dense<0.000000e+00> : vector<5xf32>
    %306 = vector.multi_reduction <add>, %305, %cst_119 [1] : vector<5x5xf32> to vector<5xf32>
    %307 = vector.shape_cast %306 : vector<5xf32> to vector<5x1xf32>
    %308 = tpu.reciprocal %307 {approx = true} : vector<5x1xf32> -> vector<5x1xf32>
    %309 = vector.broadcast %308 : vector<5x1xf32> to vector<5x5xf32>
    %310 = arith.mulf %305, %309 : vector<5x5xf32>
    %311 = arith.truncf %310 : vector<5x5xf32> to vector<5x5xbf16>
    %312 = arith.truncf %295 : vector<5x16xf32> to vector<5x16xbf16>
    %cst_120 = arith.constant dense<0.000000e+00> : vector<5x16xf32>
    %313 = tpu.matmul %311, %312, %cst_120 {dimension_numbers = #tpu.dot_dimension_numbers<[1], [0], [0], [1], [0, 0, 1, 1], [], []>} : vector<5x5xbf16>, vector<5x16xbf16>, vector<5x16xf32> -> vector<5x16xf32>
    %314 = tpu.concatenate %250, %271, %292, %313 in 1 : vector<5x16xf32>, vector<5x16xf32>, vector<5x16xf32>, vector<5x16xf32> -> vector<5x64xf32>
    %c1_121 = arith.constant 1 : index
    %c0_122 = arith.constant 0 : index
    %c0_123 = arith.constant 0 : index
    %315 = vector.load %arg10[%c1_121, %c0_122, %c0_123] : memref<2x64x64xbf16, #tpu.memory_space<vmem>>, vector<1x64x64xbf16>
    %316 = vector.shape_cast %315 : vector<1x64x64xbf16> to vector<64x64xbf16>
    %317 = arith.truncf %314 : vector<5x64xf32> to vector<5x64xbf16>
    %cst_124 = arith.constant dense<0.000000e+00> : vector<5x64xf32>
    %318 = tpu.matmul %317, %316, %cst_124 {dimension_numbers = #tpu.dot_dimension_numbers<[1], [0], [0], [1], [0, 0, 1, 1], [], []>} : vector<5x64xbf16>, vector<64x64xbf16>, vector<5x64xf32> -> vector<5x64xf32>
    %319 = arith.addf %195, %318 : vector<5x64xf32>
    %c1_125 = arith.constant 1 : index
    %c0_126 = arith.constant 0 : index
    %c0_127 = arith.constant 0 : index
    %320 = vector.load %arg11[%c1_125, %c0_126, %c0_127] : memref<2x1x64xf32, #tpu.memory_space<vmem>>, vector<1x1x64xf32>
    %321 = vector.shape_cast %320 : vector<1x1x64xf32> to vector<1x64xf32>
    %322 = vector.broadcast %321 : vector<1x64xf32> to vector<5x64xf32>
    %323 = arith.addf %319, %322 : vector<5x64xf32>
    %c1_128 = arith.constant 1 : index
    %c0_129 = arith.constant 0 : index
    %c0_130 = arith.constant 0 : index
    %324 = vector.load %arg12[%c1_128, %c0_129, %c0_130] : memref<2x1x64xf32, #tpu.memory_space<vmem>>, vector<1x1x64xf32>
    %325 = vector.shape_cast %324 : vector<1x1x64xf32> to vector<1x64xf32>
    %c1_131 = arith.constant 1 : index
    %c0_132 = arith.constant 0 : index
    %c0_133 = arith.constant 0 : index
    %326 = vector.load %arg13[%c1_131, %c0_132, %c0_133] : memref<2x1x64xf32, #tpu.memory_space<vmem>>, vector<1x1x64xf32>
    %327 = vector.shape_cast %326 : vector<1x1x64xf32> to vector<1x64xf32>
    %cst_134 = arith.constant dense<0.000000e+00> : vector<5xf32>
    %328 = vector.multi_reduction <add>, %323, %cst_134 [1] : vector<5x64xf32> to vector<5xf32>
    %329 = vector.shape_cast %328 : vector<5xf32> to vector<5x1xf32>
    %cst_135 = arith.constant 6.400000e+01 : f32
    %330 = vector.broadcast %cst_135 : f32 to vector<5x1xf32>
    %331 = arith.divf %329, %330 : vector<5x1xf32>
    %332 = vector.broadcast %331 : vector<5x1xf32> to vector<5x64xf32>
    %333 = arith.subf %323, %332 : vector<5x64xf32>
    %334 = arith.mulf %333, %333 : vector<5x64xf32>
    %cst_136 = arith.constant dense<0.000000e+00> : vector<5xf32>
    %335 = vector.multi_reduction <add>, %334, %cst_136 [1] : vector<5x64xf32> to vector<5xf32>
    %336 = vector.shape_cast %335 : vector<5xf32> to vector<5x1xf32>
    %cst_137 = arith.constant 6.400000e+01 : f32
    %337 = vector.broadcast %cst_137 : f32 to vector<5x1xf32>
    %338 = arith.divf %336, %337 : vector<5x1xf32>
    %339 = vector.broadcast %331 : vector<5x1xf32> to vector<5x64xf32>
    %340 = arith.subf %323, %339 : vector<5x64xf32>
    %cst_138 = arith.constant 9.99999997E-7 : f32
    %341 = vector.broadcast %cst_138 : f32 to vector<5x1xf32>
    %342 = arith.addf %338, %341 : vector<5x1xf32>
    %343 = math.rsqrt %342 : vector<5x1xf32>
    %344 = vector.broadcast %343 : vector<5x1xf32> to vector<5x64xf32>
    %345 = arith.mulf %340, %344 : vector<5x64xf32>
    %346 = vector.broadcast %325 : vector<1x64xf32> to vector<5x64xf32>
    %347 = arith.mulf %345, %346 : vector<5x64xf32>
    %348 = vector.broadcast %327 : vector<1x64xf32> to vector<5x64xf32>
    %349 = arith.addf %347, %348 : vector<5x64xf32>
    %c1_139 = arith.constant 1 : index
    %c0_140 = arith.constant 0 : index
    %c0_141 = arith.constant 0 : index
    %350 = vector.load %arg14[%c1_139, %c0_140, %c0_141] : memref<2x64x128xbf16, #tpu.memory_space<vmem>>, vector<1x64x128xbf16>
    %351 = vector.shape_cast %350 : vector<1x64x128xbf16> to vector<64x128xbf16>
    %352 = arith.truncf %349 : vector<5x64xf32> to vector<5x64xbf16>
    %cst_142 = arith.constant dense<0.000000e+00> : vector<5x128xf32>
    %353 = tpu.matmul %352, %351, %cst_142 {dimension_numbers = #tpu.dot_dimension_numbers<[1], [0], [0], [1], [0, 0, 1, 1], [], []>} : vector<5x64xbf16>, vector<64x128xbf16>, vector<5x128xf32> -> vector<5x128xf32>
    %c1_143 = arith.constant 1 : index
    %c0_144 = arith.constant 0 : index
    %c0_145 = arith.constant 0 : index
    %354 = vector.load %arg15[%c1_143, %c0_144, %c0_145] : memref<2x1x128xf32, #tpu.memory_space<vmem>>, vector<1x1x128xf32>
    %355 = vector.shape_cast %354 : vector<1x1x128xf32> to vector<1x128xf32>
    %356 = vector.broadcast %355 : vector<1x128xf32> to vector<5x128xf32>
    %357 = arith.addf %353, %356 : vector<5x128xf32>
    %cst_146 = arith.constant 5.000000e-01 : f32
    %358 = vector.broadcast %cst_146 : f32 to vector<5x128xf32>
    %359 = arith.mulf %358, %357 : vector<5x128xf32>
    %cst_147 = arith.constant 4.471500e-02 : f32
    %360 = vector.broadcast %cst_147 : f32 to vector<5x128xf32>
    %361 = arith.mulf %360, %357 : vector<5x128xf32>
    %362 = arith.mulf %361, %357 : vector<5x128xf32>
    %363 = arith.mulf %362, %357 : vector<5x128xf32>
    %364 = arith.addf %357, %363 : vector<5x128xf32>
    %cst_148 = arith.constant 0.797884583 : f32
    %365 = vector.broadcast %cst_148 : f32 to vector<5x128xf32>
    %366 = arith.mulf %365, %364 : vector<5x128xf32>
    %367 = math.tanh %366 : vector<5x128xf32>
    %cst_149 = arith.constant 1.000000e+00 : f32
    %368 = vector.broadcast %cst_149 : f32 to vector<5x128xf32>
    %369 = arith.addf %368, %367 : vector<5x128xf32>
    %370 = arith.mulf %359, %369 : vector<5x128xf32>
    %c1_150 = arith.constant 1 : index
    %c0_151 = arith.constant 0 : index
    %c0_152 = arith.constant 0 : index
    %371 = vector.load %arg16[%c1_150, %c0_151, %c0_152] : memref<2x128x64xbf16, #tpu.memory_space<vmem>>, vector<1x128x64xbf16>
    %372 = vector.shape_cast %371 : vector<1x128x64xbf16> to vector<128x64xbf16>
    %373 = arith.truncf %370 : vector<5x128xf32> to vector<5x128xbf16>
    %cst_153 = arith.constant dense<0.000000e+00> : vector<5x64xf32>
    %374 = tpu.matmul %373, %372, %cst_153 {dimension_numbers = #tpu.dot_dimension_numbers<[1], [0], [0], [1], [0, 0, 1, 1], [], []>} : vector<5x128xbf16>, vector<128x64xbf16>, vector<5x64xf32> -> vector<5x64xf32>
    %375 = arith.addf %323, %374 : vector<5x64xf32>
    %c1_154 = arith.constant 1 : index
    %c0_155 = arith.constant 0 : index
    %c0_156 = arith.constant 0 : index
    %376 = vector.load %arg17[%c1_154, %c0_155, %c0_156] : memref<2x1x64xf32, #tpu.memory_space<vmem>>, vector<1x1x64xf32>
    %377 = vector.shape_cast %376 : vector<1x1x64xf32> to vector<1x64xf32>
    %378 = vector.broadcast %377 : vector<1x64xf32> to vector<5x64xf32>
    %379 = arith.addf %375, %378 : vector<5x64xf32>
    %380 = vector.extract_strided_slice %379 {offsets = [0, 0], sizes = [1, 64], strides = [1, 1]} : vector<5x64xf32> to vector<1x64xf32>
    %c0_157 = arith.constant 0 : index
    %c0_158 = arith.constant 0 : index
    %381 = vector.load %arg18[%c0_157, %c0_158] : memref<1x64xf32, #tpu.memory_space<vmem>>, vector<1x64xf32>
    %c0_159 = arith.constant 0 : index
    %c0_160 = arith.constant 0 : index
    %382 = vector.load %arg19[%c0_159, %c0_160] : memref<1x64xf32, #tpu.memory_space<vmem>>, vector<1x64xf32>
    %cst_161 = arith.constant dense<0.000000e+00> : vector<1xf32>
    %383 = vector.multi_reduction <add>, %380, %cst_161 [1] : vector<1x64xf32> to vector<1xf32>
    %384 = vector.shape_cast %383 : vector<1xf32> to vector<1x1xf32>
    %cst_162 = arith.constant 6.400000e+01 : f32
    %385 = vector.broadcast %cst_162 : f32 to vector<1x1xf32>
    %386 = arith.divf %384, %385 : vector<1x1xf32>
    %387 = vector.broadcast %386 : vector<1x1xf32> to vector<1x64xf32>
    %388 = arith.subf %380, %387 : vector<1x64xf32>
    %389 = arith.mulf %388, %388 : vector<1x64xf32>
    %cst_163 = arith.constant dense<0.000000e+00> : vector<1xf32>
    %390 = vector.multi_reduction <add>, %389, %cst_163 [1] : vector<1x64xf32> to vector<1xf32>
    %391 = vector.shape_cast %390 : vector<1xf32> to vector<1x1xf32>
    %cst_164 = arith.constant 6.400000e+01 : f32
    %392 = vector.broadcast %cst_164 : f32 to vector<1x1xf32>
    %393 = arith.divf %391, %392 : vector<1x1xf32>
    %394 = vector.broadcast %386 : vector<1x1xf32> to vector<1x64xf32>
    %395 = arith.subf %380, %394 : vector<1x64xf32>
    %cst_165 = arith.constant 9.99999997E-7 : f32
    %396 = vector.broadcast %cst_165 : f32 to vector<1x1xf32>
    %397 = arith.addf %393, %396 : vector<1x1xf32>
    %398 = math.rsqrt %397 : vector<1x1xf32>
    %399 = vector.broadcast %398 : vector<1x1xf32> to vector<1x64xf32>
    %400 = arith.mulf %395, %399 : vector<1x64xf32>
    %401 = arith.mulf %400, %381 : vector<1x64xf32>
    %402 = arith.addf %401, %382 : vector<1x64xf32>
    %c0_166 = arith.constant 0 : index
    %c0_167 = arith.constant 0 : index
    %403 = vector.load %arg20[%c0_166, %c0_167] : memref<64x32xbf16, #tpu.memory_space<vmem>>, vector<64x32xbf16>
    %404 = arith.truncf %402 : vector<1x64xf32> to vector<1x64xbf16>
    %cst_168 = arith.constant dense<0.000000e+00> : vector<1x32xf32>
    %405 = tpu.matmul %404, %403, %cst_168 {dimension_numbers = #tpu.dot_dimension_numbers<[1], [0], [0], [1], [0, 0, 1, 1], [], []>} : vector<1x64xbf16>, vector<64x32xbf16>, vector<1x32xf32> -> vector<1x32xf32>
    %c0_169 = arith.constant 0 : index
    %c0_170 = arith.constant 0 : index
    %406 = vector.load %arg21[%c0_169, %c0_170] : memref<1x32xf32, #tpu.memory_space<vmem>>, vector<1x32xf32>
    %407 = arith.addf %405, %406 : vector<1x32xf32>
    %c0_171 = arith.constant 0 : index
    %c0_172 = arith.constant 0 : index
    %408 = vector.load %arg24[%c0_171, %c0_172] : memref<1x32xf32, #tpu.memory_space<vmem>>, vector<1x32xf32>
    %409 = arith.subf %407, %408 : vector<1x32xf32>
    %c0_173 = arith.constant 0 : index
    %c0_174 = arith.constant 0 : index
    %410 = vector.load %arg25[%c0_173, %c0_174] : memref<1x32xf32, #tpu.memory_space<vmem>>, vector<1x32xf32>
    %cst_175 = arith.constant 9.99999974E-6 : f32
    %411 = vector.broadcast %cst_175 : f32 to vector<1x32xf32>
    %412 = arith.addf %410, %411 : vector<1x32xf32>
    %413 = math.rsqrt %412 : vector<1x32xf32>
    %414 = arith.mulf %409, %413 : vector<1x32xf32>
    %c0_176 = arith.constant 0 : index
    %c0_177 = arith.constant 0 : index
    %415 = vector.load %arg22[%c0_176, %c0_177] : memref<1x32xf32, #tpu.memory_space<vmem>>, vector<1x32xf32>
    %416 = arith.mulf %414, %415 : vector<1x32xf32>
    %c0_178 = arith.constant 0 : index
    %c0_179 = arith.constant 0 : index
    %417 = vector.load %arg23[%c0_178, %c0_179] : memref<1x32xf32, #tpu.memory_space<vmem>>, vector<1x32xf32>
    %418 = arith.addf %416, %417 : vector<1x32xf32>
    %cst_180 = arith.constant 0.000000e+00 : f32
    %419 = vector.broadcast %cst_180 : f32 to vector<1x32xf32>
    %420 = arith.maximumf %418, %419 : vector<1x32xf32>
    %c0_181 = arith.constant 0 : index
    %c0_182 = arith.constant 0 : index
    %421 = vector.load %arg26[%c0_181, %c0_182] : memref<32x16xbf16, #tpu.memory_space<vmem>>, vector<32x16xbf16>
    %422 = arith.truncf %420 : vector<1x32xf32> to vector<1x32xbf16>
    %cst_183 = arith.constant dense<0.000000e+00> : vector<1x16xf32>
    %423 = tpu.matmul %422, %421, %cst_183 {dimension_numbers = #tpu.dot_dimension_numbers<[1], [0], [0], [1], [0, 0, 1, 1], [], []>} : vector<1x32xbf16>, vector<32x16xbf16>, vector<1x16xf32> -> vector<1x16xf32>
    %c0_184 = arith.constant 0 : index
    %c0_185 = arith.constant 0 : index
    %424 = vector.load %arg27[%c0_184, %c0_185] : memref<1x16xf32, #tpu.memory_space<vmem>>, vector<1x16xf32>
    %425 = arith.addf %423, %424 : vector<1x16xf32>
    %c0_186 = arith.constant 0 : index
    %c0_187 = arith.constant 0 : index
    %426 = vector.load %arg28[%c0_186, %c0_187] : memref<16x1xf32, #tpu.memory_space<vmem>>, vector<16x1xf32>
    %cst_188 = arith.constant dense<0.000000e+00> : vector<1x1xf32>
    %427 = tpu.matmul %425, %426, %cst_188 {dimension_numbers = #tpu.dot_dimension_numbers<[1], [0], [0], [1], [0, 0, 1, 1], [], []>} : vector<1x16xf32>, vector<16x1xf32>, vector<1x1xf32> -> vector<1x1xf32>
    %c0_189 = arith.constant 0 : index
    %c0_190 = arith.constant 0 : index
    %428 = vector.load %arg29[%c0_189, %c0_190] : memref<1x1xf32, #tpu.memory_space<vmem>>, vector<1x1xf32>
    %429 = arith.addf %427, %428 : vector<1x1xf32>
    %cst_191 = arith.constant 0.000000e+00 : f32
    %430 = vector.broadcast %cst_191 : f32 to vector<1x1xf32>
    %431 = arith.maximumf %429, %430 : vector<1x1xf32>
    %c0_192 = arith.constant 0 : index
    %c0_193 = arith.constant 0 : index
    %432 = vector.load %arg30[%c0_192, %c0_193] : memref<1x16xf32, #tpu.memory_space<vmem>>, vector<1x16xf32>
    %cst_194 = arith.constant dense<0.000000e+00> : vector<1x16xf32>
    %433 = tpu.matmul %431, %432, %cst_194 {dimension_numbers = #tpu.dot_dimension_numbers<[1], [0], [0], [1], [0, 0, 1, 1], [], []>} : vector<1x1xf32>, vector<1x16xf32>, vector<1x16xf32> -> vector<1x16xf32>
    %c0_195 = arith.constant 0 : index
    %c0_196 = arith.constant 0 : index
    %434 = vector.load %arg31[%c0_195, %c0_196] : memref<1x16xf32, #tpu.memory_space<vmem>>, vector<1x16xf32>
    %435 = arith.addf %433, %434 : vector<1x16xf32>
    %cst_197 = arith.constant 0.000000e+00 : f32
    %436 = vector.broadcast %cst_197 : f32 to vector<1x16xf32>
    %437 = arith.subf %436, %435 : vector<1x16xf32>
    %438 = math.exp %437 : vector<1x16xf32>
    %cst_198 = arith.constant 1.000000e+00 : f32
    %439 = vector.broadcast %cst_198 : f32 to vector<1x16xf32>
    %440 = arith.addf %439, %438 : vector<1x16xf32>
    %cst_199 = arith.constant 1.000000e+00 : f32
    %441 = vector.broadcast %cst_199 : f32 to vector<1x16xf32>
    %442 = arith.divf %441, %440 : vector<1x16xf32>
    %443 = arith.mulf %425, %442 : vector<1x16xf32>
    %c0_200 = arith.constant 0 : index
    %c0_201 = arith.constant 0 : index
    %c0_202 = arith.constant 0 : index
    %444 = vector.load %arg32[%c0_200, %c0_201, %c0_202] : memref<1x1x16xf32, #tpu.memory_space<vmem>>, vector<1x1x16xf32>
    %445 = vector.shape_cast %444 : vector<1x1x16xf32> to vector<1x16xf32>
    %446 = vector.shape_cast %443 : vector<1x16xf32> to vector<1x1x16xf32>
    tpu.vector_store %arg32[%c0_200, %c0_201, %c0_202], %446 {strides = array<i32>} : memref<1x1x16xf32, #tpu.memory_space<vmem>>, vector<1x1x16xf32>,
    return
  }
  func.func @transform_0(%arg0: i32) -> (i32, i32, i32) {
    %c0_i32 = arith.constant 0 : i32
    %c0_i32_0 = arith.constant 0 : i32
    %c0_i32_1 = arith.constant 0 : i32
    return %arg0, %c0_i32, %c0_i32_0 : i32, i32, i32
  }
  func.func @transform_1(%arg0: i32) -> (i32, i32) {
    %c0_i32 = arith.constant 0 : i32
    %c0_i32_0 = arith.constant 0 : i32
    %c0_i32_1 = arith.constant 0 : i32
    return %c0_i32, %c0_i32_0 : i32, i32
  }
  func.func @transform_2(%arg0: i32) -> (i32, i32) {
    %c0_i32 = arith.constant 0 : i32
    %c0_i32_0 = arith.constant 0 : i32
    %c0_i32_1 = arith.constant 0 : i32
    return %c0_i32, %c0_i32_0 : i32, i32
  }
  func.func @transform_3(%arg0: i32) -> (i32, i32) {
    %c0_i32 = arith.constant 0 : i32
    %c0_i32_0 = arith.constant 0 : i32
    %c0_i32_1 = arith.constant 0 : i32
    return %c0_i32, %c0_i32_0 : i32, i32
  }
  func.func @transform_4(%arg0: i32) -> (i32, i32) {
    %c0_i32 = arith.constant 0 : i32
    %c0_i32_0 = arith.constant 0 : i32
    %c0_i32_1 = arith.constant 0 : i32
    return %c0_i32, %c0_i32_0 : i32, i32
  }
  func.func @transform_5(%arg0: i32) -> (i32, i32, i32) {
    %c0_i32 = arith.constant 0 : i32
    %c0_i32_0 = arith.constant 0 : i32
    %c0_i32_1 = arith.constant 0 : i32
    %c0_i32_2 = arith.constant 0 : i32
    return %c0_i32, %c0_i32_0, %c0_i32_1 : i32, i32, i32
  }
  func.func @transform_6(%arg0: i32) -> (i32, i32, i32) {
    %c0_i32 = arith.constant 0 : i32
    %c0_i32_0 = arith.constant 0 : i32
    %c0_i32_1 = arith.constant 0 : i32
    %c0_i32_2 = arith.constant 0 : i32
    return %c0_i32, %c0_i32_0, %c0_i32_1 : i32, i32, i32
  }
  func.func @transform_7(%arg0: i32) -> (i32, i32, i32) {
    %c0_i32 = arith.constant 0 : i32
    %c0_i32_0 = arith.constant 0 : i32
    %c0_i32_1 = arith.constant 0 : i32
    %c0_i32_2 = arith.constant 0 : i32
    return %c0_i32, %c0_i32_0, %c0_i32_1 : i32, i32, i32
  }
  func.func @transform_8(%arg0: i32) -> (i32, i32, i32) {
    %c0_i32 = arith.constant 0 : i32
    %c0_i32_0 = arith.constant 0 : i32
    %c0_i32_1 = arith.constant 0 : i32
    %c0_i32_2 = arith.constant 0 : i32
    return %c0_i32, %c0_i32_0, %c0_i32_1 : i32, i32, i32
  }
  func.func @transform_9(%arg0: i32) -> (i32, i32, i32) {
    %c0_i32 = arith.constant 0 : i32
    %c0_i32_0 = arith.constant 0 : i32
    %c0_i32_1 = arith.constant 0 : i32
    %c0_i32_2 = arith.constant 0 : i32
    return %c0_i32, %c0_i32_0, %c0_i32_1 : i32, i32, i32
  }
  func.func @transform_10(%arg0: i32) -> (i32, i32, i32) {
    %c0_i32 = arith.constant 0 : i32
    %c0_i32_0 = arith.constant 0 : i32
    %c0_i32_1 = arith.constant 0 : i32
    %c0_i32_2 = arith.constant 0 : i32
    return %c0_i32, %c0_i32_0, %c0_i32_1 : i32, i32, i32
  }
  func.func @transform_11(%arg0: i32) -> (i32, i32, i32) {
    %c0_i32 = arith.constant 0 : i32
    %c0_i32_0 = arith.constant 0 : i32
    %c0_i32_1 = arith.constant 0 : i32
    %c0_i32_2 = arith.constant 0 : i32
    return %c0_i32, %c0_i32_0, %c0_i32_1 : i32, i32, i32
  }
  func.func @transform_12(%arg0: i32) -> (i32, i32, i32) {
    %c0_i32 = arith.constant 0 : i32
    %c0_i32_0 = arith.constant 0 : i32
    %c0_i32_1 = arith.constant 0 : i32
    %c0_i32_2 = arith.constant 0 : i32
    return %c0_i32, %c0_i32_0, %c0_i32_1 : i32, i32, i32
  }
  func.func @transform_13(%arg0: i32) -> (i32, i32, i32) {
    %c0_i32 = arith.constant 0 : i32
    %c0_i32_0 = arith.constant 0 : i32
    %c0_i32_1 = arith.constant 0 : i32
    %c0_i32_2 = arith.constant 0 : i32
    return %c0_i32, %c0_i32_0, %c0_i32_1 : i32, i32, i32
  }
  func.func @transform_14(%arg0: i32) -> (i32, i32, i32) {
    %c0_i32 = arith.constant 0 : i32
    %c0_i32_0 = arith.constant 0 : i32
    %c0_i32_1 = arith.constant 0 : i32
    %c0_i32_2 = arith.constant 0 : i32
    return %c0_i32, %c0_i32_0, %c0_i32_1 : i32, i32, i32
  }
  func.func @transform_15(%arg0: i32) -> (i32, i32, i32) {
    %c0_i32 = arith.constant 0 : i32
    %c0_i32_0 = arith.constant 0 : i32
    %c0_i32_1 = arith.constant 0 : i32
    %c0_i32_2 = arith.constant 0 : i32
    return %c0_i32, %c0_i32_0, %c0_i32_1 : i32, i32, i32
  }
  func.func @transform_16(%arg0: i32) -> (i32, i32, i32) {
    %c0_i32 = arith.constant 0 : i32
    %c0_i32_0 = arith.constant 0 : i32
    %c0_i32_1 = arith.constant 0 : i32
    %c0_i32_2 = arith.constant 0 : i32
    return %c0_i32, %c0_i32_0, %c0_i32_1 : i32, i32, i32
  }
  func.func @transform_17(%arg0: i32) -> (i32, i32) {
    %c0_i32 = arith.constant 0 : i32
    %c0_i32_0 = arith.constant 0 : i32
    %c0_i32_1 = arith.constant 0 : i32
    return %c0_i32, %c0_i32_0 : i32, i32
  }
  func.func @transform_18(%arg0: i32) -> (i32, i32) {
    %c0_i32 = arith.constant 0 : i32
    %c0_i32_0 = arith.constant 0 : i32
    %c0_i32_1 = arith.constant 0 : i32
    return %c0_i32, %c0_i32_0 : i32, i32
  }
  func.func @transform_19(%arg0: i32) -> (i32, i32) {
    %c0_i32 = arith.constant 0 : i32
    %c0_i32_0 = arith.constant 0 : i32
    %c0_i32_1 = arith.constant 0 : i32
    return %c0_i32, %c0_i32_0 : i32, i32
  }
  func.func @transform_20(%arg0: i32) -> (i32, i32) {
    %c0_i32 = arith.constant 0 : i32
    %c0_i32_0 = arith.constant 0 : i32
    %c0_i32_1 = arith.constant 0 : i32
    return %c0_i32, %c0_i32_0 : i32, i32
  }
  func.func @transform_21(%arg0: i32) -> (i32, i32) {
    %c0_i32 = arith.constant 0 : i32
    %c0_i32_0 = arith.constant 0 : i32
    %c0_i32_1 = arith.constant 0 : i32
    return %c0_i32, %c0_i32_0 : i32, i32
  }
  func.func @transform_22(%arg0: i32) -> (i32, i32) {
    %c0_i32 = arith.constant 0 : i32
    %c0_i32_0 = arith.constant 0 : i32
    %c0_i32_1 = arith.constant 0 : i32
    return %c0_i32, %c0_i32_0 : i32, i32
  }
  func.func @transform_23(%arg0: i32) -> (i32, i32) {
    %c0_i32 = arith.constant 0 : i32
    %c0_i32_0 = arith.constant 0 : i32
    %c0_i32_1 = arith.constant 0 : i32
    return %c0_i32, %c0_i32_0 : i32, i32
  }
  func.func @transform_24(%arg0: i32) -> (i32, i32) {
    %c0_i32 = arith.constant 0 : i32
    %c0_i32_0 = arith.constant 0 : i32
    %c0_i32_1 = arith.constant 0 : i32
    return %c0_i32, %c0_i32_0 : i32, i32
  }
  func.func @transform_25(%arg0: i32) -> (i32, i32) {
    %c0_i32 = arith.constant 0 : i32
    %c0_i32_0 = arith.constant 0 : i32
    %c0_i32_1 = arith.constant 0 : i32
    return %c0_i32, %c0_i32_0 : i32, i32
  }
  func.func @transform_26(%arg0: i32) -> (i32, i32) {
    %c0_i32 = arith.constant 0 : i32
    %c0_i32_0 = arith.constant 0 : i32
    %c0_i32_1 = arith.constant 0 : i32
    return %c0_i32, %c0_i32_0 : i32, i32
  }
  func.func @transform_27(%arg0: i32) -> (i32, i32) {
    %c0_i32 = arith.constant 0 : i32
    %c0_i32_0 = arith.constant 0 : i32
    %c0_i32_1 = arith.constant 0 : i32
    return %c0_i32, %c0_i32_0 : i32, i32
  }
  func.func @transform_28(%arg0: i32) -> (i32, i32) {
    %c0_i32 = arith.constant 0 : i32
    %c0_i32_0 = arith.constant 0 : i32
    %c0_i32_1 = arith.constant 0 : i32
    return %c0_i32, %c0_i32_0 : i32, i32
  }
  func.func @transform_29(%arg0: i32) -> (i32, i32) {
    %c0_i32 = arith.constant 0 : i32
    %c0_i32_0 = arith.constant 0 : i32
    %c0_i32_1 = arith.constant 0 : i32
    return %c0_i32, %c0_i32_0 : i32, i32
  }
  func.func @transform_30(%arg0: i32) -> (i32, i32) {
    %c0_i32 = arith.constant 0 : i32
    %c0_i32_0 = arith.constant 0 : i32
    %c0_i32_1 = arith.constant 0 : i32
    return %c0_i32, %c0_i32_0 : i32, i32
  }
  func.func @transform_31(%arg0: i32) -> (i32, i32, i32) {
    %c0_i32 = arith.constant 0 : i32
    %c0_i32_0 = arith.constant 0 : i32
    %c0_i32_1 = arith.constant 0 : i32
    return %arg0, %c0_i32, %c0_i32_0 : i32, i32, i32
  }
}

</mosaic_0001>

<llo_original>
// kernel: sp_model_forward.1
$region0: #{sp_model_forward.1}
  #allocation0 [shape = 'u32[]', space=smem, size = 0x4, offset = 0x4, fixed_abs, tag = 'smem constant byte address 0x4 - core index']
  #allocation1 [shape = 'u32[144,128]{1,0:T(1,128)}', space=vmem, size = 0x12000, scoped, tag = 'internal scratch']
  #allocation2 [shape = 'f32[1,1]{1,0:T(1,128)S(1)}', space=vmem, size = 0x200, scoped, tag = 'scoped memory for sp_model_forward.1']
  %s0 = inlined_call_operand.smem [shape: u32[32], index: -1, kind: input, shape index: {}]
  %s1 = sld [smem:[%s0]]
  %s2 = scalar_lea.smem %s0, 1
  %s3 = sld [smem:[%s2]]
  %s4 = scalar_lea.smem %s0, 2
  %s5 = sld [smem:[%s4]]
  %s6 = scalar_lea.smem %s0, 3
  %s7 = sld [smem:[%s6]]
  %s8 = scalar_lea.smem %s0, 4
  %s9 = sld [smem:[%s8]]
  %s10 = scalar_lea.smem %s0, 5
  %s11 = sld [smem:[%s10]]
  %s12 = scalar_lea.smem %s0, 6
  %s13 = sld [smem:[%s12]]
  %s14 = scalar_lea.smem %s0, 7
  %s15 = sld [smem:[%s14]]
  %s16 = scalar_lea.smem %s0, 8
  %s17 = sld [smem:[%s16]]
  %s18 = scalar_lea.smem %s0, 9
  %s19 = sld [smem:[%s18]]
  %s20 = scalar_lea.smem %s0, 10
  %s21 = sld [smem:[%s20]]
  %s22 = scalar_lea.smem %s0, 11
  %s23 = sld [smem:[%s22]]
  %s24 = scalar_lea.smem %s0, 12
  %s25 = sld [smem:[%s24]]
  %s26 = scalar_lea.smem %s0, 13
  %s27 = sld [smem:[%s26]]
  %s28 = scalar_lea.smem %s0, 14
  %s29 = sld [smem:[%s28]]
  %s30 = scalar_lea.smem %s0, 15
  %s31 = sld [smem:[%s30]]
  %s32 = scalar_lea.smem %s0, 16
  %s33 = sld [smem:[%s32]]
  %s34 = scalar_lea.smem %s0, 17
  %s35 = sld [smem:[%s34]]
  %s36 = scalar_lea.smem %s0, 18
  %s37 = sld [smem:[%s36]]
  %s38 = scalar_lea.smem %s0, 19
  %s39 = sld [smem:[%s38]]
  %s40 = scalar_lea.smem %s0, 20
  %s41 = sld [smem:[%s40]]
  %s42 = scalar_lea.smem %s0, 21
  %s43 = sld [smem:[%s42]]
  %s44 = scalar_lea.smem %s0, 22
  %s45 = sld [smem:[%s44]]
  %s46 = scalar_lea.smem %s0, 23
  %s47 = sld [smem:[%s46]]
  %s48 = scalar_lea.smem %s0, 24
  %s49 = sld [smem:[%s48]]
  %s50 = scalar_lea.smem %s0, 25
  %s51 = sld [smem:[%s50]]
  %s52 = scalar_lea.smem %s0, 26
  %s53 = sld [smem:[%s52]]
  %s54 = scalar_lea.smem %s0, 27
  %s55 = sld [smem:[%s54]]
  %s56 = scalar_lea.smem %s0, 28
  %s57 = sld [smem:[%s56]]
  %s58 = scalar_lea.smem %s0, 29
  %s59 = sld [smem:[%s58]]
  %s60 = scalar_lea.smem %s0, 30
  %s61 = sld [smem:[%s60]]
  %s62 = scalar_lea.smem %s0, 31
  %s63 = sld [smem:[%s62]]
  %s64 = sld [smem:[#allocation0]]
  $region157: #{sp_model_forward.1} parent=0
    _
  %s66 = ssub.s32 1, %s64
  %s67 = scalar_select 0, %s66, %s64
  %v68 = vstv %s57
  %69 = vst [vmem:[#allocation2] sm:$0x1] %v68
  $region1: #{sp_model_forward.1} parent=0
    #allocation3 [shape = 'u8[1024]{0}', space=vmem, size = 0x400, scoped, tag = 'output window, operand 0']
    #allocation4 [shape = 's32[2]{0}', space=sflag, size = 0x8, scoped, tag = 'scoped memory for sp_model_forward.1']
    %70 = vsyncpa [#allocation4], 0
    %s71 = scalar_lea.sflag [#allocation4], 1
    %72 = vsyncpa %s71, 0
    loop: start=0, step=1, limit=4
    $region2: #{sp_model_forward.1} parent=1 // loop_pre_header
      _
    $region3: #{sp_model_forward.1} parent=1 // loop_header
      %s74 = sphi 0, %s78
      %p75 = scmp.ge.s32.totalorder %s74, 4
      %s84 = sphi 0, %s86
      %s87 = sphi 0, %s84
      %s88 = sphi 0, %s87
      %s104 = sphi 0, %s88
      %s108 = sphi 0, %s108
      %s110 = sphi 0, %s108
      %s111 = sphi 0, %s110
      %s125 = sphi 0, %s111
      %s129 = sphi 0, %s129
      %s131 = sphi 0, %s129
      %s132 = sphi 0, %s131
      %s146 = sphi 0, %s132
      %s150 = sphi 0, %s150
      %s152 = sphi 0, %s150
      %s153 = sphi 0, %s152
      %s167 = sphi 0, %s153
      %s171 = sphi 0, %s171
      %s173 = sphi 0, %s171
      %s174 = sphi 0, %s173
      %s188 = sphi 0, %s174
      %s192 = sphi 0, %s192
      %s194 = sphi 0, %s192
      %s195 = sphi 0, %s194
      %s209 = sphi 0, %s195
      %s213 = sphi 0, %s213
      %s215 = sphi 0, %s213
      %s216 = sphi 0, %s215
      %s230 = sphi 0, %s216
      %s234 = sphi 0, %s234
      %s236 = sphi 0, %s234
      %s237 = sphi 0, %s236
      %s251 = sphi 0, %s237
      %s255 = sphi 0, %s255
      %s257 = sphi 0, %s255
      %s258 = sphi 0, %s257
      %s272 = sphi 0, %s258
      %s276 = sphi 0, %s276
      %s278 = sphi 0, %s276
      %s279 = sphi 0, %s278
      %s293 = sphi 0, %s279
      %s297 = sphi 0, %s297
      %s299 = sphi 0, %s297
      %s300 = sphi 0, %s299
      %s314 = sphi 0, %s300
      %s318 = sphi 0, %s318
      %s320 = sphi 0, %s318
      %s321 = sphi 0, %s320
      %s335 = sphi 0, %s321
      %s339 = sphi 0, %s339
      %s341 = sphi 0, %s339
      %s342 = sphi 0, %s341
      %s356 = sphi 0, %s342
      %s360 = sphi 0, %s360
      %s362 = sphi 0, %s360
      %s363 = sphi 0, %s362
      %s377 = sphi 0, %s363
      %s381 = sphi 0, %s381
      %s383 = sphi 0, %s381
      %s384 = sphi 0, %s383
      %s398 = sphi 0, %s384
      %s402 = sphi 0, %s402
      %s404 = sphi 0, %s402
      %s405 = sphi 0, %s404
      %s419 = sphi 0, %s405
      %s423 = sphi 0, %s423
      %s425 = sphi 0, %s423
      %s426 = sphi 0, %s425
      %s440 = sphi 0, %s426
      %s444 = sphi 0, %s444
      %s446 = sphi 0, %s444
      %s447 = sphi 0, %s446
      %s461 = sphi 0, %s447
      %s465 = sphi 0, %s465
      %s467 = sphi 0, %s465
      %s468 = sphi 0, %s467
      %s482 = sphi 0, %s468
      %s486 = sphi 0, %s486
      %s488 = sphi 0, %s486
      %s489 = sphi 0, %s488
      %s503 = sphi 0, %s489
      %s507 = sphi 0, %s507
      %s509 = sphi 0, %s507
      %s510 = sphi 0, %s509
      %s524 = sphi 0, %s510
      %s528 = sphi 0, %s528
      %s530 = sphi 0, %s528
      %s531 = sphi 0, %s530
      %s545 = sphi 0, %s531
      %s549 = sphi 0, %s549
      %s551 = sphi 0, %s549
      %s552 = sphi 0, %s551
      %s566 = sphi 0, %s552
      %s570 = sphi 0, %s570
      %s572 = sphi 0, %s570
      %s573 = sphi 0, %s572
      %s587 = sphi 0, %s573
      %s591 = sphi 0, %s591
      %s593 = sphi 0, %s591
      %s594 = sphi 0, %s593
      %s608 = sphi 0, %s594
      %s612 = sphi 0, %s612
      %s614 = sphi 0, %s612
      %s615 = sphi 0, %s614
      %s629 = sphi 0, %s615
      %s633 = sphi 0, %s633
      %s635 = sphi 0, %s633
      %s636 = sphi 0, %s635
      %s650 = sphi 0, %s636
      %s654 = sphi 0, %s654
      %s656 = sphi 0, %s654
      %s657 = sphi 0, %s656
      %s671 = sphi 0, %s657
      %s675 = sphi 0, %s675
      %s677 = sphi 0, %s675
      %s678 = sphi 0, %s677
      %s692 = sphi 0, %s678
      %s696 = sphi 0, %s696
      %s698 = sphi 0, %s696
      %s699 = sphi 0, %s698
      %s713 = sphi 0, %s699
      %s717 = sphi 0, %s717
      %s719 = sphi 0, %s717
      %s720 = sphi 0, %s719
      %s734 = sphi 0, %s720
      %s740 = sphi 0, %s742
      %s743 = sphi 0, %s740
      %s744 = sphi 0, %s743
      %s760 = sphi 0, %s744
    $region4: #{sp_model_forward.1} parent=1 // loop_header_branch
      %77 = sbr.rel (%p75) target = $region8
    $region5: #{sp_model_forward.1} parent=1 // loop_body
      %s79 = ssub.s32 %s74, 1
      %s80 = ssub.s32 %s74, 2
      %s81 = sadd.s32 %s74, 1
      %s82 = ssub.s32 %s74, %s81
      %p83 = scmp.eq.s32.totalorder %s82, 0
      %s85 = sadd.s32 %s84, 1
      %s86 = scalar_select %p83, %s84, %s85
      %p89 = pneg %p83
      %p90 = scmp.eq.s32.totalorder %s74, 1
      %p91 = por %p89, %p90
      %p92 = scmp.ne.s32.totalorder %s84, %s87
      %p93 = scmp.eq.s32.totalorder %s74, 0
      %p94 = por %p92, %p93
      %p95 = scmp.ne.s32.totalorder %s84, %s87
      %p96 = scmp.eq.s32.totalorder %s79, 1
      %p97 = por %p95, %p96
      %p98 = scmp.ne.s32.totalorder %s87, %s88
      %p99 = scmp.eq.s32.totalorder %s79, 0
      %p100 = por %p98, %p99
      %p101 = scmp.ne.s32.totalorder %s87, %s88
      %p102 = scmp.eq.s32.totalorder %s80, 1
      %p103 = por %p101, %p102
      %p105 = scmp.ne.s32.totalorder %s88, %s104
      %p106 = scmp.eq.s32.totalorder %s80, 0
      %p107 = por %p105, %p106
      %s109 = sadd.s32 %s108, 1
      %p112 = scmp.eq.s32.totalorder %s74, 1
      %p113 = scmp.ne.s32.totalorder %s108, %s110
      %p114 = scmp.eq.s32.totalorder %s74, 0
      %p115 = por %p113, %p114
      %p116 = scmp.ne.s32.totalorder %s108, %s110
      %p117 = scmp.eq.s32.totalorder %s79, 1
      %p118 = por %p116, %p117
      %p119 = scmp.ne.s32.totalorder %s110, %s111
      %p120 = scmp.eq.s32.totalorder %s79, 0
      %p121 = por %p119, %p120
      %p122 = scmp.ne.s32.totalorder %s110, %s111
      %p123 = scmp.eq.s32.totalorder %s80, 1
      %p124 = por %p122, %p123
      %p126 = scmp.ne.s32.totalorder %s111, %s125
      %p127 = scmp.eq.s32.totalorder %s80, 0
      %p128 = por %p126, %p127
      %s130 = sadd.s32 %s129, 1
      %p133 = scmp.eq.s32.totalorder %s74, 1
      %p134 = scmp.ne.s32.totalorder %s129, %s131
      %p135 = scmp.eq.s32.totalorder %s74, 0
      %p136 = por %p134, %p135
      %p137 = scmp.ne.s32.totalorder %s129, %s131
      %p138 = scmp.eq.s32.totalorder %s79, 1
      %p139 = por %p137, %p138
      %p140 = scmp.ne.s32.totalorder %s131, %s132
      %p141 = scmp.eq.s32.totalorder %s79, 0
      %p142 = por %p140, %p141
      %p143 = scmp.ne.s32.totalorder %s131, %s132
      %p144 = scmp.eq.s32.totalorder %s80, 1
      %p145 = por %p143, %p144
      %p147 = scmp.ne.s32.totalorder %s132, %s146
      %p148 = scmp.eq.s32.totalorder %s80, 0
      %p149 = por %p147, %p148
      %s151 = sadd.s32 %s150, 1
      %p154 = scmp.eq.s32.totalorder %s74, 1
      %p155 = scmp.ne.s32.totalorder %s150, %s152
      %p156 = scmp.eq.s32.totalorder %s74, 0
      %p157 = por %p155, %p156
      %p158 = scmp.ne.s32.totalorder %s150, %s152
      %p159 = scmp.eq.s32.totalorder %s79, 1
      %p160 = por %p158, %p159
      %p161 = scmp.ne.s32.totalorder %s152, %s153
      %p162 = scmp.eq.s32.totalorder %s79, 0
      %p163 = por %p161, %p162
      %p164 = scmp.ne.s32.totalorder %s152, %s153
      %p165 = scmp.eq.s32.totalorder %s80, 1
      %p166 = por %p164, %p165
      %p168 = scmp.ne.s32.totalorder %s153, %s167
      %p169 = scmp.eq.s32.totalorder %s80, 0
      %p170 = por %p168, %p169
      %s172 = sadd.s32 %s171, 1
      %p175 = scmp.eq.s32.totalorder %s74, 1
      %p176 = scmp.ne.s32.totalorder %s171, %s173
      %p177 = scmp.eq.s32.totalorder %s74, 0
      %p178 = por %p176, %p177
      %p179 = scmp.ne.s32.totalorder %s171, %s173
      %p180 = scmp.eq.s32.totalorder %s79, 1
      %p181 = por %p179, %p180
      %p182 = scmp.ne.s32.totalorder %s173, %s174
      %p183 = scmp.eq.s32.totalorder %s79, 0
      %p184 = por %p182, %p183
      %p185 = scmp.ne.s32.totalorder %s173, %s174
      %p186 = scmp.eq.s32.totalorder %s80, 1
      %p187 = por %p185, %p186
      %p189 = scmp.ne.s32.totalorder %s174, %s188
      %p190 = scmp.eq.s32.totalorder %s80, 0
      %p191 = por %p189, %p190
      %s193 = sadd.s32 %s192, 1
      %p196 = scmp.eq.s32.totalorder %s74, 1
      %p197 = scmp.ne.s32.totalorder %s192, %s194
      %p198 = scmp.eq.s32.totalorder %s74, 0
      %p199 = por %p197, %p198
      %p200 = scmp.ne.s32.totalorder %s192, %s194
      %p201 = scmp.eq.s32.totalorder %s79, 1
      %p202 = por %p200, %p201
      %p203 = scmp.ne.s32.totalorder %s194, %s195
      %p204 = scmp.eq.s32.totalorder %s79, 0
      %p205 = por %p203, %p204
      %p206 = scmp.ne.s32.totalorder %s194, %s195
      %p207 = scmp.eq.s32.totalorder %s80, 1
      %p208 = por %p206, %p207
      %p210 = scmp.ne.s32.totalorder %s195, %s209
      %p211 = scmp.eq.s32.totalorder %s80, 0
      %p212 = por %p210, %p211
      %s214 = sadd.s32 %s213, 1
      %p217 = scmp.eq.s32.totalorder %s74, 1
      %p218 = scmp.ne.s32.totalorder %s213, %s215
      %p219 = scmp.eq.s32.totalorder %s74, 0
      %p220 = por %p218, %p219
      %p221 = scmp.ne.s32.totalorder %s213, %s215
      %p222 = scmp.eq.s32.totalorder %s79, 1
      %p223 = por %p221, %p222
      %p224 = scmp.ne.s32.totalorder %s215, %s216
      %p225 = scmp.eq.s32.totalorder %s79, 0
      %p226 = por %p224, %p225
      %p227 = scmp.ne.s32.totalorder %s215, %s216
      %p228 = scmp.eq.s32.totalorder %s80, 1
      %p229 = por %p227, %p228
      %p231 = scmp.ne.s32.totalorder %s216, %s230
      %p232 = scmp.eq.s32.totalorder %s80, 0
      %p233 = por %p231, %p232
      %s235 = sadd.s32 %s234, 1
      %p238 = scmp.eq.s32.totalorder %s74, 1
      %p239 = scmp.ne.s32.totalorder %s234, %s236
      %p240 = scmp.eq.s32.totalorder %s74, 0
      %p241 = por %p239, %p240
      %p242 = scmp.ne.s32.totalorder %s234, %s236
      %p243 = scmp.eq.s32.totalorder %s79, 1
      %p244 = por %p242, %p243
      %p245 = scmp.ne.s32.totalorder %s236, %s237
      %p246 = scmp.eq.s32.totalorder %s79, 0
      %p247 = por %p245, %p246
      %p248 = scmp.ne.s32.totalorder %s236, %s237
      %p249 = scmp.eq.s32.totalorder %s80, 1
      %p250 = por %p248, %p249
      %p252 = scmp.ne.s32.totalorder %s237, %s251
      %p253 = scmp.eq.s32.totalorder %s80, 0
      %p254 = por %p252, %p253
      %s256 = sadd.s32 %s255, 1
      %p259 = scmp.eq.s32.totalorder %s74, 1
      %p260 = scmp.ne.s32.totalorder %s255, %s257
      %p261 = scmp.eq.s32.totalorder %s74, 0
      %p262 = por %p260, %p261
      %p263 = scmp.ne.s32.totalorder %s255, %s257
      %p264 = scmp.eq.s32.totalorder %s79, 1
      %p265 = por %p263, %p264
      %p266 = scmp.ne.s32.totalorder %s257, %s258
      %p267 = scmp.eq.s32.totalorder %s79, 0
      %p268 = por %p266, %p267
      %p269 = scmp.ne.s32.totalorder %s257, %s258
      %p270 = scmp.eq.s32.totalorder %s80, 1
      %p271 = por %p269, %p270
      %p273 = scmp.ne.s32.totalorder %s258, %s272
      %p274 = scmp.eq.s32.totalorder %s80, 0
      %p275 = por %p273, %p274
      %s277 = sadd.s32 %s276, 1
      %p280 = scmp.eq.s32.totalorder %s74, 1
      %p281 = scmp.ne.s32.totalorder %s276, %s278
      %p282 = scmp.eq.s32.totalorder %s74, 0
      %p283 = por %p281, %p282
      %p284 = scmp.ne.s32.totalorder %s276, %s278
      %p285 = scmp.eq.s32.totalorder %s79, 1
      %p286 = por %p284, %p285
      %p287 = scmp.ne.s32.totalorder %s278, %s279
      %p288 = scmp.eq.s32.totalorder %s79, 0
      %p289 = por %p287, %p288
      %p290 = scmp.ne.s32.totalorder %s278, %s279
      %p291 = scmp.eq.s32.totalorder %s80, 1
      %p292 = por %p290, %p291
      %p294 = scmp.ne.s32.totalorder %s279, %s293
      %p295 = scmp.eq.s32.totalorder %s80, 0
      %p296 = por %p294, %p295
      %s298 = sadd.s32 %s297, 1
      %p301 = scmp.eq.s32.totalorder %s74, 1
      %p302 = scmp.ne.s32.totalorder %s297, %s299
      %p303 = scmp.eq.s32.totalorder %s74, 0
      %p304 = por %p302, %p303
      %p305 = scmp.ne.s32.totalorder %s297, %s299
      %p306 = scmp.eq.s32.totalorder %s79, 1
      %p307 = por %p305, %p306
      %p308 = scmp.ne.s32.totalorder %s299, %s300
      %p309 = scmp.eq.s32.totalorder %s79, 0
      %p310 = por %p308, %p309
      %p311 = scmp.ne.s32.totalorder %s299, %s300
      %p312 = scmp.eq.s32.totalorder %s80, 1
      %p313 = por %p311, %p312
      %p315 = scmp.ne.s32.totalorder %s300, %s314
      %p316 = scmp.eq.s32.totalorder %s80, 0
      %p317 = por %p315, %p316
      %s319 = sadd.s32 %s318, 1
      %p322 = scmp.eq.s32.totalorder %s74, 1
      %p323 = scmp.ne.s32.totalorder %s318, %s320
      %p324 = scmp.eq.s32.totalorder %s74, 0
      %p325 = por %p323, %p324
      %p326 = scmp.ne.s32.totalorder %s318, %s320
      %p327 = scmp.eq.s32.totalorder %s79, 1
      %p328 = por %p326, %p327
      %p329 = scmp.ne.s32.totalorder %s320, %s321
      %p330 = scmp.eq.s32.totalorder %s79, 0
      %p331 = por %p329, %p330
      %p332 = scmp.ne.s32.totalorder %s320, %s321
      %p333 = scmp.eq.s32.totalorder %s80, 1
      %p334 = por %p332, %p333
      %p336 = scmp.ne.s32.totalorder %s321, %s335
      %p337 = scmp.eq.s32.totalorder %s80, 0
      %p338 = por %p336, %p337
      %s340 = sadd.s32 %s339, 1
      %p343 = scmp.eq.s32.totalorder %s74, 1
      %p344 = scmp.ne.s32.totalorder %s339, %s341
      %p345 = scmp.eq.s32.totalorder %s74, 0
      %p346 = por %p344, %p345
      %p347 = scmp.ne.s32.totalorder %s339, %s341
      %p348 = scmp.eq.s32.totalorder %s79, 1
      %p349 = por %p347, %p348
      %p350 = scmp.ne.s32.totalorder %s341, %s342
      %p351 = scmp.eq.s32.totalorder %s79, 0
      %p352 = por %p350, %p351
      %p353 = scmp.ne.s32.totalorder %s341, %s342
      %p354 = scmp.eq.s32.totalorder %s80, 1
      %p355 = por %p353, %p354
      %p357 = scmp.ne.s32.totalorder %s342, %s356
      %p358 = scmp.eq.s32.totalorder %s80, 0
      %p359 = por %p357, %p358
      %s361 = sadd.s32 %s360, 1
      %p364 = scmp.eq.s32.totalorder %s74, 1
      %p365 = scmp.ne.s32.totalorder %s360, %s362
      %p366 = scmp.eq.s32.totalorder %s74, 0
      %p367 = por %p365, %p366
      %p368 = scmp.ne.s32.totalorder %s360, %s362
      %p369 = scmp.eq.s32.totalorder %s79, 1
      %p370 = por %p368, %p369
      %p371 = scmp.ne.s32.totalorder %s362, %s363
      %p372 = scmp.eq.s32.totalorder %s79, 0
      %p373 = por %p371, %p372
      %p374 = scmp.ne.s32.totalorder %s362, %s363
      %p375 = scmp.eq.s32.totalorder %s80, 1
      %p376 = por %p374, %p375
      %p378 = scmp.ne.s32.totalorder %s363, %s377
      %p379 = scmp.eq.s32.totalorder %s80, 0
      %p380 = por %p378, %p379
      %s382 = sadd.s32 %s381, 1
      %p385 = scmp.eq.s32.totalorder %s74, 1
      %p386 = scmp.ne.s32.totalorder %s381, %s383
      %p387 = scmp.eq.s32.totalorder %s74, 0
      %p388 = por %p386, %p387
      %p389 = scmp.ne.s32.totalorder %s381, %s383
      %p390 = scmp.eq.s32.totalorder %s79, 1
      %p391 = por %p389, %p390
      %p392 = scmp.ne.s32.totalorder %s383, %s384
      %p393 = scmp.eq.s32.totalorder %s79, 0
      %p394 = por %p392, %p393
      %p395 = scmp.ne.s32.totalorder %s383, %s384
      %p396 = scmp.eq.s32.totalorder %s80, 1
      %p397 = por %p395, %p396
      %p399 = scmp.ne.s32.totalorder %s384, %s398
      %p400 = scmp.eq.s32.totalorder %s80, 0
      %p401 = por %p399, %p400
      %s403 = sadd.s32 %s402, 1
      %p406 = scmp.eq.s32.totalorder %s74, 1
      %p407 = scmp.ne.s32.totalorder %s402, %s404
      %p408 = scmp.eq.s32.totalorder %s74, 0
      %p409 = por %p407, %p408
      %p410 = scmp.ne.s32.totalorder %s402, %s404
      %p411 = scmp.eq.s32.totalorder %s79, 1
      %p412 = por %p410, %p411
      %p413 = scmp.ne.s32.totalorder %s404, %s405
      %p414 = scmp.eq.s32.totalorder %s79, 0
      %p415 = por %p413, %p414
      %p416 = scmp.ne.s32.totalorder %s404, %s405
      %p417 = scmp.eq.s32.totalorder %s80, 1
      %p418 = por %p416, %p417
      %p420 = scmp.ne.s32.totalorder %s405, %s419
      %p421 = scmp.eq.s32.totalorder %s80, 0
      %p422 = por %p420, %p421
      %s424 = sadd.s32 %s423, 1
      %p427 = scmp.eq.s32.totalorder %s74, 1
      %p428 = scmp.ne.s32.totalorder %s423, %s425
      %p429 = scmp.eq.s32.totalorder %s74, 0
      %p430 = por %p428, %p429
      %p431 = scmp.ne.s32.totalorder %s423, %s425
      %p432 = scmp.eq.s32.totalorder %s79, 1
      %p433 = por %p431, %p432
      %p434 = scmp.ne.s32.totalorder %s425, %s426
      %p435 = scmp.eq.s32.totalorder %s79, 0
      %p436 = por %p434, %p435
      %p437 = scmp.ne.s32.totalorder %s425, %s426
      %p438 = scmp.eq.s32.totalorder %s80, 1
      %p439 = por %p437, %p438
      %p441 = scmp.ne.s32.totalorder %s426, %s440
      %p442 = scmp.eq.s32.totalorder %s80, 0
      %p443 = por %p441, %p442
      %s445 = sadd.s32 %s444, 1
      %p448 = scmp.eq.s32.totalorder %s74, 1
      %p449 = scmp.ne.s32.totalorder %s444, %s446
      %p450 = scmp.eq.s32.totalorder %s74, 0
      %p451 = por %p449, %p450
      %p452 = scmp.ne.s32.totalorder %s444, %s446
      %p453 = scmp.eq.s32.totalorder %s79, 1
      %p454 = por %p452, %p453
      %p455 = scmp.ne.s32.totalorder %s446, %s447
      %p456 = scmp.eq.s32.totalorder %s79, 0
      %p457 = por %p455, %p456
      %p458 = scmp.ne.s32.totalorder %s446, %s447
      %p459 = scmp.eq.s32.totalorder %s80, 1
      %p460 = por %p458, %p459
      %p462 = scmp.ne.s32.totalorder %s447, %s461
      %p463 = scmp.eq.s32.totalorder %s80, 0
      %p464 = por %p462, %p463
      %s466 = sadd.s32 %s465, 1
      %p469 = scmp.eq.s32.totalorder %s74, 1
      %p470 = scmp.ne.s32.totalorder %s465, %s467
      %p471 = scmp.eq.s32.totalorder %s74, 0
      %p472 = por %p470, %p471
      %p473 = scmp.ne.s32.totalorder %s465, %s467
      %p474 = scmp.eq.s32.totalorder %s79, 1
      %p475 = por %p473, %p474
      %p476 = scmp.ne.s32.totalorder %s467, %s468
      %p477 = scmp.eq.s32.totalorder %s79, 0
      %p478 = por %p476, %p477
      %p479 = scmp.ne.s32.totalorder %s467, %s468
      %p480 = scmp.eq.s32.totalorder %s80, 1
      %p481 = por %p479, %p480
      %p483 = scmp.ne.s32.totalorder %s468, %s482
      %p484 = scmp.eq.s32.totalorder %s80, 0
      %p485 = por %p483, %p484
      %s487 = sadd.s32 %s486, 1
      %p490 = scmp.eq.s32.totalorder %s74, 1
      %p491 = scmp.ne.s32.totalorder %s486, %s488
      %p492 = scmp.eq.s32.totalorder %s74, 0
      %p493 = por %p491, %p492
      %p494 = scmp.ne.s32.totalorder %s486, %s488
      %p495 = scmp.eq.s32.totalorder %s79, 1
      %p496 = por %p494, %p495
      %p497 = scmp.ne.s32.totalorder %s488, %s489
      %p498 = scmp.eq.s32.totalorder %s79, 0
      %p499 = por %p497, %p498
      %p500 = scmp.ne.s32.totalorder %s488, %s489
      %p501 = scmp.eq.s32.totalorder %s80, 1
      %p502 = por %p500, %p501
      %p504 = scmp.ne.s32.totalorder %s489, %s503
      %p505 = scmp.eq.s32.totalorder %s80, 0
      %p506 = por %p504, %p505
      %s508 = sadd.s32 %s507, 1
      %p511 = scmp.eq.s32.totalorder %s74, 1
      %p512 = scmp.ne.s32.totalorder %s507, %s509
      %p513 = scmp.eq.s32.totalorder %s74, 0
      %p514 = por %p512, %p513
      %p515 = scmp.ne.s32.totalorder %s507, %s509
      %p516 = scmp.eq.s32.totalorder %s79, 1
      %p517 = por %p515, %p516
      %p518 = scmp.ne.s32.totalorder %s509, %s510
      %p519 = scmp.eq.s32.totalorder %s79, 0
      %p520 = por %p518, %p519
      %p521 = scmp.ne.s32.totalorder %s509, %s510
      %p522 = scmp.eq.s32.totalorder %s80, 1
      %p523 = por %p521, %p522
      %p525 = scmp.ne.s32.totalorder %s510, %s524
      %p526 = scmp.eq.s32.totalorder %s80, 0
      %p527 = por %p525, %p526
      %s529 = sadd.s32 %s528, 1
      %p532 = scmp.eq.s32.totalorder %s74, 1
      %p533 = scmp.ne.s32.totalorder %s528, %s530
      %p534 = scmp.eq.s32.totalorder %s74, 0
      %p535 = por %p533, %p534
      %p536 = scmp.ne.s32.totalorder %s528, %s530
      %p537 = scmp.eq.s32.totalorder %s79, 1
      %p538 = por %p536, %p537
      %p539 = scmp.ne.s32.totalorder %s530, %s531
      %p540 = scmp.eq.s32.totalorder %s79, 0
      %p541 = por %p539, %p540
      %p542 = scmp.ne.s32.totalorder %s530, %s531
      %p543 = scmp.eq.s32.totalorder %s80, 1
      %p544 = por %p542, %p543
      %p546 = scmp.ne.s32.totalorder %s531, %s545
      %p547 = scmp.eq.s32.totalorder %s80, 0
      %p548 = por %p546, %p547
      %s550 = sadd.s32 %s549, 1
      %p553 = scmp.eq.s32.totalorder %s74, 1
      %p554 = scmp.ne.s32.totalorder %s549, %s551
      %p555 = scmp.eq.s32.totalorder %s74, 0
      %p556 = por %p554, %p555
      %p557 = scmp.ne.s32.totalorder %s549, %s551
      %p558 = scmp.eq.s32.totalorder %s79, 1
      %p559 = por %p557, %p558
      %p560 = scmp.ne.s32.totalorder %s551, %s552
      %p561 = scmp.eq.s32.totalorder %s79, 0
      %p562 = por %p560, %p561
      %p563 = scmp.ne.s32.totalorder %s551, %s552
      %p564 = scmp.eq.s32.totalorder %s80, 1
      %p565 = por %p563, %p564
      %p567 = scmp.ne.s32.totalorder %s552, %s566
      %p568 = scmp.eq.s32.totalorder %s80, 0
      %p569 = por %p567, %p568
      %s571 = sadd.s32 %s570, 1
      %p574 = scmp.eq.s32.totalorder %s74, 1
      %p575 = scmp.ne.s32.totalorder %s570, %s572
      %p576 = scmp.eq.s32.totalorder %s74, 0
      %p577 = por %p575, %p576
      %p578 = scmp.ne.s32.totalorder %s570, %s572
      %p579 = scmp.eq.s32.totalorder %s79, 1
      %p580 = por %p578, %p579
      %p581 = scmp.ne.s32.totalorder %s572, %s573
      %p582 = scmp.eq.s32.totalorder %s79, 0
      %p583 = por %p581, %p582
      %p584 = scmp.ne.s32.totalorder %s572, %s573
      %p585 = scmp.eq.s32.totalorder %s80, 1
      %p586 = por %p584, %p585
      %p588 = scmp.ne.s32.totalorder %s573, %s587
      %p589 = scmp.eq.s32.totalorder %s80, 0
      %p590 = por %p588, %p589
      %s592 = sadd.s32 %s591, 1
      %p595 = scmp.eq.s32.totalorder %s74, 1
      %p596 = scmp.ne.s32.totalorder %s591, %s593
      %p597 = scmp.eq.s32.totalorder %s74, 0
      %p598 = por %p596, %p597
      %p599 = scmp.ne.s32.totalorder %s591, %s593
      %p600 = scmp.eq.s32.totalorder %s79, 1
      %p601 = por %p599, %p600
      %p602 = scmp.ne.s32.totalorder %s593, %s594
      %p603 = scmp.eq.s32.totalorder %s79, 0
      %p604 = por %p602, %p603
      %p605 = scmp.ne.s32.totalorder %s593, %s594
      %p606 = scmp.eq.s32.totalorder %s80, 1
      %p607 = por %p605, %p606
      %p609 = scmp.ne.s32.totalorder %s594, %s608
      %p610 = scmp.eq.s32.totalorder %s80, 0
      %p611 = por %p609, %p610
      %s613 = sadd.s32 %s612, 1
      %p616 = scmp.eq.s32.totalorder %s74, 1
      %p617 = scmp.ne.s32.totalorder %s612, %s614
      %p618 = scmp.eq.s32.totalorder %s74, 0
      %p619 = por %p617, %p618
      %p620 = scmp.ne.s32.totalorder %s612, %s614
      %p621 = scmp.eq.s32.totalorder %s79, 1
      %p622 = por %p620, %p621
      %p623 = scmp.ne.s32.totalorder %s614, %s615
      %p624 = scmp.eq.s32.totalorder %s79, 0
      %p625 = por %p623, %p624
      %p626 = scmp.ne.s32.totalorder %s614, %s615
      %p627 = scmp.eq.s32.totalorder %s80, 1
      %p628 = por %p626, %p627
      %p630 = scmp.ne.s32.totalorder %s615, %s629
      %p631 = scmp.eq.s32.totalorder %s80, 0
      %p632 = por %p630, %p631
      %s634 = sadd.s32 %s633, 1
      %p637 = scmp.eq.s32.totalorder %s74, 1
      %p638 = scmp.ne.s32.totalorder %s633, %s635
      %p639 = scmp.eq.s32.totalorder %s74, 0
      %p640 = por %p638, %p639
      %p641 = scmp.ne.s32.totalorder %s633, %s635
      %p642 = scmp.eq.s32.totalorder %s79, 1
      %p643 = por %p641, %p642
      %p644 = scmp.ne.s32.totalorder %s635, %s636
      %p645 = scmp.eq.s32.totalorder %s79, 0
      %p646 = por %p644, %p645
      %p647 = scmp.ne.s32.totalorder %s635, %s636
      %p648 = scmp.eq.s32.totalorder %s80, 1
      %p649 = por %p647, %p648
      %p651 = scmp.ne.s32.totalorder %s636, %s650
      %p652 = scmp.eq.s32.totalorder %s80, 0
      %p653 = por %p651, %p652
      %s655 = sadd.s32 %s654, 1
      %p658 = scmp.eq.s32.totalorder %s74, 1
      %p659 = scmp.ne.s32.totalorder %s654, %s656
      %p660 = scmp.eq.s32.totalorder %s74, 0
      %p661 = por %p659, %p660
      %p662 = scmp.ne.s32.totalorder %s654, %s656
      %p663 = scmp.eq.s32.totalorder %s79, 1
      %p664 = por %p662, %p663
      %p665 = scmp.ne.s32.totalorder %s656, %s657
      %p666 = scmp.eq.s32.totalorder %s79, 0
      %p667 = por %p665, %p666
      %p668 = scmp.ne.s32.totalorder %s656, %s657
      %p669 = scmp.eq.s32.totalorder %s80, 1
      %p670 = por %p668, %p669
      %p672 = scmp.ne.s32.totalorder %s657, %s671
      %p673 = scmp.eq.s32.totalorder %s80, 0
      %p674 = por %p672, %p673
      %s676 = sadd.s32 %s675, 1
      %p679 = scmp.eq.s32.totalorder %s74, 1
      %p680 = scmp.ne.s32.totalorder %s675, %s677
      %p681 = scmp.eq.s32.totalorder %s74, 0
      %p682 = por %p680, %p681
      %p683 = scmp.ne.s32.totalorder %s675, %s677
      %p684 = scmp.eq.s32.totalorder %s79, 1
      %p685 = por %p683, %p684
      %p686 = scmp.ne.s32.totalorder %s677, %s678
      %p687 = scmp.eq.s32.totalorder %s79, 0
      %p688 = por %p686, %p687
      %p689 = scmp.ne.s32.totalorder %s677, %s678
      %p690 = scmp.eq.s32.totalorder %s80, 1
      %p691 = por %p689, %p690
      %p693 = scmp.ne.s32.totalorder %s678, %s692
      %p694 = scmp.eq.s32.totalorder %s80, 0
      %p695 = por %p693, %p694
      %s697 = sadd.s32 %s696, 1
      %p700 = scmp.eq.s32.totalorder %s74, 1
      %p701 = scmp.ne.s32.totalorder %s696, %s698
      %p702 = scmp.eq.s32.totalorder %s74, 0
      %p703 = por %p701, %p702
      %p704 = scmp.ne.s32.totalorder %s696, %s698
      %p705 = scmp.eq.s32.totalorder %s79, 1
      %p706 = por %p704, %p705
      %p707 = scmp.ne.s32.totalorder %s698, %s699
      %p708 = scmp.eq.s32.totalorder %s79, 0
      %p709 = por %p707, %p708
      %p710 = scmp.ne.s32.totalorder %s698, %s699
      %p711 = scmp.eq.s32.totalorder %s80, 1
      %p712 = por %p710, %p711
      %p714 = scmp.ne.s32.totalorder %s699, %s713
      %p715 = scmp.eq.s32.totalorder %s80, 0
      %p716 = por %p714, %p715
      %s718 = sadd.s32 %s717, 1
      %p721 = scmp.eq.s32.totalorder %s74, 1
      %p722 = scmp.ne.s32.totalorder %s717, %s719
      %p723 = scmp.eq.s32.totalorder %s74, 0
      %p724 = por %p722, %p723
      %p725 = scmp.ne.s32.totalorder %s717, %s719
      %p726 = scmp.eq.s32.totalorder %s79, 1
      %p727 = por %p725, %p726
      %p728 = scmp.ne.s32.totalorder %s719, %s720
      %p729 = scmp.eq.s32.totalorder %s79, 0
      %p730 = por %p728, %p729
      %p731 = scmp.ne.s32.totalorder %s719, %s720
      %p732 = scmp.eq.s32.totalorder %s80, 1
      %p733 = por %p731, %p732
      %p735 = scmp.ne.s32.totalorder %s720, %s734
      %p736 = scmp.eq.s32.totalorder %s80, 0
      %p737 = por %p735, %p736
      %s738 = ssub.s32 %s74, %s81
      %p739 = scmp.eq.s32.totalorder %s738, 0
      %s741 = sadd.s32 %s740, 1
      %s742 = scalar_select %p739, %s740, %s741
      %p745 = pneg %p739
      %p746 = scmp.eq.s32.totalorder %s74, 1
      %p747 = por %p745, %p746
      %p748 = scmp.ne.s32.totalorder %s740, %s743
      %p749 = scmp.eq.s32.totalorder %s74, 0
      %p750 = por %p748, %p749
      %p751 = scmp.ne.s32.totalorder %s740, %s743
      %p752 = scmp.eq.s32.totalorder %s79, 1
      %p753 = por %p751, %p752
      %p754 = scmp.ne.s32.totalorder %s743, %s744
      %p755 = scmp.eq.s32.totalorder %s79, 0
      %p756 = por %p754, %p755
      %p757 = scmp.ne.s32.totalorder %s743, %s744
      %p758 = scmp.eq.s32.totalorder %s80, 1
      %p759 = por %p757, %p758
      %p761 = scmp.ne.s32.totalorder %s744, %s760
      %p762 = scmp.eq.s32.totalorder %s80, 0
      %p763 = por %p761, %p762
      %p764 = scmp.le.s32.totalorder 1, %s74
      %p765 = scmp.lt.s32.totalorder %s74, 3
      %p766 = pnand %p764, %p765
      %p767 = pneg %p766
      // Predicated region
      $region9: #{sp_model_forward.1} parent=5 // pred_check
        _
      $region10: #{sp_model_forward.1} parent=5 // pred_check_branch
        %769 = sbr.rel (%p766) target = $region12
      $region11: #{sp_model_forward.1} parent=5 // pred_region
        %s770 = ssub.s32 %s74, 1
        // Predicated region
        $region13: #{sp_model_forward.1} parent=11 // pred_check
          %p771 = pneg %p121
        $region14: #{sp_model_forward.1} parent=11 // pred_check_branch
          %773 = sbr.rel (%p771) target = $region16
        $region15: #{sp_model_forward.1} parent=11 // pred_region
          _
        $region16: #{sp_model_forward.1} parent=11 // pred_fallthru
          _
        // Predicated region
        $region17: #{sp_model_forward.1} parent=11 // pred_check
          %p774 = pneg %p142
        $region18: #{sp_model_forward.1} parent=11 // pred_check_branch
          %776 = sbr.rel (%p774) target = $region20
        $region19: #{sp_model_forward.1} parent=11 // pred_region
          _
        $region20: #{sp_model_forward.1} parent=11 // pred_fallthru
          _
        // Predicated region
        $region21: #{sp_model_forward.1} parent=11 // pred_check
          %p777 = pneg %p163
        $region22: #{sp_model_forward.1} parent=11 // pred_check_branch
          %779 = sbr.rel (%p777) target = $region24
        $region23: #{sp_model_forward.1} parent=11 // pred_region
          _
        $region24: #{sp_model_forward.1} parent=11 // pred_fallthru
          _
        // Predicated region
        $region25: #{sp_model_forward.1} parent=11 // pred_check
          %p780 = pneg %p184
        $region26: #{sp_model_forward.1} parent=11 // pred_check_branch
          %782 = sbr.rel (%p780) target = $region28
        $region27: #{sp_model_forward.1} parent=11 // pred_region
          _
        $region28: #{sp_model_forward.1} parent=11 // pred_fallthru
          _
        // Predicated region
        $region29: #{sp_model_forward.1} parent=11 // pred_check
          %p783 = pneg %p205
        $region30: #{sp_model_forward.1} parent=11 // pred_check_branch
          %785 = sbr.rel (%p783) target = $region32
        $region31: #{sp_model_forward.1} parent=11 // pred_region
          _
        $region32: #{sp_model_forward.1} parent=11 // pred_fallthru
          _
        // Predicated region
        $region33: #{sp_model_forward.1} parent=11 // pred_check
          %p786 = pneg %p226
        $region34: #{sp_model_forward.1} parent=11 // pred_check_branch
          %788 = sbr.rel (%p786) target = $region36
        $region35: #{sp_model_forward.1} parent=11 // pred_region
          _
        $region36: #{sp_model_forward.1} parent=11 // pred_fallthru
          _
        // Predicated region
        $region37: #{sp_model_forward.1} parent=11 // pred_check
          %p789 = pneg %p247
        $region38: #{sp_model_forward.1} parent=11 // pred_check_branch
          %791 = sbr.rel (%p789) target = $region40
        $region39: #{sp_model_forward.1} parent=11 // pred_region
          _
        $region40: #{sp_model_forward.1} parent=11 // pred_fallthru
          _
        // Predicated region
        $region41: #{sp_model_forward.1} parent=11 // pred_check
          %p792 = pneg %p268
        $region42: #{sp_model_forward.1} parent=11 // pred_check_branch
          %794 = sbr.rel (%p792) target = $region44
        $region43: #{sp_model_forward.1} parent=11 // pred_region
          _
        $region44: #{sp_model_forward.1} parent=11 // pred_fallthru
          _
        // Predicated region
        $region45: #{sp_model_forward.1} parent=11 // pred_check
          %p795 = pneg %p289
        $region46: #{sp_model_forward.1} parent=11 // pred_check_branch
          %797 = sbr.rel (%p795) target = $region48
        $region47: #{sp_model_forward.1} parent=11 // pred_region
          _
        $region48: #{sp_model_forward.1} parent=11 // pred_fallthru
          _
        // Predicated region
        $region49: #{sp_model_forward.1} parent=11 // pred_check
          %p798 = pneg %p310
        $region50: #{sp_model_forward.1} parent=11 // pred_check_branch
          %800 = sbr.rel (%p798) target = $region52
        $region51: #{sp_model_forward.1} parent=11 // pred_region
          _
        $region52: #{sp_model_forward.1} parent=11 // pred_fallthru
          _
        // Predicated region
        $region53: #{sp_model_forward.1} parent=11 // pred_check
          %p801 = pneg %p331
        $region54: #{sp_model_forward.1} parent=11 // pred_check_branch
          %803 = sbr.rel (%p801) target = $region56
        $region55: #{sp_model_forward.1} parent=11 // pred_region
          _
        $region56: #{sp_model_forward.1} parent=11 // pred_fallthru
          _
        // Predicated region
        $region57: #{sp_model_forward.1} parent=11 // pred_check
          %p804 = pneg %p352
        $region58: #{sp_model_forward.1} parent=11 // pred_check_branch
          %806 = sbr.rel (%p804) target = $region60
        $region59: #{sp_model_forward.1} parent=11 // pred_region
          _
        $region60: #{sp_model_forward.1} parent=11 // pred_fallthru
          _
        // Predicated region
        $region61: #{sp_model_forward.1} parent=11 // pred_check
          %p807 = pneg %p373
        $region62: #{sp_model_forward.1} parent=11 // pred_check_branch
          %809 = sbr.rel (%p807) target = $region64
        $region63: #{sp_model_forward.1} parent=11 // pred_region
          _
        $region64: #{sp_model_forward.1} parent=11 // pred_fallthru
          _
        // Predicated region
        $region65: #{sp_model_forward.1} parent=11 // pred_check
          %p810 = pneg %p394
        $region66: #{sp_model_forward.1} parent=11 // pred_check_branch
          %812 = sbr.rel (%p810) target = $region68
        $region67: #{sp_model_forward.1} parent=11 // pred_region
          _
        $region68: #{sp_model_forward.1} parent=11 // pred_fallthru
          _
        // Predicated region
        $region69: #{sp_model_forward.1} parent=11 // pred_check
          %p813 = pneg %p415
        $region70: #{sp_model_forward.1} parent=11 // pred_check_branch
          %815 = sbr.rel (%p813) target = $region72
        $region71: #{sp_model_forward.1} parent=11 // pred_region
          _
        $region72: #{sp_model_forward.1} parent=11 // pred_fallthru
          _
        // Predicated region
        $region73: #{sp_model_forward.1} parent=11 // pred_check
          %p816 = pneg %p436
        $region74: #{sp_model_forward.1} parent=11 // pred_check_branch
          %818 = sbr.rel (%p816) target = $region76
        $region75: #{sp_model_forward.1} parent=11 // pred_region
          _
        $region76: #{sp_model_forward.1} parent=11 // pred_fallthru
          _
        // Predicated region
        $region77: #{sp_model_forward.1} parent=11 // pred_check
          %p819 = pneg %p457
        $region78: #{sp_model_forward.1} parent=11 // pred_check_branch
          %821 = sbr.rel (%p819) target = $region80
        $region79: #{sp_model_forward.1} parent=11 // pred_region
          _
        $region80: #{sp_model_forward.1} parent=11 // pred_fallthru
          _
        // Predicated region
        $region81: #{sp_model_forward.1} parent=11 // pred_check
          %p822 = pneg %p478
        $region82: #{sp_model_forward.1} parent=11 // pred_check_branch
          %824 = sbr.rel (%p822) target = $region84
        $region83: #{sp_model_forward.1} parent=11 // pred_region
          _
        $region84: #{sp_model_forward.1} parent=11 // pred_fallthru
          _
        // Predicated region
        $region85: #{sp_model_forward.1} parent=11 // pred_check
          %p825 = pneg %p499
        $region86: #{sp_model_forward.1} parent=11 // pred_check_branch
          %827 = sbr.rel (%p825) target = $region88
        $region87: #{sp_model_forward.1} parent=11 // pred_region
          _
        $region88: #{sp_model_forward.1} parent=11 // pred_fallthru
          _
        // Predicated region
        $region89: #{sp_model_forward.1} parent=11 // pred_check
          %p828 = pneg %p520
        $region90: #{sp_model_forward.1} parent=11 // pred_check_branch
          %830 = sbr.rel (%p828) target = $region92
        $region91: #{sp_model_forward.1} parent=11 // pred_region
          _
        $region92: #{sp_model_forward.1} parent=11 // pred_fallthru
          _
        // Predicated region
        $region93: #{sp_model_forward.1} parent=11 // pred_check
          %p831 = pneg %p541
        $region94: #{sp_model_forward.1} parent=11 // pred_check_branch
          %833 = sbr.rel (%p831) target = $region96
        $region95: #{sp_model_forward.1} parent=11 // pred_region
          _
        $region96: #{sp_model_forward.1} parent=11 // pred_fallthru
          _
        // Predicated region
        $region97: #{sp_model_forward.1} parent=11 // pred_check
          %p834 = pneg %p562
        $region98: #{sp_model_forward.1} parent=11 // pred_check_branch
          %836 = sbr.rel (%p834) target = $region100
        $region99: #{sp_model_forward.1} parent=11 // pred_region
          _
        $region100: #{sp_model_forward.1} parent=11 // pred_fallthru
          _
        // Predicated region
        $region101: #{sp_model_forward.1} parent=11 // pred_check
          %p837 = pneg %p583
        $region102: #{sp_model_forward.1} parent=11 // pred_check_branch
          %839 = sbr.rel (%p837) target = $region104
        $region103: #{sp_model_forward.1} parent=11 // pred_region
          _
        $region104: #{sp_model_forward.1} parent=11 // pred_fallthru
          _
        // Predicated region
        $region105: #{sp_model_forward.1} parent=11 // pred_check
          %p840 = pneg %p604
        $region106: #{sp_model_forward.1} parent=11 // pred_check_branch
          %842 = sbr.rel (%p840) target = $region108
        $region107: #{sp_model_forward.1} parent=11 // pred_region
          _
        $region108: #{sp_model_forward.1} parent=11 // pred_fallthru
          _
        // Predicated region
        $region109: #{sp_model_forward.1} parent=11 // pred_check
          %p843 = pneg %p625
        $region110: #{sp_model_forward.1} parent=11 // pred_check_branch
          %845 = sbr.rel (%p843) target = $region112
        $region111: #{sp_model_forward.1} parent=11 // pred_region
          _
        $region112: #{sp_model_forward.1} parent=11 // pred_fallthru
          _
        // Predicated region
        $region113: #{sp_model_forward.1} parent=11 // pred_check
          %p846 = pneg %p646
        $region114: #{sp_model_forward.1} parent=11 // pred_check_branch
          %848 = sbr.rel (%p846) target = $region116
        $region115: #{sp_model_forward.1} parent=11 // pred_region
          _
        $region116: #{sp_model_forward.1} parent=11 // pred_fallthru
          _
        // Predicated region
        $region117: #{sp_model_forward.1} parent=11 // pred_check
          %p849 = pneg %p667
        $region118: #{sp_model_forward.1} parent=11 // pred_check_branch
          %851 = sbr.rel (%p849) target = $region120
        $region119: #{sp_model_forward.1} parent=11 // pred_region
          _
        $region120: #{sp_model_forward.1} parent=11 // pred_fallthru
          _
        // Predicated region
        $region121: #{sp_model_forward.1} parent=11 // pred_check
          %p852 = pneg %p688
        $region122: #{sp_model_forward.1} parent=11 // pred_check_branch
          %854 = sbr.rel (%p852) target = $region124
        $region123: #{sp_model_forward.1} parent=11 // pred_region
          _
        $region124: #{sp_model_forward.1} parent=11 // pred_fallthru
          _
        // Predicated region
        $region125: #{sp_model_forward.1} parent=11 // pred_check
          %p855 = pneg %p709
        $region126: #{sp_model_forward.1} parent=11 // pred_check_branch
          %857 = sbr.rel (%p855) target = $region128
        $region127: #{sp_model_forward.1} parent=11 // pred_region
          _
        $region128: #{sp_model_forward.1} parent=11 // pred_fallthru
          _
        // Predicated region
        $region129: #{sp_model_forward.1} parent=11 // pred_check
          %p858 = pneg %p730
        $region130: #{sp_model_forward.1} parent=11 // pred_check_branch
          %860 = sbr.rel (%p858) target = $region132
        $region131: #{sp_model_forward.1} parent=11 // pred_region
          _
        $region132: #{sp_model_forward.1} parent=11 // pred_fallthru
          _
      $region12: #{sp_model_forward.1} parent=5 // pred_fallthru
        _
      %p861 = scmp.lt.s32.totalorder %s74, 2
      // Predicated region
      $region133: #{sp_model_forward.1} parent=5 // pred_check
        %p862 = pneg %p861
      $region134: #{sp_model_forward.1} parent=5 // pred_check_branch
        %864 = sbr.rel (%p862) target = $region136
      $region135: #{sp_model_forward.1} parent=5 // pred_region
        // Predicated region
        $region137: #{sp_model_forward.1} parent=135 // pred_check
          %p865 = pneg %p94
        $region138: #{sp_model_forward.1} parent=135 // pred_check_branch
          %867 = sbr.rel (%p865) target = $region140
        $region139: #{sp_model_forward.1} parent=135 // pred_region
          %p868 = scmp.lt.s32.totalorder %s74, 1
          %s869 = scalar_select %p868, %s74, 1
          %s870 = smul.addr %s869, 2
          %s871 = smul.addr %s870, 4
          %s872 = scalar_lea.vmem %s1, %s871
        $region140: #{sp_model_forward.1} parent=135 // pred_fallthru
          _
      $region136: #{sp_model_forward.1} parent=5 // pred_fallthru
        _
      %p873 = scmp.le.s32.totalorder 1, %s74
      %p874 = scmp.lt.s32.totalorder %s74, 3
      %p875 = pnand %p873, %p874
      %p876 = pneg %p875
      // Predicated region
      $region141: #{sp_model_forward.1} parent=5 // pred_check
        _
      $region142: #{sp_model_forward.1} parent=5 // pred_check_branch
        %878 = sbr.rel (%p875) target = $region144
      $region143: #{sp_model_forward.1} parent=5 // pred_region
        %s879 = ssub.s32 %s74, 1
        %p880 = scmp.lt.s32.totalorder %s79, 1
        %s881 = scalar_select %p880, %s79, 1
        %s882 = smul.addr %s881, 2
        %s883 = smul.addr %s882, 4
        %s884 = scalar_lea.vmem %s1, %s883
        %p885 = pneg %p100
        %p886 = pneg %p97
        %p887 = pneg %p121
        %p888 = pneg %p118
        %p889 = pneg %p142
        %p890 = pneg %p139
        %p891 = pneg %p163
        %p892 = pneg %p160
        %p893 = pneg %p184
        %p894 = pneg %p181
        %p895 = pneg %p205
        %p896 = pneg %p202
        %p897 = pneg %p226
        %p898 = pneg %p223
        %p899 = pneg %p247
        %p900 = pneg %p244
        %p901 = pneg %p268
        %p902 = pneg %p265
        %p903 = pneg %p289
        %p904 = pneg %p286
        %p905 = pneg %p310
        %p906 = pneg %p307
        %p907 = pneg %p331
        %p908 = pneg %p328
        %p909 = pneg %p352
        %p910 = pneg %p349
        %p911 = pneg %p373
        %p912 = pneg %p370
        %p913 = pneg %p394
        %p914 = pneg %p391
        %p915 = pneg %p415
        %p916 = pneg %p412
        %p917 = pneg %p436
        %p918 = pneg %p433
        %p919 = pneg %p457
        %p920 = pneg %p454
        %p921 = pneg %p478
        %p922 = pneg %p475
        %p923 = pneg %p499
        %p924 = pneg %p496
        %p925 = pneg %p520
        %p926 = pneg %p517
        %p927 = pneg %p541
        %p928 = pneg %p538
        %p929 = pneg %p562
        %p930 = pneg %p559
        %p931 = pneg %p583
        %p932 = pneg %p580
        %p933 = pneg %p604
        %p934 = pneg %p601
        %p935 = pneg %p625
        %p936 = pneg %p622
        %p937 = pneg %p646
        %p938 = pneg %p643
        %p939 = pneg %p667
        %p940 = pneg %p664
        %p941 = pneg %p688
        %p942 = pneg %p685
        %p943 = pneg %p709
        %p944 = pneg %p706
        %p945 = pneg %p730
        %p946 = pneg %p727
        %p947 = pneg %p756
        %p948 = pneg %p753
        %s949 = sand.u32 %s743, 1
        %s950 = scalar_lea.sflag [#allocation4], %s949
        %s951 = sand.u32 %s743, 1
        %s952 = scalar_lea.vmem [#allocation3], %s951
        %p953 = scmp.lt.s32.totalorder %s79, 1
        %s954 = scalar_select %p953, %s79, 1
        %s955 = smul.addr %s954, 2
        %s956 = smul.addr %s955, 4
        %s957 = scalar_lea.vmem %s1, %s956
        %v959 = vld [vmem:[%s957] sm:$0xff]
        %v960 = vld [vmem:[%s3] sm:$0xf]
        %v961 = vld [vmem:[%s3 + $0x4] sm:$0xf]
        %v962 = vld [vmem:[%s3 + $0x8] sm:$0xf]
        %v963 = vld [vmem:[%s3 + $0xc] sm:$0xf]
        %v964 = vld [vmem:[%s3 + $0x10] sm:$0xf]
        %v965 = vld [vmem:[%s3 + $0x14] sm:$0xf]
        %v966 = vld [vmem:[%s3 + $0x18] sm:$0xf]
        %v967 = vld [vmem:[%s3 + $0x1c] sm:$0xf]
        %v968 = vld [vmem:[%s3 + $0x20] sm:$0xf]
        %v969 = vld [vmem:[%s3 + $0x24] sm:$0xf]
        %v970 = vld [vmem:[%s3 + $0x28] sm:$0xf]
        %v971 = vld [vmem:[%s3 + $0x2c] sm:$0xf]
        %v972 = vld [vmem:[%s3 + $0x30] sm:$0xf]
        %v973 = vld [vmem:[%s3 + $0x34] sm:$0xf]
        %v974 = vld [vmem:[%s3 + $0x38] sm:$0xf]
        %v975 = vld [vmem:[%s3 + $0x3c] sm:$0xf]
        %v976 = vld [vmem:[%s3 + $0x40] sm:$0xf]
        %v977 = vld [vmem:[%s3 + $0x44] sm:$0xf]
        %v978 = vld [vmem:[%s3 + $0x48] sm:$0xf]
        %v979 = vld [vmem:[%s3 + $0x4c] sm:$0xf]
        %v980 = vld [vmem:[%s3 + $0x50] sm:$0xf]
        %v981 = vld [vmem:[%s3 + $0x54] sm:$0xf]
        %v982 = vld [vmem:[%s3 + $0x58] sm:$0xf]
        %v983 = vld [vmem:[%s3 + $0x5c] sm:$0xf]
        %v985 = vcombine.high %v959, %v959
        %v987 = vpack.c.bf16 %v959, %v959
        %v988 = vpack.c.bf16 %v985, %v985
        %v989 = vld [vmem:[%s5] sm:$0x1]
        %v991 = vlaneseq
        %v992 = vshrl.u32 %v991, 7
        %v993 = vsub.s32 0, %v992
        %v994 = vrot.slane %v989, %v993
        %v1020 = vunpack.c.l.b16 %v960
        %v1021 = vunpack.c.l.b16 %v961
        %v1022 = vunpack.c.l.b16 %v962
        %v1023 = vunpack.c.l.b16 %v963
        %v1024 = vunpack.c.l.b16 %v964
        %v1025 = vunpack.c.l.b16 %v965
        %v1026 = vunpack.c.l.b16 %v966
        %v1027 = vunpack.c.l.b16 %v967
        %v1028 = vunpack.c.l.b16 %v968
        %v1029 = vunpack.c.l.b16 %v969
        %v1030 = vunpack.c.l.b16 %v970
        %v1031 = vunpack.c.l.b16 %v971
        %v1032 = vunpack.c.l.b16 %v972
        %v1033 = vunpack.c.l.b16 %v973
        %v1034 = vunpack.c.l.b16 %v974
        %v1035 = vunpack.c.l.b16 %v975
        %v1036 = vunpack.c.l.b16 %v976
        %v1037 = vunpack.c.l.b16 %v977
        %v1038 = vunpack.c.l.b16 %v978
        %v1039 = vunpack.c.l.b16 %v979
        %v1040 = vunpack.c.l.b16 %v980
        %v1041 = vunpack.c.l.b16 %v981
        %v1042 = vunpack.c.l.b16 %v982
        %v1043 = vunpack.c.l.b16 %v983
        %v1044 = vpack.c.b16 %v1021, %v1020
        %v1045 = vpack.c.b16 %v1023, %v1022
        %v1046 = vpack.c.b16 %v1025, %v1024
        %v1047 = vpack.c.b16 %v1027, %v1026
        %v1048 = vpack.c.b16 %v1029, %v1028
        %v1049 = vpack.c.b16 %v1031, %v1030
        %v1050 = vpack.c.b16 %v1033, %v1032
        %v1051 = vpack.c.b16 %v1035, %v1034
        %v1052 = vpack.c.b16 %v1037, %v1036
        %v1053 = vpack.c.b16 %v1039, %v1038
        %v1054 = vpack.c.b16 %v1041, %v1040
        %v1055 = vpack.c.b16 %v1043, %v1042
        %vm1068 = vcmask 523264
        %v1070 = vsel %vm1068, %v988, 0
        %1072 = vmatprep.subr.bf16.mxu0 0
        %1073 = vmatpush1.bf16.msra.mxu0 %v1044
        %1074 = vmatprep.subr.bf16.mxu0 0
        %1075 = vmatpush1.bf16.msra.mxu0 %v1045
        %1076 = vmatprep.subr.bf16.mxu0 0
        %1077 = vmatpush1.bf16.msra.mxu0 %v1046
        %1078 = vmatprep.subr.bf16.mxu0 0
        %1079 = vmatpush1.bf16.msra.mxu0 %v1047
        %1080 = vmatprep.subr.bf16.mxu0 0
        %1081 = vmatpush1.bf16.msra.mxu0 %v1048
        %1082 = vmatprep.subr.bf16.mxu0 0
        %1083 = vmatpush1.bf16.msra.mxu0 %v1049
        %1084 = vmatprep.subr.bf16.mxu0 0
        %1085 = vmatpush1.bf16.msra.mxu0 %v1050
        %1086 = vmatprep.subr.bf16.mxu0 0
        %1087 = vmatpush1.bf16.msra.mxu0 %v1051
        %1088 = vmatprep.subr.bf16.mxu0 0
        %1089 = vmatpush1.bf16.msra.mxu0 %v1052
        %1090 = vmatprep.subr.bf16.mxu0 0
        %1091 = vmatpush1.bf16.msra.mxu0 %v1053
        %1092 = vmatprep.subr.bf16.mxu0 0
        %1093 = vmatpush1.bf16.msra.mxu0 %v1054
        %1094 = vmatprep.subr.bf16.mxu0 0
        %1095 = vmatpush1.bf16.msra.mxu0 %v1055
        %1096 = vmatprep.subr.bf16.mxu0 0
        %1097 = vmatpush1.bf16.msra.mxu0 0
        %1098 = vmatprep.subr.bf16.mxu0 0
        %1099 = vmatpush1.bf16.msra.mxu0 0
        %1100 = vmatprep.subr.bf16.mxu0 0
        %1101 = vmatpush1.bf16.msra.mxu0 0
        %1102 = vmatprep.subr.bf16.mxu0 0
        %1103 = vmatpush1.bf16.msra.mxu0 0
        %1104 = vmatprep.mubr.bf16.mxu0 %v1070
        %1105 = vmatmul.mubr.bf16.gmra.mrb[0].mxu0 %v987
        %v1106 = vpop.f32.mrb[0].mxu0
        %v1107 = vadd.f32 %v994, %v1106
        %v1108 = vpop.f32.mrb[0].mxu0
        %v1109 = vpop.f32.mrb[0].mxu0
        %v1110 = vpop.f32.mrb[0].mxu0
        %1111 = vdwg.mxu0
        %v1112 = vld [vmem:[%s7] sm:$0x1]
        %v1114 = vrot.slane %v1107, 7
        %vm1116 = vcmask 1040384
        %v1117 = vsel %vm1116, %v1112, %v1114
        %v1118 = vld [vmem:[%s9] sm:$0x1f]
        %v1119 = vadd.f32 %v1117, %v1118
        %v1120 = vld [vmem:[%s11] sm:$0x1]
        %v1121 = vld [vmem:[%s13] sm:$0x1]
        %vm1122 = vcmask 520192
        %v1123 = vsel %vm1122, %v1119, 0.0
        %1124 = vadd.xlane.f32.xlu0 %v1123
        %v1125 = vpop.xlane.xlu0 %1124
        %v1126 = vrcp.pop 64.0
        %v1127 = vmul.f32 %v1125, %v1126
        %v1128 = vsub.f32 %v1119, %v1127
        %v1129 = vmul.f32 %v1128, %v1128
        %v1130 = vsel %vm1122, %v1129, 0.0
        %1131 = vadd.xlane.f32.xlu0 %v1130
        %v1132 = vpop.xlane.xlu0 %1131
        %v1133 = vmul.f32 %v1132, %v1126
        %v1134 = vadd.f32 %v1133, 1e-06
        %v1135 = vrsqrt.pop %v1134
        %v1136 = vmul.f32 %v1128, %v1135
        %v1138 = vlaneseq
        %v1139 = vshrl.u32 %v1138, 7
        %v1140 = vsub.s32 0, %v1139
        %v1141 = vrot.slane %v1120, %v1140
        %v1143 = vmul.f32 %v1136, %v1141
        %v1145 = vlaneseq
        %v1146 = vshrl.u32 %v1145, 7
        %v1147 = vsub.s32 0, %v1146
        %v1148 = vrot.slane %v1121, %v1147
        %v1150 = vadd.f32 %v1143, %v1148
        %v1151 = vld [vmem:[%s15] sm:$0xff]
        %v1152 = vld [vmem:[%s15 + $0x8] sm:$0xff]
        %v1153 = vld [vmem:[%s15 + $0x10] sm:$0xff]
        %v1154 = vld [vmem:[%s15 + $0x18] sm:$0xff]
        %v1155 = vld [vmem:[%s15 + $0x20] sm:$0xff]
        %v1156 = vld [vmem:[%s15 + $0x28] sm:$0xff]
        %v1157 = vld [vmem:[%s15 + $0x30] sm:$0xff]
        %v1158 = vld [vmem:[%s15 + $0x38] sm:$0xff]
        %v1159 = vpack.c.bf16 %v1150, %v1150
        %v1160 = vld [vmem:[%s17] sm:$0x3]
        %v1162 = vlaneseq
        %v1163 = vshrl.u32 %v1162, 7
        %v1164 = vsub.s32 0, %v1163
        %v1165 = vrot.slane %v1160, %v1164
        %v1166 = vlaneseq
        %v1167 = vshrl.u32 %v1166, 7
        %v1168 = vsub.s32 1, %v1167
        %v1169 = vrot.slane %v1160, %v1168
        %v1180 = vunpack.c.l.b16 %v1151
        %v1181 = vunpack.c.h.b16 %v1151
        %v1182 = vunpack.c.l.b16 %v1152
        %v1183 = vunpack.c.h.b16 %v1152
        %v1184 = vunpack.c.l.b16 %v1153
        %v1185 = vunpack.c.h.b16 %v1153
        %v1186 = vunpack.c.l.b16 %v1154
        %v1187 = vunpack.c.h.b16 %v1154
        %v1188 = vunpack.c.l.b16 %v1155
        %v1189 = vunpack.c.h.b16 %v1155
        %v1190 = vunpack.c.l.b16 %v1156
        %v1191 = vunpack.c.h.b16 %v1156
        %v1192 = vunpack.c.l.b16 %v1157
        %v1193 = vunpack.c.h.b16 %v1157
        %v1194 = vunpack.c.l.b16 %v1158
        %v1195 = vunpack.c.h.b16 %v1158
        %v1196 = vpack.c.b16 %v1182, %v1180
        %v1197 = vpack.c.b16 %v1183, %v1181
        %v1198 = vpack.c.b16 %v1186, %v1184
        %v1199 = vpack.c.b16 %v1187, %v1185
        %v1200 = vpack.c.b16 %v1190, %v1188
        %v1201 = vpack.c.b16 %v1191, %v1189
        %v1202 = vpack.c.b16 %v1194, %v1192
        %v1203 = vpack.c.b16 %v1195, %v1193
        %v1213 = vsel %vm1068, %v1159, 0
        %1215 = vmatprep.subr.bf16.mxu0 %v1197
        %1216 = vmatpush1.bf16.msra.mxu0 %v1196
        %1217 = vmatprep.subr.bf16.mxu0 %v1199
        %1218 = vmatpush1.bf16.msra.mxu0 %v1198
        %1219 = vmatprep.subr.bf16.mxu0 %v1201
        %1220 = vmatpush1.bf16.msra.mxu0 %v1200
        %1221 = vmatprep.subr.bf16.mxu0 %v1203
        %1222 = vmatpush1.bf16.msra.mxu0 %v1202
        %1223 = vmatprep.subr.bf16.mxu0 0
        %1224 = vmatpush1.bf16.msra.mxu0 0
        %1225 = vmatprep.subr.bf16.mxu0 0
        %1226 = vmatpush1.bf16.msra.mxu0 0
        %1227 = vmatprep.subr.bf16.mxu0 0
        %1228 = vmatpush1.bf16.msra.mxu0 0
        %1229 = vmatprep.subr.bf16.mxu0 0
        %1230 = vmatpush1.bf16.msra.mxu0 0
        %1231 = vmatprep.subr.bf16.mxu0 0
        %1232 = vmatpush1.bf16.msra.mxu0 0
        %1233 = vmatprep.subr.bf16.mxu0 0
        %1234 = vmatpush1.bf16.msra.mxu0 0
        %1235 = vmatprep.subr.bf16.mxu0 0
        %1236 = vmatpush1.bf16.msra.mxu0 0
        %1237 = vmatprep.subr.bf16.mxu0 0
        %1238 = vmatpush1.bf16.msra.mxu0 0
        %1239 = vmatprep.subr.bf16.mxu0 0
        %1240 = vmatpush1.bf16.msra.mxu0 0
        %1241 = vmatprep.subr.bf16.mxu0 0
        %1242 = vmatpush1.bf16.msra.mxu0 0
        %1243 = vmatprep.subr.bf16.mxu0 0
        %1244 = vmatpush1.bf16.msra.mxu0 0
        %1245 = vmatprep.subr.bf16.mxu0 0
        %1246 = vmatpush1.bf16.msra.mxu0 0
        %1247 = vmatprep.mubr.bf16.mxu0 0
        %1248 = vmatmul.mubr.bf16.gmra.mrb[0].mxu0 %v1213
        %v1249 = vpop.f32.mrb[0].mxu0
        %v1250 = vadd.f32 %v1165, %v1249
        %v1251 = vpop.f32.mrb[0].mxu0
        %v1252 = vadd.f32 %v1169, %v1251
        %v1253 = vpop.f32.mrb[0].mxu0
        %v1254 = vpop.f32.mrb[0].mxu0
        %1255 = vdwg.mxu0
        %v1256 = vpack.c.bf16 %v1250, %v1250
        %1258 = vrot.lane.b32.xlu0 %v1256, 64
        %v1259 = vpop.permute.xlu0 %1258
        %vm1260 = vcmask 130048
        %v1262 = vsel %vm1260, %v1256, 0
        %v1265 = vsel %vm1260, %v1259, 0
        %1267 = vmatprep.subr.bf16.mxu0 0
        %1268 = vmatpush1.bf16.xpose.msra.mxu0 %v1265
        %1269 = vmatprep.subr.bf16.mxu0 0
        %1270 = vmatpush1.bf16.xpose.msra.mxu0 0
        %1271 = vmatprep.subr.bf16.mxu0 0
        %1272 = vmatpush1.bf16.xpose.msra.mxu0 0
        %1273 = vmatprep.subr.bf16.mxu0 0
        %1274 = vmatpush1.bf16.xpose.msra.mxu0 0
        %1275 = vmatprep.subr.bf16.mxu0 0
        %1276 = vmatpush1.bf16.xpose.msra.mxu0 0
        %1277 = vmatprep.subr.bf16.mxu0 0
        %1278 = vmatpush1.bf16.xpose.msra.mxu0 0
        %1279 = vmatprep.subr.bf16.mxu0 0
        %1280 = vmatpush1.bf16.xpose.msra.mxu0 0
        %1281 = vmatprep.subr.bf16.mxu0 0
        %1282 = vmatpush1.bf16.xpose.msra.mxu0 0
        %1283 = vmatprep.subr.bf16.mxu0 0
        %1284 = vmatpush1.bf16.xpose.msra.mxu0 0
        %1285 = vmatprep.subr.bf16.mxu0 0
        %1286 = vmatpush1.bf16.xpose.msra.mxu0 0
        %1287 = vmatprep.subr.bf16.mxu0 0
        %1288 = vmatpush1.bf16.xpose.msra.mxu0 0
        %1289 = vmatprep.subr.bf16.mxu0 0
        %1290 = vmatpush1.bf16.xpose.msra.mxu0 0
        %1291 = vmatprep.subr.bf16.mxu0 0
        %1292 = vmatpush1.bf16.xpose.msra.mxu0 0
        %1293 = vmatprep.subr.bf16.mxu0 0
        %1294 = vmatpush1.bf16.xpose.msra.mxu0 0
        %1295 = vmatprep.subr.bf16.mxu0 0
        %1296 = vmatpush1.bf16.xpose.msra.mxu0 0
        %1297 = vmatprep.subr.bf16.mxu0 0
        %1298 = vmatpush1.bf16.xpose.msra.mxu0 0
        %1299 = vmatprep.mubr.bf16.mxu0 0
        %1300 = vmatmul.mubr.bf16.gmra.mrb[0].mxu0 %v1262
        %v1301 = vpop.f32.mrb[0].mxu0
        %v1302 = vadd.f32 0.0, %v1301
        %v1303 = vpop.f32.mrb[0].mxu0
        %v1304 = vpop.f32.mrb[0].mxu0
        %v1305 = vpop.f32.mrb[0].mxu0
        %1306 = vdwg.mxu0
        %v1307 = vmul.f32 %v1302, 0.25
        %vm1308 = vcmask 36864
        %v1309 = vsel %vm1308, %v1307, -inf
        %1310 = vmax.xlane.f32.xlu0 %v1309
        %v1311 = vpop.xlane.xlu0 %1310
        %v1312 = vsub.f32 %v1307, %v1311
        %v1313 = vmul.f32 %v1312, 1.442695
        %v1314 = vpow.pop %v1313
        %v1315 = vsel %vm1308, %v1314, 0.0
        %1316 = vadd.xlane.f32.xlu0 %v1315
        %v1317 = vpop.xlane.xlu0 %1316
        %v1318 = vrcp.pop %v1317
        %v1319 = vmul.f32 %v1314, %v1318
        %v1320 = vpack.c.bf16 %v1319, %v1319
        %v1321 = vpack.c.bf16 %v1252, %v1252
        %vm1322 = vcmask 39936
        %v1324 = vsel %vm1322, %v1320, 0
        %vm1326 = vcmask 1041408
        %vm1327 = vcmask 1042432
        %v1328 = vsel %vm1326, 4294967295, 65535
        %v1329 = vsel %vm1327, %v1328, 0
        %v1331 = vand.u32 %v1321, %v1329
        %1333 = vmatprep.subr.bf16.mxu0 0
        %1334 = vmatpush1.bf16.msra.mxu0 %v1331
        %1335 = vmatprep.subr.bf16.mxu0 0
        %1336 = vmatpush1.bf16.msra.mxu0 0
        %1337 = vmatprep.subr.bf16.mxu0 0
        %1338 = vmatpush1.bf16.msra.mxu0 0
        %1339 = vmatprep.subr.bf16.mxu0 0
        %1340 = vmatpush1.bf16.msra.mxu0 0
        %1341 = vmatprep.subr.bf16.mxu0 0
        %1342 = vmatpush1.bf16.msra.mxu0 0
        %1343 = vmatprep.subr.bf16.mxu0 0
        %1344 = vmatpush1.bf16.msra.mxu0 0
        %1345 = vmatprep.subr.bf16.mxu0 0
        %1346 = vmatpush1.bf16.msra.mxu0 0
        %1347 = vmatprep.subr.bf16.mxu0 0
        %1348 = vmatpush1.bf16.msra.mxu0 0
        %1349 = vmatprep.subr.bf16.mxu0 0
        %1350 = vmatpush1.bf16.msra.mxu0 0
        %1351 = vmatprep.subr.bf16.mxu0 0
        %1352 = vmatpush1.bf16.msra.mxu0 0
        %1353 = vmatprep.subr.bf16.mxu0 0
        %1354 = vmatpush1.bf16.msra.mxu0 0
        %1355 = vmatprep.subr.bf16.mxu0 0
        %1356 = vmatpush1.bf16.msra.mxu0 0
        %1357 = vmatprep.subr.bf16.mxu0 0
        %1358 = vmatpush1.bf16.msra.mxu0 0
        %1359 = vmatprep.subr.bf16.mxu0 0
        %1360 = vmatpush1.bf16.msra.mxu0 0
        %1361 = vmatprep.subr.bf16.mxu0 0
        %1362 = vmatpush1.bf16.msra.mxu0 0
        %1363 = vmatprep.subr.bf16.mxu0 0
        %1364 = vmatpush1.bf16.msra.mxu0 0
        %1365 = vmatprep.mubr.bf16.mxu0 0
        %1366 = vmatmul.mubr.bf16.gmra.mrb[0].mxu0 %v1324
        %v1367 = vpop.f32.mrb[0].mxu0
        %v1368 = vadd.f32 0.0, %v1367
        %v1369 = vpop.f32.mrb[0].mxu0
        %v1370 = vpop.f32.mrb[0].mxu0
        %v1371 = vpop.f32.mrb[0].mxu0
        %1372 = vdwg.mxu0
        %1373 = vrot.lane.b32.xlu0 %v1256, 112
        %v1374 = vpop.permute.xlu0 %1373
        %1375 = vrot.lane.b32.xlu0 %v1256, 48
        %v1376 = vpop.permute.xlu0 %1375
        %v1378 = vsel %vm1260, %v1374, 0
        %v1381 = vsel %vm1260, %v1376, 0
        %1383 = vmatprep.subr.bf16.mxu0 0
        %1384 = vmatpush1.bf16.xpose.msra.mxu0 %v1381
        %1385 = vmatprep.subr.bf16.mxu0 0
        %1386 = vmatpush1.bf16.xpose.msra.mxu0 0
        %1387 = vmatprep.subr.bf16.mxu0 0
        %1388 = vmatpush1.bf16.xpose.msra.mxu0 0
        %1389 = vmatprep.subr.bf16.mxu0 0
        %1390 = vmatpush1.bf16.xpose.msra.mxu0 0
        %1391 = vmatprep.subr.bf16.mxu0 0
        %1392 = vmatpush1.bf16.xpose.msra.mxu0 0
        %1393 = vmatprep.subr.bf16.mxu0 0
        %1394 = vmatpush1.bf16.xpose.msra.mxu0 0
        %1395 = vmatprep.subr.bf16.mxu0 0
        %1396 = vmatpush1.bf16.xpose.msra.mxu0 0
        %1397 = vmatprep.subr.bf16.mxu0 0
        %1398 = vmatpush1.bf16.xpose.msra.mxu0 0
        %1399 = vmatprep.subr.bf16.mxu0 0
        %1400 = vmatpush1.bf16.xpose.msra.mxu0 0
        %1401 = vmatprep.subr.bf16.mxu0 0
        %1402 = vmatpush1.bf16.xpose.msra.mxu0 0
        %1403 = vmatprep.subr.bf16.mxu0 0
        %1404 = vmatpush1.bf16.xpose.msra.mxu0 0
        %1405 = vmatprep.subr.bf16.mxu0 0
        %1406 = vmatpush1.bf16.xpose.msra.mxu0 0
        %1407 = vmatprep.subr.bf16.mxu0 0
        %1408 = vmatpush1.bf16.xpose.msra.mxu0 0
        %1409 = vmatprep.subr.bf16.mxu0 0
        %1410 = vmatpush1.bf16.xpose.msra.mxu0 0
        %1411 = vmatprep.subr.bf16.mxu0 0
        %1412 = vmatpush1.bf16.xpose.msra.mxu0 0
        %1413 = vmatprep.subr.bf16.mxu0 0
        %1414 = vmatpush1.bf16.xpose.msra.mxu0 0
        %1415 = vmatprep.mubr.bf16.mxu0 0
        %1416 = vmatmul.mubr.bf16.gmra.mrb[0].mxu0 %v1378
        %v1417 = vpop.f32.mrb[0].mxu0
        %v1418 = vadd.f32 0.0, %v1417
        %v1419 = vpop.f32.mrb[0].mxu0
        %v1420 = vpop.f32.mrb[0].mxu0
        %v1421 = vpop.f32.mrb[0].mxu0
        %1422 = vdwg.mxu0
        %v1423 = vmul.f32 %v1418, 0.25
        %v1424 = vsel %vm1308, %v1423, -inf
        %1425 = vmax.xlane.f32.xlu0 %v1424
        %v1426 = vpop.xlane.xlu0 %1425
        %v1427 = vsub.f32 %v1423, %v1426
        %v1428 = vmul.f32 %v1427, 1.442695
        %v1429 = vpow.pop %v1428
        %v1430 = vsel %vm1308, %v1429, 0.0
        %1431 = vadd.xlane.f32.xlu0 %v1430
        %v1432 = vpop.xlane.xlu0 %1431
        %v1433 = vrcp.pop %v1432
        %v1434 = vmul.f32 %v1429, %v1433
        %v1435 = vpack.c.bf16 %v1434, %v1434
        %1437 = vrot.lane.b32.xlu0 %v1321, 112
        %v1438 = vpop.permute.xlu0 %1437
        %v1440 = vsel %vm1322, %v1435, 0
        %v1443 = vand.u32 %v1438, %v1329
        %1445 = vmatprep.subr.bf16.mxu0 0
        %1446 = vmatpush1.bf16.msra.mxu0 %v1443
        %1447 = vmatprep.subr.bf16.mxu0 0
        %1448 = vmatpush1.bf16.msra.mxu0 0
        %1449 = vmatprep.subr.bf16.mxu0 0
        %1450 = vmatpush1.bf16.msra.mxu0 0
        %1451 = vmatprep.subr.bf16.mxu0 0
        %1452 = vmatpush1.bf16.msra.mxu0 0
        %1453 = vmatprep.subr.bf16.mxu0 0
        %1454 = vmatpush1.bf16.msra.mxu0 0
        %1455 = vmatprep.subr.bf16.mxu0 0
        %1456 = vmatpush1.bf16.msra.mxu0 0
        %1457 = vmatprep.subr.bf16.mxu0 0
        %1458 = vmatpush1.bf16.msra.mxu0 0
        %1459 = vmatprep.subr.bf16.mxu0 0
        %1460 = vmatpush1.bf16.msra.mxu0 0
        %1461 = vmatprep.subr.bf16.mxu0 0
        %1462 = vmatpush1.bf16.msra.mxu0 0
        %1463 = vmatprep.subr.bf16.mxu0 0
        %1464 = vmatpush1.bf16.msra.mxu0 0
        %1465 = vmatprep.subr.bf16.mxu0 0
        %1466 = vmatpush1.bf16.msra.mxu0 0
        %1467 = vmatprep.subr.bf16.mxu0 0
        %1468 = vmatpush1.bf16.msra.mxu0 0
        %1469 = vmatprep.subr.bf16.mxu0 0
        %1470 = vmatpush1.bf16.msra.mxu0 0
        %1471 = vmatprep.subr.bf16.mxu0 0
        %1472 = vmatpush1.bf16.msra.mxu0 0
        %1473 = vmatprep.subr.bf16.mxu0 0
        %1474 = vmatpush1.bf16.msra.mxu0 0
        %1475 = vmatprep.subr.bf16.mxu0 0
        %1476 = vmatpush1.bf16.msra.mxu0 0
        %1477 = vmatprep.mubr.bf16.mxu0 0
        %1478 = vmatmul.mubr.bf16.gmra.mrb[0].mxu0 %v1440
        %v1479 = vpop.f32.mrb[0].mxu0
        %v1480 = vadd.f32 0.0, %v1479
        %v1481 = vpop.f32.mrb[0].mxu0
        %v1482 = vpop.f32.mrb[0].mxu0
        %v1483 = vpop.f32.mrb[0].mxu0
        %1484 = vdwg.mxu0
        %1485 = vrot.lane.b32.xlu0 %v1256, 96
        %v1486 = vpop.permute.xlu0 %1485
        %1487 = vrot.lane.b32.xlu0 %v1256, 32
        %v1488 = vpop.permute.xlu0 %1487
        %v1490 = vsel %vm1260, %v1486, 0
        %v1493 = vsel %vm1260, %v1488, 0
        %1495 = vmatprep.subr.bf16.mxu0 0
        %1496 = vmatpush1.bf16.xpose.msra.mxu0 %v1493
        %1497 = vmatprep.subr.bf16.mxu0 0
        %1498 = vmatpush1.bf16.xpose.msra.mxu0 0
        %1499 = vmatprep.subr.bf16.mxu0 0
        %1500 = vmatpush1.bf16.xpose.msra.mxu0 0
        %1501 = vmatprep.subr.bf16.mxu0 0
        %1502 = vmatpush1.bf16.xpose.msra.mxu0 0
        %1503 = vmatprep.subr.bf16.mxu0 0
        %1504 = vmatpush1.bf16.xpose.msra.mxu0 0
        %1505 = vmatprep.subr.bf16.mxu0 0
        %1506 = vmatpush1.bf16.xpose.msra.mxu0 0
        %1507 = vmatprep.subr.bf16.mxu0 0
        %1508 = vmatpush1.bf16.xpose.msra.mxu0 0
        %1509 = vmatprep.subr.bf16.mxu0 0
        %1510 = vmatpush1.bf16.xpose.msra.mxu0 0
        %1511 = vmatprep.subr.bf16.mxu0 0
        %1512 = vmatpush1.bf16.xpose.msra.mxu0 0
        %1513 = vmatprep.subr.bf16.mxu0 0
        %1514 = vmatpush1.bf16.xpose.msra.mxu0 0
        %1515 = vmatprep.subr.bf16.mxu0 0
        %1516 = vmatpush1.bf16.xpose.msra.mxu0 0
        %1517 = vmatprep.subr.bf16.mxu0 0
        %1518 = vmatpush1.bf16.xpose.msra.mxu0 0
        %1519 = vmatprep.subr.bf16.mxu0 0
        %1520 = vmatpush1.bf16.xpose.msra.mxu0 0
        %1521 = vmatprep.subr.bf16.mxu0 0
        %1522 = vmatpush1.bf16.xpose.msra.mxu0 0
        %1523 = vmatprep.subr.bf16.mxu0 0
        %1524 = vmatpush1.bf16.xpose.msra.mxu0 0
        %1525 = vmatprep.subr.bf16.mxu0 0
        %1526 = vmatpush1.bf16.xpose.msra.mxu0 0
        %1527 = vmatprep.mubr.bf16.mxu0 0
        %1528 = vmatmul.mubr.bf16.gmra.mrb[0].mxu0 %v1490
        %v1529 = vpop.f32.mrb[0].mxu0
        %v1530 = vadd.f32 0.0, %v1529
        %v1531 = vpop.f32.mrb[0].mxu0
        %v1532 = vpop.f32.mrb[0].mxu0
        %v1533 = vpop.f32.mrb[0].mxu0
        %1534 = vdwg.mxu0
        %v1535 = vmul.f32 %v1530, 0.25
        %v1536 = vsel %vm1308, %v1535, -inf
        %1537 = vmax.xlane.f32.xlu0 %v1536
        %v1538 = vpop.xlane.xlu0 %1537
        %v1539 = vsub.f32 %v1535, %v1538
        %v1540 = vmul.f32 %v1539, 1.442695
        %v1541 = vpow.pop %v1540
        %v1542 = vsel %vm1308, %v1541, 0.0
        %1543 = vadd.xlane.f32.xlu0 %v1542
        %v1544 = vpop.xlane.xlu0 %1543
        %v1545 = vrcp.pop %v1544
        %v1546 = vmul.f32 %v1541, %v1545
        %v1547 = vpack.c.bf16 %v1546, %v1546
        %1548 = vrot.lane.b32.xlu0 %v1321, 96
        %v1549 = vpop.permute.xlu0 %1548
        %v1551 = vsel %vm1322, %v1547, 0
        %v1554 = vand.u32 %v1549, %v1329
        %1556 = vmatprep.subr.bf16.mxu0 0
        %1557 = vmatpush1.bf16.msra.mxu0 %v1554
        %1558 = vmatprep.subr.bf16.mxu0 0
        %1559 = vmatpush1.bf16.msra.mxu0 0
        %1560 = vmatprep.subr.bf16.mxu0 0
        %1561 = vmatpush1.bf16.msra.mxu0 0
        %1562 = vmatprep.subr.bf16.mxu0 0
        %1563 = vmatpush1.bf16.msra.mxu0 0
        %1564 = vmatprep.subr.bf16.mxu0 0
        %1565 = vmatpush1.bf16.msra.mxu0 0
        %1566 = vmatprep.subr.bf16.mxu0 0
        %1567 = vmatpush1.bf16.msra.mxu0 0
        %1568 = vmatprep.subr.bf16.mxu0 0
        %1569 = vmatpush1.bf16.msra.mxu0 0
        %1570 = vmatprep.subr.bf16.mxu0 0
        %1571 = vmatpush1.bf16.msra.mxu0 0
        %1572 = vmatprep.subr.bf16.mxu0 0
        %1573 = vmatpush1.bf16.msra.mxu0 0
        %1574 = vmatprep.subr.bf16.mxu0 0
        %1575 = vmatpush1.bf16.msra.mxu0 0
        %1576 = vmatprep.subr.bf16.mxu0 0
        %1577 = vmatpush1.bf16.msra.mxu0 0
        %1578 = vmatprep.subr.bf16.mxu0 0
        %1579 = vmatpush1.bf16.msra.mxu0 0
        %1580 = vmatprep.subr.bf16.mxu0 0
        %1581 = vmatpush1.bf16.msra.mxu0 0
        %1582 = vmatprep.subr.bf16.mxu0 0
        %1583 = vmatpush1.bf16.msra.mxu0 0
        %1584 = vmatprep.subr.bf16.mxu0 0
        %1585 = vmatpush1.bf16.msra.mxu0 0
        %1586 = vmatprep.subr.bf16.mxu0 0
        %1587 = vmatpush1.bf16.msra.mxu0 0
        %1588 = vmatprep.mubr.bf16.mxu0 0
        %1589 = vmatmul.mubr.bf16.gmra.mrb[0].mxu0 %v1551
        %v1590 = vpop.f32.mrb[0].mxu0
        %v1591 = vadd.f32 0.0, %v1590
        %v1592 = vpop.f32.mrb[0].mxu0
        %v1593 = vpop.f32.mrb[0].mxu0
        %v1594 = vpop.f32.mrb[0].mxu0
        %1595 = vdwg.mxu0
        %1596 = vrot.lane.b32.xlu0 %v1256, 80
        %v1597 = vpop.permute.xlu0 %1596
        %1598 = vrot.lane.b32.xlu0 %v1256, 16
        %v1599 = vpop.permute.xlu0 %1598
        %v1601 = vsel %vm1260, %v1597, 0
        %v1604 = vsel %vm1260, %v1599, 0
        %1606 = vmatprep.subr.bf16.mxu0 0
        %1607 = vmatpush1.bf16.xpose.msra.mxu0 %v1604
        %1608 = vmatprep.subr.bf16.mxu0 0
        %1609 = vmatpush1.bf16.xpose.msra.mxu0 0
        %1610 = vmatprep.subr.bf16.mxu0 0
        %1611 = vmatpush1.bf16.xpose.msra.mxu0 0
        %1612 = vmatprep.subr.bf16.mxu0 0
        %1613 = vmatpush1.bf16.xpose.msra.mxu0 0
        %1614 = vmatprep.subr.bf16.mxu0 0
        %1615 = vmatpush1.bf16.xpose.msra.mxu0 0
        %1616 = vmatprep.subr.bf16.mxu0 0
        %1617 = vmatpush1.bf16.xpose.msra.mxu0 0
        %1618 = vmatprep.subr.bf16.mxu0 0
        %1619 = vmatpush1.bf16.xpose.msra.mxu0 0
        %1620 = vmatprep.subr.bf16.mxu0 0
        %1621 = vmatpush1.bf16.xpose.msra.mxu0 0
        %1622 = vmatprep.subr.bf16.mxu0 0
        %1623 = vmatpush1.bf16.xpose.msra.mxu0 0
        %1624 = vmatprep.subr.bf16.mxu0 0
        %1625 = vmatpush1.bf16.xpose.msra.mxu0 0
        %1626 = vmatprep.subr.bf16.mxu0 0
        %1627 = vmatpush1.bf16.xpose.msra.mxu0 0
        %1628 = vmatprep.subr.bf16.mxu0 0
        %1629 = vmatpush1.bf16.xpose.msra.mxu0 0
        %1630 = vmatprep.subr.bf16.mxu0 0
        %1631 = vmatpush1.bf16.xpose.msra.mxu0 0
        %1632 = vmatprep.subr.bf16.mxu0 0
        %1633 = vmatpush1.bf16.xpose.msra.mxu0 0
        %1634 = vmatprep.subr.bf16.mxu0 0
        %1635 = vmatpush1.bf16.xpose.msra.mxu0 0
        %1636 = vmatprep.subr.bf16.mxu0 0
        %1637 = vmatpush1.bf16.xpose.msra.mxu0 0
        %1638 = vmatprep.mubr.bf16.mxu0 0
        %1639 = vmatmul.mubr.bf16.gmra.mrb[0].mxu0 %v1601
        %v1640 = vpop.f32.mrb[0].mxu0
        %v1641 = vadd.f32 0.0, %v1640
        %v1642 = vpop.f32.mrb[0].mxu0
        %v1643 = vpop.f32.mrb[0].mxu0
        %v1644 = vpop.f32.mrb[0].mxu0
        %1645 = vdwg.mxu0
        %v1646 = vmul.f32 %v1641, 0.25
        %v1647 = vsel %vm1308, %v1646, -inf
        %1648 = vmax.xlane.f32.xlu0 %v1647
        %v1649 = vpop.xlane.xlu0 %1648
        %v1650 = vsub.f32 %v1646, %v1649
        %v1651 = vmul.f32 %v1650, 1.442695
        %v1652 = vpow.pop %v1651
        %v1653 = vsel %vm1308, %v1652, 0.0
        %1654 = vadd.xlane.f32.xlu0 %v1653
        %v1655 = vpop.xlane.xlu0 %1654
        %v1656 = vrcp.pop %v1655
        %v1657 = vmul.f32 %v1652, %v1656
        %v1658 = vpack.c.bf16 %v1657, %v1657
        %1659 = vrot.lane.b32.xlu0 %v1321, 80
        %v1660 = vpop.permute.xlu0 %1659
        %v1662 = vsel %vm1322, %v1658, 0
        %v1665 = vand.u32 %v1660, %v1329
        %1667 = vmatprep.subr.bf16.mxu0 0
        %1668 = vmatpush1.bf16.msra.mxu0 %v1665
        %1669 = vmatprep.subr.bf16.mxu0 0
        %1670 = vmatpush1.bf16.msra.mxu0 0
        %1671 = vmatprep.subr.bf16.mxu0 0
        %1672 = vmatpush1.bf16.msra.mxu0 0
        %1673 = vmatprep.subr.bf16.mxu0 0
        %1674 = vmatpush1.bf16.msra.mxu0 0
        %1675 = vmatprep.subr.bf16.mxu0 0
        %1676 = vmatpush1.bf16.msra.mxu0 0
        %1677 = vmatprep.subr.bf16.mxu0 0
        %1678 = vmatpush1.bf16.msra.mxu0 0
        %1679 = vmatprep.subr.bf16.mxu0 0
        %1680 = vmatpush1.bf16.msra.mxu0 0
        %1681 = vmatprep.subr.bf16.mxu0 0
        %1682 = vmatpush1.bf16.msra.mxu0 0
        %1683 = vmatprep.subr.bf16.mxu0 0
        %1684 = vmatpush1.bf16.msra.mxu0 0
        %1685 = vmatprep.subr.bf16.mxu0 0
        %1686 = vmatpush1.bf16.msra.mxu0 0
        %1687 = vmatprep.subr.bf16.mxu0 0
        %1688 = vmatpush1.bf16.msra.mxu0 0
        %1689 = vmatprep.subr.bf16.mxu0 0
        %1690 = vmatpush1.bf16.msra.mxu0 0
        %1691 = vmatprep.subr.bf16.mxu0 0
        %1692 = vmatpush1.bf16.msra.mxu0 0
        %1693 = vmatprep.subr.bf16.mxu0 0
        %1694 = vmatpush1.bf16.msra.mxu0 0
        %1695 = vmatprep.subr.bf16.mxu0 0
        %1696 = vmatpush1.bf16.msra.mxu0 0
        %1697 = vmatprep.subr.bf16.mxu0 0
        %1698 = vmatpush1.bf16.msra.mxu0 0
        %1699 = vmatprep.mubr.bf16.mxu0 0
        %1700 = vmatmul.mubr.bf16.gmra.mrb[0].mxu0 %v1662
        %v1701 = vpop.f32.mrb[0].mxu0
        %v1702 = vadd.f32 0.0, %v1701
        %v1703 = vpop.f32.mrb[0].mxu0
        %v1704 = vpop.f32.mrb[0].mxu0
        %v1705 = vpop.f32.mrb[0].mxu0
        %1706 = vdwg.mxu0
        %1708 = vrot.lane.b32.xlu0 %v1480, 16
        %v1709 = vpop.permute.xlu0 %1708
        %1712 = vrot.lane.b32.xlu0 %v1591, 32
        %v1713 = vpop.permute.xlu0 %1712
        %1716 = vrot.lane.b32.xlu0 %v1702, 48
        %v1717 = vpop.permute.xlu0 %1716
        %v1719 = vsel %vm1260, %v1368, %v1709
        %vm1720 = vcmask 261120
        %v1721 = vsel %vm1720, %v1719, %v1713
        %vm1722 = vcmask 392192
        %v1723 = vsel %vm1722, %v1721, %v1717
        %v1724 = vld [vmem:[%s19] sm:$0xf]
        %v1725 = vld [vmem:[%s19 + $0x4] sm:$0xf]
        %v1726 = vld [vmem:[%s19 + $0x8] sm:$0xf]
        %v1727 = vld [vmem:[%s19 + $0xc] sm:$0xf]
        %v1728 = vld [vmem:[%s19 + $0x10] sm:$0xf]
        %v1729 = vld [vmem:[%s19 + $0x14] sm:$0xf]
        %v1730 = vld [vmem:[%s19 + $0x18] sm:$0xf]
        %v1731 = vld [vmem:[%s19 + $0x1c] sm:$0xf]
        %v1732 = vpack.c.bf16 %v1723, %v1723
        %v1741 = vunpack.c.l.b16 %v1724
        %v1742 = vunpack.c.l.b16 %v1725
        %v1743 = vunpack.c.l.b16 %v1726
        %v1744 = vunpack.c.l.b16 %v1727
        %v1745 = vunpack.c.l.b16 %v1728
        %v1746 = vunpack.c.l.b16 %v1729
        %v1747 = vunpack.c.l.b16 %v1730
        %v1748 = vunpack.c.l.b16 %v1731
        %v1749 = vpack.c.b16 %v1742, %v1741
        %v1750 = vpack.c.b16 %v1744, %v1743
        %v1751 = vpack.c.b16 %v1746, %v1745
        %v1752 = vpack.c.b16 %v1748, %v1747
        %v1758 = vsel %vm1068, %v1732, 0
        %1760 = vmatprep.subr.bf16.mxu0 0
        %1761 = vmatpush1.bf16.msra.mxu0 %v1749
        %1762 = vmatprep.subr.bf16.mxu0 0
        %1763 = vmatpush1.bf16.msra.mxu0 %v1750
        %1764 = vmatprep.subr.bf16.mxu0 0
        %1765 = vmatpush1.bf16.msra.mxu0 %v1751
        %1766 = vmatprep.subr.bf16.mxu0 0
        %1767 = vmatpush1.bf16.msra.mxu0 %v1752
        %1768 = vmatprep.subr.bf16.mxu0 0
        %1769 = vmatpush1.bf16.msra.mxu0 0
        %1770 = vmatprep.subr.bf16.mxu0 0
        %1771 = vmatpush1.bf16.msra.mxu0 0
        %1772 = vmatprep.subr.bf16.mxu0 0
        %1773 = vmatpush1.bf16.msra.mxu0 0
        %1774 = vmatprep.subr.bf16.mxu0 0
        %1775 = vmatpush1.bf16.msra.mxu0 0
        %1776 = vmatprep.subr.bf16.mxu0 0
        %1777 = vmatpush1.bf16.msra.mxu0 0
        %1778 = vmatprep.subr.bf16.mxu0 0
        %1779 = vmatpush1.bf16.msra.mxu0 0
        %1780 = vmatprep.subr.bf16.mxu0 0
        %1781 = vmatpush1.bf16.msra.mxu0 0
        %1782 = vmatprep.subr.bf16.mxu0 0
        %1783 = vmatpush1.bf16.msra.mxu0 0
        %1784 = vmatprep.subr.bf16.mxu0 0
        %1785 = vmatpush1.bf16.msra.mxu0 0
        %1786 = vmatprep.subr.bf16.mxu0 0
        %1787 = vmatpush1.bf16.msra.mxu0 0
        %1788 = vmatprep.subr.bf16.mxu0 0
        %1789 = vmatpush1.bf16.msra.mxu0 0
        %1790 = vmatprep.subr.bf16.mxu0 0
        %1791 = vmatpush1.bf16.msra.mxu0 0
        %1792 = vmatprep.mubr.bf16.mxu0 0
        %1793 = vmatmul.mubr.bf16.gmra.mrb[0].mxu0 %v1758
        %v1794 = vpop.f32.mrb[0].mxu0
        %v1795 = vadd.f32 0.0, %v1794
        %v1796 = vpop.f32.mrb[0].mxu0
        %v1797 = vpop.f32.mrb[0].mxu0
        %v1798 = vpop.f32.mrb[0].mxu0
        %1799 = vdwg.mxu0
        %v1800 = vadd.f32 %v1119, %v1795
        %v1801 = vld [vmem:[%s21] sm:$0x1]
        %v1803 = vlaneseq
        %v1804 = vshrl.u32 %v1803, 7
        %v1805 = vsub.s32 0, %v1804
        %v1806 = vrot.slane %v1801, %v1805
        %v1808 = vadd.f32 %v1800, %v1806
        %v1809 = vld [vmem:[%s23] sm:$0x1]
        %v1810 = vld [vmem:[%s25] sm:$0x1]
        %v1811 = vsel %vm1122, %v1808, 0.0
        %1812 = vadd.xlane.f32.xlu0 %v1811
        %v1813 = vpop.xlane.xlu0 %1812
        %v1814 = vmul.f32 %v1813, %v1126
        %v1815 = vsub.f32 %v1808, %v1814
        %v1816 = vmul.f32 %v1815, %v1815
        %v1817 = vsel %vm1122, %v1816, 0.0
        %1818 = vadd.xlane.f32.xlu0 %v1817
        %v1819 = vpop.xlane.xlu0 %1818
        %v1820 = vmul.f32 %v1819, %v1126
        %v1821 = vadd.f32 %v1820, 1e-06
        %v1822 = vrsqrt.pop %v1821
        %v1823 = vmul.f32 %v1815, %v1822
        %v1825 = vlaneseq
        %v1826 = vshrl.u32 %v1825, 7
        %v1827 = vsub.s32 0, %v1826
        %v1828 = vrot.slane %v1809, %v1827
        %v1830 = vmul.f32 %v1823, %v1828
        %v1832 = vlaneseq
        %v1833 = vshrl.u32 %v1832, 7
        %v1834 = vsub.s32 0, %v1833
        %v1835 = vrot.slane %v1810, %v1834
        %v1837 = vadd.f32 %v1830, %v1835
        %v1838 = vld [vmem:[%s27] sm:$0xf]
        %v1839 = vld [vmem:[%s27 + $0x4] sm:$0xf]
        %v1840 = vld [vmem:[%s27 + $0x8] sm:$0xf]
        %v1841 = vld [vmem:[%s27 + $0xc] sm:$0xf]
        %v1842 = vld [vmem:[%s27 + $0x10] sm:$0xf]
        %v1843 = vld [vmem:[%s27 + $0x14] sm:$0xf]
        %v1844 = vld [vmem:[%s27 + $0x18] sm:$0xf]
        %v1845 = vld [vmem:[%s27 + $0x1c] sm:$0xf]
        %v1846 = vpack.c.bf16 %v1837, %v1837
        %v1847 = vld [vmem:[%s29] sm:$0x1]
        %v1849 = vlaneseq
        %v1850 = vshrl.u32 %v1849, 7
        %v1851 = vsub.s32 0, %v1850
        %v1852 = vrot.slane %v1847, %v1851
        %v1862 = vunpack.c.l.b16 %v1838
        %v1863 = vunpack.c.l.b16 %v1839
        %v1864 = vunpack.c.l.b16 %v1840
        %v1865 = vunpack.c.l.b16 %v1841
        %v1866 = vunpack.c.l.b16 %v1842
        %v1867 = vunpack.c.l.b16 %v1843
        %v1868 = vunpack.c.l.b16 %v1844
        %v1869 = vunpack.c.l.b16 %v1845
        %v1870 = vpack.c.b16 %v1863, %v1862
        %v1871 = vpack.c.b16 %v1865, %v1864
        %v1872 = vpack.c.b16 %v1867, %v1866
        %v1873 = vpack.c.b16 %v1869, %v1868
        %v1879 = vsel %vm1068, %v1846, 0
        %1881 = vmatprep.subr.bf16.mxu0 0
        %1882 = vmatpush1.bf16.msra.mxu0 %v1870
        %1883 = vmatprep.subr.bf16.mxu0 0
        %1884 = vmatpush1.bf16.msra.mxu0 %v1871
        %1885 = vmatprep.subr.bf16.mxu0 0
        %1886 = vmatpush1.bf16.msra.mxu0 %v1872
        %1887 = vmatprep.subr.bf16.mxu0 0
        %1888 = vmatpush1.bf16.msra.mxu0 %v1873
        %1889 = vmatprep.subr.bf16.mxu0 0
        %1890 = vmatpush1.bf16.msra.mxu0 0
        %1891 = vmatprep.subr.bf16.mxu0 0
        %1892 = vmatpush1.bf16.msra.mxu0 0
        %1893 = vmatprep.subr.bf16.mxu0 0
        %1894 = vmatpush1.bf16.msra.mxu0 0
        %1895 = vmatprep.subr.bf16.mxu0 0
        %1896 = vmatpush1.bf16.msra.mxu0 0
        %1897 = vmatprep.subr.bf16.mxu0 0
        %1898 = vmatpush1.bf16.msra.mxu0 0
        %1899 = vmatprep.subr.bf16.mxu0 0
        %1900 = vmatpush1.bf16.msra.mxu0 0
        %1901 = vmatprep.subr.bf16.mxu0 0
        %1902 = vmatpush1.bf16.msra.mxu0 0
        %1903 = vmatprep.subr.bf16.mxu0 0
        %1904 = vmatpush1.bf16.msra.mxu0 0
        %1905 = vmatprep.subr.bf16.mxu0 0
        %1906 = vmatpush1.bf16.msra.mxu0 0
        %1907 = vmatprep.subr.bf16.mxu0 0
        %1908 = vmatpush1.bf16.msra.mxu0 0
        %1909 = vmatprep.subr.bf16.mxu0 0
        %1910 = vmatpush1.bf16.msra.mxu0 0
        %1911 = vmatprep.subr.bf16.mxu0 0
        %1912 = vmatpush1.bf16.msra.mxu0 0
        %1913 = vmatprep.mubr.bf16.mxu0 0
        %1914 = vmatmul.mubr.bf16.gmra.mrb[0].mxu0 %v1879
        %v1915 = vpop.f32.mrb[0].mxu0
        %v1916 = vadd.f32 %v1852, %v1915
        %v1917 = vpop.f32.mrb[0].mxu0
        %v1918 = vpop.f32.mrb[0].mxu0
        %v1919 = vpop.f32.mrb[0].mxu0
        %1920 = vdwg.mxu0
        %v1921 = vmul.f32 %v1916, 0.5
        %v1922 = vmul.f32 %v1916, 0.044715
        %v1923 = vmul.f32 %v1922, %v1916
        %v1924 = vmul.f32 %v1923, %v1916
        %v1925 = vadd.f32 %v1916, %v1924
        %v1926 = vmul.f32 %v1925, 0.7978846
        %v1927 = vtanh.pop %v1926
        %v1928 = vadd.f32 %v1927, 1.0
        %v1929 = vmul.f32 %v1921, %v1928
        %v1930 = vld [vmem:[%s31] sm:$0xf]
        %v1931 = vld [vmem:[%s31 + $0x4] sm:$0xf]
        %v1932 = vld [vmem:[%s31 + $0x8] sm:$0xf]
        %v1933 = vld [vmem:[%s31 + $0xc] sm:$0xf]
        %v1934 = vld [vmem:[%s31 + $0x10] sm:$0xf]
        %v1935 = vld [vmem:[%s31 + $0x14] sm:$0xf]
        %v1936 = vld [vmem:[%s31 + $0x18] sm:$0xf]
        %v1937 = vld [vmem:[%s31 + $0x1c] sm:$0xf]
        %v1938 = vld [vmem:[%s31 + $0x20] sm:$0xf]
        %v1939 = vld [vmem:[%s31 + $0x24] sm:$0xf]
        %v1940 = vld [vmem:[%s31 + $0x28] sm:$0xf]
        %v1941 = vld [vmem:[%s31 + $0x2c] sm:$0xf]
        %v1942 = vld [vmem:[%s31 + $0x30] sm:$0xf]
        %v1943 = vld [vmem:[%s31 + $0x34] sm:$0xf]
        %v1944 = vld [vmem:[%s31 + $0x38] sm:$0xf]
        %v1945 = vld [vmem:[%s31 + $0x3c] sm:$0xf]
        %v1946 = vpack.c.bf16 %v1929, %v1929
        %v1963 = vunpack.c.l.b16 %v1930
        %v1964 = vunpack.c.l.b16 %v1931
        %v1965 = vunpack.c.l.b16 %v1932
        %v1966 = vunpack.c.l.b16 %v1933
        %v1967 = vunpack.c.l.b16 %v1934
        %v1968 = vunpack.c.l.b16 %v1935
        %v1969 = vunpack.c.l.b16 %v1936
        %v1970 = vunpack.c.l.b16 %v1937
        %v1971 = vunpack.c.l.b16 %v1938
        %v1972 = vunpack.c.l.b16 %v1939
        %v1973 = vunpack.c.l.b16 %v1940
        %v1974 = vunpack.c.l.b16 %v1941
        %v1975 = vunpack.c.l.b16 %v1942
        %v1976 = vunpack.c.l.b16 %v1943
        %v1977 = vunpack.c.l.b16 %v1944
        %v1978 = vunpack.c.l.b16 %v1945
        %v1979 = vpack.c.b16 %v1964, %v1963
        %v1980 = vpack.c.b16 %v1966, %v1965
        %v1981 = vpack.c.b16 %v1968, %v1967
        %v1982 = vpack.c.b16 %v1970, %v1969
        %v1983 = vpack.c.b16 %v1972, %v1971
        %v1984 = vpack.c.b16 %v1974, %v1973
        %v1985 = vpack.c.b16 %v1976, %v1975
        %v1986 = vpack.c.b16 %v1978, %v1977
        %1995 = vmatprep.subr.bf16.mxu0 0
        %1996 = vmatpush1.bf16.msra.mxu0 %v1979
        %1997 = vmatprep.subr.bf16.mxu0 0
        %1998 = vmatpush1.bf16.msra.mxu0 %v1980
        %1999 = vmatprep.subr.bf16.mxu0 0
        %2000 = vmatpush1.bf16.msra.mxu0 %v1981
        %2001 = vmatprep.subr.bf16.mxu0 0
        %2002 = vmatpush1.bf16.msra.mxu0 %v1982
        %2003 = vmatprep.subr.bf16.mxu0 0
        %2004 = vmatpush1.bf16.msra.mxu0 %v1983
        %2005 = vmatprep.subr.bf16.mxu0 0
        %2006 = vmatpush1.bf16.msra.mxu0 %v1984
        %2007 = vmatprep.subr.bf16.mxu0 0
        %2008 = vmatpush1.bf16.msra.mxu0 %v1985
        %2009 = vmatprep.subr.bf16.mxu0 0
        %2010 = vmatpush1.bf16.msra.mxu0 %v1986
        %2011 = vmatprep.subr.bf16.mxu0 0
        %2012 = vmatpush1.bf16.msra.mxu0 0
        %2013 = vmatprep.subr.bf16.mxu0 0
        %2014 = vmatpush1.bf16.msra.mxu0 0
        %2015 = vmatprep.subr.bf16.mxu0 0
        %2016 = vmatpush1.bf16.msra.mxu0 0
        %2017 = vmatprep.subr.bf16.mxu0 0
        %2018 = vmatpush1.bf16.msra.mxu0 0
        %2019 = vmatprep.subr.bf16.mxu0 0
        %2020 = vmatpush1.bf16.msra.mxu0 0
        %2021 = vmatprep.subr.bf16.mxu0 0
        %2022 = vmatpush1.bf16.msra.mxu0 0
        %2023 = vmatprep.subr.bf16.mxu0 0
        %2024 = vmatpush1.bf16.msra.mxu0 0
        %2025 = vmatprep.subr.bf16.mxu0 0
        %2026 = vmatpush1.bf16.msra.mxu0 0
        %2027 = vmatprep.mubr.bf16.mxu0 0
        %2028 = vmatmul.mubr.bf16.gmra.mrb[0].mxu0 %v1946
        %v2029 = vpop.f32.mrb[0].mxu0
        %v2030 = vadd.f32 0.0, %v2029
        %v2031 = vpop.f32.mrb[0].mxu0
        %v2032 = vpop.f32.mrb[0].mxu0
        %v2033 = vpop.f32.mrb[0].mxu0
        %2034 = vdwg.mxu0
        %v2035 = vadd.f32 %v1808, %v2030
        %v2036 = vld [vmem:[%s33] sm:$0x1]
        %v2038 = vlaneseq
        %v2039 = vshrl.u32 %v2038, 7
        %v2040 = vsub.s32 0, %v2039
        %v2041 = vrot.slane %v2036, %v2040
        %v2043 = vadd.f32 %v2035, %v2041
        %s2044 = scalar_lea.vmem %s11, 1
        %v2045 = vld [vmem:[%s2044] sm:$0x1]
        %s2046 = scalar_lea.vmem %s13, 1
        %v2047 = vld [vmem:[%s2046] sm:$0x1]
        %v2048 = vsel %vm1122, %v2043, 0.0
        %2049 = vadd.xlane.f32.xlu0 %v2048
        %v2050 = vpop.xlane.xlu0 %2049
        %v2051 = vmul.f32 %v2050, %v1126
        %v2052 = vsub.f32 %v2043, %v2051
        %v2053 = vmul.f32 %v2052, %v2052
        %v2054 = vsel %vm1122, %v2053, 0.0
        %2055 = vadd.xlane.f32.xlu0 %v2054
        %v2056 = vpop.xlane.xlu0 %2055
        %v2057 = vmul.f32 %v2056, %v1126
        %v2058 = vadd.f32 %v2057, 1e-06
        %v2059 = vrsqrt.pop %v2058
        %v2060 = vmul.f32 %v2052, %v2059
        %v2062 = vlaneseq
        %v2063 = vshrl.u32 %v2062, 7
        %v2064 = vsub.s32 0, %v2063
        %v2065 = vrot.slane %v2045, %v2064
        %v2067 = vmul.f32 %v2060, %v2065
        %v2069 = vlaneseq
        %v2070 = vshrl.u32 %v2069, 7
        %v2071 = vsub.s32 0, %v2070
        %v2072 = vrot.slane %v2047, %v2071
        %v2074 = vadd.f32 %v2067, %v2072
        %s2075 = scalar_lea.vmem %s15, 64
        %v2076 = vld [vmem:[%s2075] sm:$0xff]
        %v2077 = vld [vmem:[%s2075 + $0x8] sm:$0xff]
        %v2078 = vld [vmem:[%s2075 + $0x10] sm:$0xff]
        %v2079 = vld [vmem:[%s2075 + $0x18] sm:$0xff]
        %v2080 = vld [vmem:[%s2075 + $0x20] sm:$0xff]
        %v2081 = vld [vmem:[%s2075 + $0x28] sm:$0xff]
        %v2082 = vld [vmem:[%s2075 + $0x30] sm:$0xff]
        %v2083 = vld [vmem:[%s2075 + $0x38] sm:$0xff]
        %v2084 = vpack.c.bf16 %v2074, %v2074
        %s2085 = scalar_lea.vmem %s17, 2
        %v2086 = vld [vmem:[%s2085] sm:$0x3]
        %v2088 = vlaneseq
        %v2089 = vshrl.u32 %v2088, 7
        %v2090 = vsub.s32 0, %v2089
        %v2091 = vrot.slane %v2086, %v2090
        %v2092 = vlaneseq
        %v2093 = vshrl.u32 %v2092, 7
        %v2094 = vsub.s32 1, %v2093
        %v2095 = vrot.slane %v2086, %v2094
        %v2106 = vunpack.c.l.b16 %v2076
        %v2107 = vunpack.c.h.b16 %v2076
        %v2108 = vunpack.c.l.b16 %v2077
        %v2109 = vunpack.c.h.b16 %v2077
        %v2110 = vunpack.c.l.b16 %v2078
        %v2111 = vunpack.c.h.b16 %v2078
        %v2112 = vunpack.c.l.b16 %v2079
        %v2113 = vunpack.c.h.b16 %v2079
        %v2114 = vunpack.c.l.b16 %v2080
        %v2115 = vunpack.c.h.b16 %v2080
        %v2116 = vunpack.c.l.b16 %v2081
        %v2117 = vunpack.c.h.b16 %v2081
        %v2118 = vunpack.c.l.b16 %v2082
        %v2119 = vunpack.c.h.b16 %v2082
        %v2120 = vunpack.c.l.b16 %v2083
        %v2121 = vunpack.c.h.b16 %v2083
        %v2122 = vpack.c.b16 %v2108, %v2106
        %v2123 = vpack.c.b16 %v2109, %v2107
        %v2124 = vpack.c.b16 %v2112, %v2110
        %v2125 = vpack.c.b16 %v2113, %v2111
        %v2126 = vpack.c.b16 %v2116, %v2114
        %v2127 = vpack.c.b16 %v2117, %v2115
        %v2128 = vpack.c.b16 %v2120, %v2118
        %v2129 = vpack.c.b16 %v2121, %v2119
        %v2139 = vsel %vm1068, %v2084, 0
        %2141 = vmatprep.subr.bf16.mxu0 %v2123
        %2142 = vmatpush1.bf16.msra.mxu0 %v2122
        %2143 = vmatprep.subr.bf16.mxu0 %v2125
        %2144 = vmatpush1.bf16.msra.mxu0 %v2124
        %2145 = vmatprep.subr.bf16.mxu0 %v2127
        %2146 = vmatpush1.bf16.msra.mxu0 %v2126
        %2147 = vmatprep.subr.bf16.mxu0 %v2129
        %2148 = vmatpush1.bf16.msra.mxu0 %v2128
        %2149 = vmatprep.subr.bf16.mxu0 0
        %2150 = vmatpush1.bf16.msra.mxu0 0
        %2151 = vmatprep.subr.bf16.mxu0 0
        %2152 = vmatpush1.bf16.msra.mxu0 0
        %2153 = vmatprep.subr.bf16.mxu0 0
        %2154 = vmatpush1.bf16.msra.mxu0 0
        %2155 = vmatprep.subr.bf16.mxu0 0
        %2156 = vmatpush1.bf16.msra.mxu0 0
        %2157 = vmatprep.subr.bf16.mxu0 0
        %2158 = vmatpush1.bf16.msra.mxu0 0
        %2159 = vmatprep.subr.bf16.mxu0 0
        %2160 = vmatpush1.bf16.msra.mxu0 0
        %2161 = vmatprep.subr.bf16.mxu0 0
        %2162 = vmatpush1.bf16.msra.mxu0 0
        %2163 = vmatprep.subr.bf16.mxu0 0
        %2164 = vmatpush1.bf16.msra.mxu0 0
        %2165 = vmatprep.subr.bf16.mxu0 0
        %2166 = vmatpush1.bf16.msra.mxu0 0
        %2167 = vmatprep.subr.bf16.mxu0 0
        %2168 = vmatpush1.bf16.msra.mxu0 0
        %2169 = vmatprep.subr.bf16.mxu0 0
        %2170 = vmatpush1.bf16.msra.mxu0 0
        %2171 = vmatprep.subr.bf16.mxu0 0
        %2172 = vmatpush1.bf16.msra.mxu0 0
        %2173 = vmatprep.mubr.bf16.mxu0 0
        %2174 = vmatmul.mubr.bf16.gmra.mrb[0].mxu0 %v2139
        %v2175 = vpop.f32.mrb[0].mxu0
        %v2176 = vadd.f32 %v2091, %v2175
        %v2177 = vpop.f32.mrb[0].mxu0
        %v2178 = vadd.f32 %v2095, %v2177
        %v2179 = vpop.f32.mrb[0].mxu0
        %v2180 = vpop.f32.mrb[0].mxu0
        %2181 = vdwg.mxu0
        %v2182 = vpack.c.bf16 %v2176, %v2176
        %2184 = vrot.lane.b32.xlu0 %v2182, 64
        %v2185 = vpop.permute.xlu0 %2184
        %v2187 = vsel %vm1260, %v2182, 0
        %v2190 = vsel %vm1260, %v2185, 0
        %2192 = vmatprep.subr.bf16.mxu0 0
        %2193 = vmatpush1.bf16.xpose.msra.mxu0 %v2190
        %2194 = vmatprep.subr.bf16.mxu0 0
        %2195 = vmatpush1.bf16.xpose.msra.mxu0 0
        %2196 = vmatprep.subr.bf16.mxu0 0
        %2197 = vmatpush1.bf16.xpose.msra.mxu0 0
        %2198 = vmatprep.subr.bf16.mxu0 0
        %2199 = vmatpush1.bf16.xpose.msra.mxu0 0
        %2200 = vmatprep.subr.bf16.mxu0 0
        %2201 = vmatpush1.bf16.xpose.msra.mxu0 0
        %2202 = vmatprep.subr.bf16.mxu0 0
        %2203 = vmatpush1.bf16.xpose.msra.mxu0 0
        %2204 = vmatprep.subr.bf16.mxu0 0
        %2205 = vmatpush1.bf16.xpose.msra.mxu0 0
        %2206 = vmatprep.subr.bf16.mxu0 0
        %2207 = vmatpush1.bf16.xpose.msra.mxu0 0
        %2208 = vmatprep.subr.bf16.mxu0 0
        %2209 = vmatpush1.bf16.xpose.msra.mxu0 0
        %2210 = vmatprep.subr.bf16.mxu0 0
        %2211 = vmatpush1.bf16.xpose.msra.mxu0 0
        %2212 = vmatprep.subr.bf16.mxu0 0
        %2213 = vmatpush1.bf16.xpose.msra.mxu0 0
        %2214 = vmatprep.subr.bf16.mxu0 0
        %2215 = vmatpush1.bf16.xpose.msra.mxu0 0
        %2216 = vmatprep.subr.bf16.mxu0 0
        %2217 = vmatpush1.bf16.xpose.msra.mxu0 0
        %2218 = vmatprep.subr.bf16.mxu0 0
        %2219 = vmatpush1.bf16.xpose.msra.mxu0 0
        %2220 = vmatprep.subr.bf16.mxu0 0
        %2221 = vmatpush1.bf16.xpose.msra.mxu0 0
        %2222 = vmatprep.subr.bf16.mxu0 0
        %2223 = vmatpush1.bf16.xpose.msra.mxu0 0
        %2224 = vmatprep.mubr.bf16.mxu0 0
        %2225 = vmatmul.mubr.bf16.gmra.mrb[0].mxu0 %v2187
        %v2226 = vpop.f32.mrb[0].mxu0
        %v2227 = vadd.f32 0.0, %v2226
        %v2228 = vpop.f32.mrb[0].mxu0
        %v2229 = vpop.f32.mrb[0].mxu0
        %v2230 = vpop.f32.mrb[0].mxu0
        %2231 = vdwg.mxu0
        %v2232 = vmul.f32 %v2227, 0.25
        %v2233 = vsel %vm1308, %v2232, -inf
        %2234 = vmax.xlane.f32.xlu0 %v2233
        %v2235 = vpop.xlane.xlu0 %2234
        %v2236 = vsub.f32 %v2232, %v2235
        %v2237 = vmul.f32 %v2236, 1.442695
        %v2238 = vpow.pop %v2237
        %v2239 = vsel %vm1308, %v2238, 0.0
        %2240 = vadd.xlane.f32.xlu0 %v2239
        %v2241 = vpop.xlane.xlu0 %2240
        %v2242 = vrcp.pop %v2241
        %v2243 = vmul.f32 %v2238, %v2242
        %v2244 = vpack.c.bf16 %v2243, %v2243
        %v2245 = vpack.c.bf16 %v2178, %v2178
        %v2247 = vsel %vm1322, %v2244, 0
        %v2250 = vand.u32 %v2245, %v1329
        %2252 = vmatprep.subr.bf16.mxu0 0
        %2253 = vmatpush1.bf16.msra.mxu0 %v2250
        %2254 = vmatprep.subr.bf16.mxu0 0
        %2255 = vmatpush1.bf16.msra.mxu0 0
        %2256 = vmatprep.subr.bf16.mxu0 0
        %2257 = vmatpush1.bf16.msra.mxu0 0
        %2258 = vmatprep.subr.bf16.mxu0 0
        %2259 = vmatpush1.bf16.msra.mxu0 0
        %2260 = vmatprep.subr.bf16.mxu0 0
        %2261 = vmatpush1.bf16.msra.mxu0 0
        %2262 = vmatprep.subr.bf16.mxu0 0
        %2263 = vmatpush1.bf16.msra.mxu0 0
        %2264 = vmatprep.subr.bf16.mxu0 0
        %2265 = vmatpush1.bf16.msra.mxu0 0
        %2266 = vmatprep.subr.bf16.mxu0 0
        %2267 = vmatpush1.bf16.msra.mxu0 0
        %2268 = vmatprep.subr.bf16.mxu0 0
        %2269 = vmatpush1.bf16.msra.mxu0 0
        %2270 = vmatprep.subr.bf16.mxu0 0
        %2271 = vmatpush1.bf16.msra.mxu0 0
        %2272 = vmatprep.subr.bf16.mxu0 0
        %2273 = vmatpush1.bf16.msra.mxu0 0
        %2274 = vmatprep.subr.bf16.mxu0 0
        %2275 = vmatpush1.bf16.msra.mxu0 0
        %2276 = vmatprep.subr.bf16.mxu0 0
        %2277 = vmatpush1.bf16.msra.mxu0 0
        %2278 = vmatprep.subr.bf16.mxu0 0
        %2279 = vmatpush1.bf16.msra.mxu0 0
        %2280 = vmatprep.subr.bf16.mxu0 0
        %2281 = vmatpush1.bf16.msra.mxu0 0
        %2282 = vmatprep.subr.bf16.mxu0 0
        %2283 = vmatpush1.bf16.msra.mxu0 0
        %2284 = vmatprep.mubr.bf16.mxu0 0
        %2285 = vmatmul.mubr.bf16.gmra.mrb[0].mxu0 %v2247
        %v2286 = vpop.f32.mrb[0].mxu0
        %v2287 = vadd.f32 0.0, %v2286
        %v2288 = vpop.f32.mrb[0].mxu0
        %v2289 = vpop.f32.mrb[0].mxu0
        %v2290 = vpop.f32.mrb[0].mxu0
        %2291 = vdwg.mxu0
        %2292 = vrot.lane.b32.xlu0 %v2182, 112
        %v2293 = vpop.permute.xlu0 %2292
        %2294 = vrot.lane.b32.xlu0 %v2182, 48
        %v2295 = vpop.permute.xlu0 %2294
        %v2297 = vsel %vm1260, %v2293, 0
        %v2300 = vsel %vm1260, %v2295, 0
        %2302 = vmatprep.subr.bf16.mxu0 0
        %2303 = vmatpush1.bf16.xpose.msra.mxu0 %v2300
        %2304 = vmatprep.subr.bf16.mxu0 0
        %2305 = vmatpush1.bf16.xpose.msra.mxu0 0
        %2306 = vmatprep.subr.bf16.mxu0 0
        %2307 = vmatpush1.bf16.xpose.msra.mxu0 0
        %2308 = vmatprep.subr.bf16.mxu0 0
        %2309 = vmatpush1.bf16.xpose.msra.mxu0 0
        %2310 = vmatprep.subr.bf16.mxu0 0
        %2311 = vmatpush1.bf16.xpose.msra.mxu0 0
        %2312 = vmatprep.subr.bf16.mxu0 0
        %2313 = vmatpush1.bf16.xpose.msra.mxu0 0
        %2314 = vmatprep.subr.bf16.mxu0 0
        %2315 = vmatpush1.bf16.xpose.msra.mxu0 0
        %2316 = vmatprep.subr.bf16.mxu0 0
        %2317 = vmatpush1.bf16.xpose.msra.mxu0 0
        %2318 = vmatprep.subr.bf16.mxu0 0
        %2319 = vmatpush1.bf16.xpose.msra.mxu0 0
        %2320 = vmatprep.subr.bf16.mxu0 0
        %2321 = vmatpush1.bf16.xpose.msra.mxu0 0
        %2322 = vmatprep.subr.bf16.mxu0 0
        %2323 = vmatpush1.bf16.xpose.msra.mxu0 0
        %2324 = vmatprep.subr.bf16.mxu0 0
        %2325 = vmatpush1.bf16.xpose.msra.mxu0 0
        %2326 = vmatprep.subr.bf16.mxu0 0
        %2327 = vmatpush1.bf16.xpose.msra.mxu0 0
        %2328 = vmatprep.subr.bf16.mxu0 0
        %2329 = vmatpush1.bf16.xpose.msra.mxu0 0
        %2330 = vmatprep.subr.bf16.mxu0 0
        %2331 = vmatpush1.bf16.xpose.msra.mxu0 0
        %2332 = vmatprep.subr.bf16.mxu0 0
        %2333 = vmatpush1.bf16.xpose.msra.mxu0 0
        %2334 = vmatprep.mubr.bf16.mxu0 0
        %2335 = vmatmul.mubr.bf16.gmra.mrb[0].mxu0 %v2297
        %v2336 = vpop.f32.mrb[0].mxu0
        %v2337 = vadd.f32 0.0, %v2336
        %v2338 = vpop.f32.mrb[0].mxu0
        %v2339 = vpop.f32.mrb[0].mxu0
        %v2340 = vpop.f32.mrb[0].mxu0
        %2341 = vdwg.mxu0
        %v2342 = vmul.f32 %v2337, 0.25
        %v2343 = vsel %vm1308, %v2342, -inf
        %2344 = vmax.xlane.f32.xlu0 %v2343
        %v2345 = vpop.xlane.xlu0 %2344
        %v2346 = vsub.f32 %v2342, %v2345
        %v2347 = vmul.f32 %v2346, 1.442695
        %v2348 = vpow.pop %v2347
        %v2349 = vsel %vm1308, %v2348, 0.0
        %2350 = vadd.xlane.f32.xlu0 %v2349
        %v2351 = vpop.xlane.xlu0 %2350
        %v2352 = vrcp.pop %v2351
        %v2353 = vmul.f32 %v2348, %v2352
        %v2354 = vpack.c.bf16 %v2353, %v2353
        %2356 = vrot.lane.b32.xlu0 %v2245, 112
        %v2357 = vpop.permute.xlu0 %2356
        %v2359 = vsel %vm1322, %v2354, 0
        %v2362 = vand.u32 %v2357, %v1329
        %2364 = vmatprep.subr.bf16.mxu0 0
        %2365 = vmatpush1.bf16.msra.mxu0 %v2362
        %2366 = vmatprep.subr.bf16.mxu0 0
        %2367 = vmatpush1.bf16.msra.mxu0 0
        %2368 = vmatprep.subr.bf16.mxu0 0
        %2369 = vmatpush1.bf16.msra.mxu0 0
        %2370 = vmatprep.subr.bf16.mxu0 0
        %2371 = vmatpush1.bf16.msra.mxu0 0
        %2372 = vmatprep.subr.bf16.mxu0 0
        %2373 = vmatpush1.bf16.msra.mxu0 0
        %2374 = vmatprep.subr.bf16.mxu0 0
        %2375 = vmatpush1.bf16.msra.mxu0 0
        %2376 = vmatprep.subr.bf16.mxu0 0
        %2377 = vmatpush1.bf16.msra.mxu0 0
        %2378 = vmatprep.subr.bf16.mxu0 0
        %2379 = vmatpush1.bf16.msra.mxu0 0
        %2380 = vmatprep.subr.bf16.mxu0 0
        %2381 = vmatpush1.bf16.msra.mxu0 0
        %2382 = vmatprep.subr.bf16.mxu0 0
        %2383 = vmatpush1.bf16.msra.mxu0 0
        %2384 = vmatprep.subr.bf16.mxu0 0
        %2385 = vmatpush1.bf16.msra.mxu0 0
        %2386 = vmatprep.subr.bf16.mxu0 0
        %2387 = vmatpush1.bf16.msra.mxu0 0
        %2388 = vmatprep.subr.bf16.mxu0 0
        %2389 = vmatpush1.bf16.msra.mxu0 0
        %2390 = vmatprep.subr.bf16.mxu0 0
        %2391 = vmatpush1.bf16.msra.mxu0 0
        %2392 = vmatprep.subr.bf16.mxu0 0
        %2393 = vmatpush1.bf16.msra.mxu0 0
        %2394 = vmatprep.subr.bf16.mxu0 0
        %2395 = vmatpush1.bf16.msra.mxu0 0
        %2396 = vmatprep.mubr.bf16.mxu0 0
        %2397 = vmatmul.mubr.bf16.gmra.mrb[0].mxu0 %v2359
        %v2398 = vpop.f32.mrb[0].mxu0
        %v2399 = vadd.f32 0.0, %v2398
        %v2400 = vpop.f32.mrb[0].mxu0
        %v2401 = vpop.f32.mrb[0].mxu0
        %v2402 = vpop.f32.mrb[0].mxu0
        %2403 = vdwg.mxu0
        %2404 = vrot.lane.b32.xlu0 %v2182, 96
        %v2405 = vpop.permute.xlu0 %2404
        %2406 = vrot.lane.b32.xlu0 %v2182, 32
        %v2407 = vpop.permute.xlu0 %2406
        %v2409 = vsel %vm1260, %v2405, 0
        %v2412 = vsel %vm1260, %v2407, 0
        %2414 = vmatprep.subr.bf16.mxu0 0
        %2415 = vmatpush1.bf16.xpose.msra.mxu0 %v2412
        %2416 = vmatprep.subr.bf16.mxu0 0
        %2417 = vmatpush1.bf16.xpose.msra.mxu0 0
        %2418 = vmatprep.subr.bf16.mxu0 0
        %2419 = vmatpush1.bf16.xpose.msra.mxu0 0
        %2420 = vmatprep.subr.bf16.mxu0 0
        %2421 = vmatpush1.bf16.xpose.msra.mxu0 0
        %2422 = vmatprep.subr.bf16.mxu0 0
        %2423 = vmatpush1.bf16.xpose.msra.mxu0 0
        %2424 = vmatprep.subr.bf16.mxu0 0
        %2425 = vmatpush1.bf16.xpose.msra.mxu0 0
        %2426 = vmatprep.subr.bf16.mxu0 0
        %2427 = vmatpush1.bf16.xpose.msra.mxu0 0
        %2428 = vmatprep.subr.bf16.mxu0 0
        %2429 = vmatpush1.bf16.xpose.msra.mxu0 0
        %2430 = vmatprep.subr.bf16.mxu0 0
        %2431 = vmatpush1.bf16.xpose.msra.mxu0 0
        %2432 = vmatprep.subr.bf16.mxu0 0
        %2433 = vmatpush1.bf16.xpose.msra.mxu0 0
        %2434 = vmatprep.subr.bf16.mxu0 0
        %2435 = vmatpush1.bf16.xpose.msra.mxu0 0
        %2436 = vmatprep.subr.bf16.mxu0 0
        %2437 = vmatpush1.bf16.xpose.msra.mxu0 0
        %2438 = vmatprep.subr.bf16.mxu0 0
        %2439 = vmatpush1.bf16.xpose.msra.mxu0 0
        %2440 = vmatprep.subr.bf16.mxu0 0
        %2441 = vmatpush1.bf16.xpose.msra.mxu0 0
        %2442 = vmatprep.subr.bf16.mxu0 0
        %2443 = vmatpush1.bf16.xpose.msra.mxu0 0
        %2444 = vmatprep.subr.bf16.mxu0 0
        %2445 = vmatpush1.bf16.xpose.msra.mxu0 0
        %2446 = vmatprep.mubr.bf16.mxu0 0
        %2447 = vmatmul.mubr.bf16.gmra.mrb[0].mxu0 %v2409
        %v2448 = vpop.f32.mrb[0].mxu0
        %v2449 = vadd.f32 0.0, %v2448
        %v2450 = vpop.f32.mrb[0].mxu0
        %v2451 = vpop.f32.mrb[0].mxu0
        %v2452 = vpop.f32.mrb[0].mxu0
        %2453 = vdwg.mxu0
        %v2454 = vmul.f32 %v2449, 0.25
        %v2455 = vsel %vm1308, %v2454, -inf
        %2456 = vmax.xlane.f32.xlu0 %v2455
        %v2457 = vpop.xlane.xlu0 %2456
        %v2458 = vsub.f32 %v2454, %v2457
        %v2459 = vmul.f32 %v2458, 1.442695
        %v2460 = vpow.pop %v2459
        %v2461 = vsel %vm1308, %v2460, 0.0
        %2462 = vadd.xlane.f32.xlu0 %v2461
        %v2463 = vpop.xlane.xlu0 %2462
        %v2464 = vrcp.pop %v2463
        %v2465 = vmul.f32 %v2460, %v2464
        %v2466 = vpack.c.bf16 %v2465, %v2465
        %2467 = vrot.lane.b32.xlu0 %v2245, 96
        %v2468 = vpop.permute.xlu0 %2467
        %v2470 = vsel %vm1322, %v2466, 0
        %v2473 = vand.u32 %v2468, %v1329
        %2475 = vmatprep.subr.bf16.mxu0 0
        %2476 = vmatpush1.bf16.msra.mxu0 %v2473
        %2477 = vmatprep.subr.bf16.mxu0 0
        %2478 = vmatpush1.bf16.msra.mxu0 0
        %2479 = vmatprep.subr.bf16.mxu0 0
        %2480 = vmatpush1.bf16.msra.mxu0 0
        %2481 = vmatprep.subr.bf16.mxu0 0
        %2482 = vmatpush1.bf16.msra.mxu0 0
        %2483 = vmatprep.subr.bf16.mxu0 0
        %2484 = vmatpush1.bf16.msra.mxu0 0
        %2485 = vmatprep.subr.bf16.mxu0 0
        %2486 = vmatpush1.bf16.msra.mxu0 0
        %2487 = vmatprep.subr.bf16.mxu0 0
        %2488 = vmatpush1.bf16.msra.mxu0 0
        %2489 = vmatprep.subr.bf16.mxu0 0
        %2490 = vmatpush1.bf16.msra.mxu0 0
        %2491 = vmatprep.subr.bf16.mxu0 0
        %2492 = vmatpush1.bf16.msra.mxu0 0
        %2493 = vmatprep.subr.bf16.mxu0 0
        %2494 = vmatpush1.bf16.msra.mxu0 0
        %2495 = vmatprep.subr.bf16.mxu0 0
        %2496 = vmatpush1.bf16.msra.mxu0 0
        %2497 = vmatprep.subr.bf16.mxu0 0
        %2498 = vmatpush1.bf16.msra.mxu0 0
        %2499 = vmatprep.subr.bf16.mxu0 0
        %2500 = vmatpush1.bf16.msra.mxu0 0
        %2501 = vmatprep.subr.bf16.mxu0 0
        %2502 = vmatpush1.bf16.msra.mxu0 0
        %2503 = vmatprep.subr.bf16.mxu0 0
        %2504 = vmatpush1.bf16.msra.mxu0 0
        %2505 = vmatprep.subr.bf16.mxu0 0
        %2506 = vmatpush1.bf16.msra.mxu0 0
        %2507 = vmatprep.mubr.bf16.mxu0 0
        %2508 = vmatmul.mubr.bf16.gmra.mrb[0].mxu0 %v2470
        %v2509 = vpop.f32.mrb[0].mxu0
        %v2510 = vadd.f32 0.0, %v2509
        %v2511 = vpop.f32.mrb[0].mxu0
        %v2512 = vpop.f32.mrb[0].mxu0
        %v2513 = vpop.f32.mrb[0].mxu0
        %2514 = vdwg.mxu0
        %2515 = vrot.lane.b32.xlu0 %v2182, 80
        %v2516 = vpop.permute.xlu0 %2515
        %2517 = vrot.lane.b32.xlu0 %v2182, 16
        %v2518 = vpop.permute.xlu0 %2517
        %v2520 = vsel %vm1260, %v2516, 0
        %v2523 = vsel %vm1260, %v2518, 0
        %2525 = vmatprep.subr.bf16.mxu0 0
        %2526 = vmatpush1.bf16.xpose.msra.mxu0 %v2523
        %2527 = vmatprep.subr.bf16.mxu0 0
        %2528 = vmatpush1.bf16.xpose.msra.mxu0 0
        %2529 = vmatprep.subr.bf16.mxu0 0
        %2530 = vmatpush1.bf16.xpose.msra.mxu0 0
        %2531 = vmatprep.subr.bf16.mxu0 0
        %2532 = vmatpush1.bf16.xpose.msra.mxu0 0
        %2533 = vmatprep.subr.bf16.mxu0 0
        %2534 = vmatpush1.bf16.xpose.msra.mxu0 0
        %2535 = vmatprep.subr.bf16.mxu0 0
        %2536 = vmatpush1.bf16.xpose.msra.mxu0 0
        %2537 = vmatprep.subr.bf16.mxu0 0
        %2538 = vmatpush1.bf16.xpose.msra.mxu0 0
        %2539 = vmatprep.subr.bf16.mxu0 0
        %2540 = vmatpush1.bf16.xpose.msra.mxu0 0
        %2541 = vmatprep.subr.bf16.mxu0 0
        %2542 = vmatpush1.bf16.xpose.msra.mxu0 0
        %2543 = vmatprep.subr.bf16.mxu0 0
        %2544 = vmatpush1.bf16.xpose.msra.mxu0 0
        %2545 = vmatprep.subr.bf16.mxu0 0
        %2546 = vmatpush1.bf16.xpose.msra.mxu0 0
        %2547 = vmatprep.subr.bf16.mxu0 0
        %2548 = vmatpush1.bf16.xpose.msra.mxu0 0
        %2549 = vmatprep.subr.bf16.mxu0 0
        %2550 = vmatpush1.bf16.xpose.msra.mxu0 0
        %2551 = vmatprep.subr.bf16.mxu0 0
        %2552 = vmatpush1.bf16.xpose.msra.mxu0 0
        %2553 = vmatprep.subr.bf16.mxu0 0
        %2554 = vmatpush1.bf16.xpose.msra.mxu0 0
        %2555 = vmatprep.subr.bf16.mxu0 0
        %2556 = vmatpush1.bf16.xpose.msra.mxu0 0
        %2557 = vmatprep.mubr.bf16.mxu0 0
        %2558 = vmatmul.mubr.bf16.gmra.mrb[0].mxu0 %v2520
        %v2559 = vpop.f32.mrb[0].mxu0
        %v2560 = vadd.f32 0.0, %v2559
        %v2561 = vpop.f32.mrb[0].mxu0
        %v2562 = vpop.f32.mrb[0].mxu0
        %v2563 = vpop.f32.mrb[0].mxu0
        %2564 = vdwg.mxu0
        %v2565 = vmul.f32 %v2560, 0.25
        %v2566 = vsel %vm1308, %v2565, -inf
        %2567 = vmax.xlane.f32.xlu0 %v2566
        %v2568 = vpop.xlane.xlu0 %2567
        %v2569 = vsub.f32 %v2565, %v2568
        %v2570 = vmul.f32 %v2569, 1.442695
        %v2571 = vpow.pop %v2570
        %v2572 = vsel %vm1308, %v2571, 0.0
        %2573 = vadd.xlane.f32.xlu0 %v2572
        %v2574 = vpop.xlane.xlu0 %2573
        %v2575 = vrcp.pop %v2574
        %v2576 = vmul.f32 %v2571, %v2575
        %v2577 = vpack.c.bf16 %v2576, %v2576
        %2578 = vrot.lane.b32.xlu0 %v2245, 80
        %v2579 = vpop.permute.xlu0 %2578
        %v2581 = vsel %vm1322, %v2577, 0
        %v2584 = vand.u32 %v2579, %v1329
        %2586 = vmatprep.subr.bf16.mxu0 0
        %2587 = vmatpush1.bf16.msra.mxu0 %v2584
        %2588 = vmatprep.subr.bf16.mxu0 0
        %2589 = vmatpush1.bf16.msra.mxu0 0
        %2590 = vmatprep.subr.bf16.mxu0 0
        %2591 = vmatpush1.bf16.msra.mxu0 0
        %2592 = vmatprep.subr.bf16.mxu0 0
        %2593 = vmatpush1.bf16.msra.mxu0 0
        %2594 = vmatprep.subr.bf16.mxu0 0
        %2595 = vmatpush1.bf16.msra.mxu0 0
        %2596 = vmatprep.subr.bf16.mxu0 0
        %2597 = vmatpush1.bf16.msra.mxu0 0
        %2598 = vmatprep.subr.bf16.mxu0 0
        %2599 = vmatpush1.bf16.msra.mxu0 0
        %2600 = vmatprep.subr.bf16.mxu0 0
        %2601 = vmatpush1.bf16.msra.mxu0 0
        %2602 = vmatprep.subr.bf16.mxu0 0
        %2603 = vmatpush1.bf16.msra.mxu0 0
        %2604 = vmatprep.subr.bf16.mxu0 0
        %2605 = vmatpush1.bf16.msra.mxu0 0
        %2606 = vmatprep.subr.bf16.mxu0 0
        %2607 = vmatpush1.bf16.msra.mxu0 0
        %2608 = vmatprep.subr.bf16.mxu0 0
        %2609 = vmatpush1.bf16.msra.mxu0 0
        %2610 = vmatprep.subr.bf16.mxu0 0
        %2611 = vmatpush1.bf16.msra.mxu0 0
        %2612 = vmatprep.subr.bf16.mxu0 0
        %2613 = vmatpush1.bf16.msra.mxu0 0
        %2614 = vmatprep.subr.bf16.mxu0 0
        %2615 = vmatpush1.bf16.msra.mxu0 0
        %2616 = vmatprep.subr.bf16.mxu0 0
        %2617 = vmatpush1.bf16.msra.mxu0 0
        %2618 = vmatprep.mubr.bf16.mxu0 0
        %2619 = vmatmul.mubr.bf16.gmra.mrb[0].mxu0 %v2581
        %v2620 = vpop.f32.mrb[0].mxu0
        %v2621 = vadd.f32 0.0, %v2620
        %v2622 = vpop.f32.mrb[0].mxu0
        %v2623 = vpop.f32.mrb[0].mxu0
        %v2624 = vpop.f32.mrb[0].mxu0
        %2625 = vdwg.mxu0
        %2627 = vrot.lane.b32.xlu0 %v2399, 16
        %v2628 = vpop.permute.xlu0 %2627
        %2631 = vrot.lane.b32.xlu0 %v2510, 32
        %v2632 = vpop.permute.xlu0 %2631
        %2635 = vrot.lane.b32.xlu0 %v2621, 48
        %v2636 = vpop.permute.xlu0 %2635
        %v2638 = vsel %vm1260, %v2287, %v2628
        %v2639 = vsel %vm1720, %v2638, %v2632
        %v2640 = vsel %vm1722, %v2639, %v2636
        %s2641 = scalar_lea.vmem %s19, 32
        %v2642 = vld [vmem:[%s2641] sm:$0xf]
        %v2643 = vld [vmem:[%s2641 + $0x4] sm:$0xf]
        %v2644 = vld [vmem:[%s2641 + $0x8] sm:$0xf]
        %v2645 = vld [vmem:[%s2641 + $0xc] sm:$0xf]
        %v2646 = vld [vmem:[%s2641 + $0x10] sm:$0xf]
        %v2647 = vld [vmem:[%s2641 + $0x14] sm:$0xf]
        %v2648 = vld [vmem:[%s2641 + $0x18] sm:$0xf]
        %v2649 = vld [vmem:[%s2641 + $0x1c] sm:$0xf]
        %v2650 = vpack.c.bf16 %v2640, %v2640
        %v2659 = vunpack.c.l.b16 %v2642
        %v2660 = vunpack.c.l.b16 %v2643
        %v2661 = vunpack.c.l.b16 %v2644
        %v2662 = vunpack.c.l.b16 %v2645
        %v2663 = vunpack.c.l.b16 %v2646
        %v2664 = vunpack.c.l.b16 %v2647
        %v2665 = vunpack.c.l.b16 %v2648
        %v2666 = vunpack.c.l.b16 %v2649
        %v2667 = vpack.c.b16 %v2660, %v2659
        %v2668 = vpack.c.b16 %v2662, %v2661
        %v2669 = vpack.c.b16 %v2664, %v2663
        %v2670 = vpack.c.b16 %v2666, %v2665
        %v2676 = vsel %vm1068, %v2650, 0
        %2678 = vmatprep.subr.bf16.mxu0 0
        %2679 = vmatpush1.bf16.msra.mxu0 %v2667
        %2680 = vmatprep.subr.bf16.mxu0 0
        %2681 = vmatpush1.bf16.msra.mxu0 %v2668
        %2682 = vmatprep.subr.bf16.mxu0 0
        %2683 = vmatpush1.bf16.msra.mxu0 %v2669
        %2684 = vmatprep.subr.bf16.mxu0 0
        %2685 = vmatpush1.bf16.msra.mxu0 %v2670
        %2686 = vmatprep.subr.bf16.mxu0 0
        %2687 = vmatpush1.bf16.msra.mxu0 0
        %2688 = vmatprep.subr.bf16.mxu0 0
        %2689 = vmatpush1.bf16.msra.mxu0 0
        %2690 = vmatprep.subr.bf16.mxu0 0
        %2691 = vmatpush1.bf16.msra.mxu0 0
        %2692 = vmatprep.subr.bf16.mxu0 0
        %2693 = vmatpush1.bf16.msra.mxu0 0
        %2694 = vmatprep.subr.bf16.mxu0 0
        %2695 = vmatpush1.bf16.msra.mxu0 0
        %2696 = vmatprep.subr.bf16.mxu0 0
        %2697 = vmatpush1.bf16.msra.mxu0 0
        %2698 = vmatprep.subr.bf16.mxu0 0
        %2699 = vmatpush1.bf16.msra.mxu0 0
        %2700 = vmatprep.subr.bf16.mxu0 0
        %2701 = vmatpush1.bf16.msra.mxu0 0
        %2702 = vmatprep.subr.bf16.mxu0 0
        %2703 = vmatpush1.bf16.msra.mxu0 0
        %2704 = vmatprep.subr.bf16.mxu0 0
        %2705 = vmatpush1.bf16.msra.mxu0 0
        %2706 = vmatprep.subr.bf16.mxu0 0
        %2707 = vmatpush1.bf16.msra.mxu0 0
        %2708 = vmatprep.subr.bf16.mxu0 0
        %2709 = vmatpush1.bf16.msra.mxu0 0
        %2710 = vmatprep.mubr.bf16.mxu0 0
        %2711 = vmatmul.mubr.bf16.gmra.mrb[0].mxu0 %v2676
        %v2712 = vpop.f32.mrb[0].mxu0
        %v2713 = vadd.f32 0.0, %v2712
        %v2714 = vpop.f32.mrb[0].mxu0
        %v2715 = vpop.f32.mrb[0].mxu0
        %v2716 = vpop.f32.mrb[0].mxu0
        %2717 = vdwg.mxu0
        %v2718 = vadd.f32 %v2043, %v2713
        %s2719 = scalar_lea.vmem %s21, 1
        %v2720 = vld [vmem:[%s2719] sm:$0x1]
        %v2722 = vlaneseq
        %v2723 = vshrl.u32 %v2722, 7
        %v2724 = vsub.s32 0, %v2723
        %v2725 = vrot.slane %v2720, %v2724
        %v2727 = vadd.f32 %v2718, %v2725
        %s2728 = scalar_lea.vmem %s23, 1
        %v2729 = vld [vmem:[%s2728] sm:$0x1]
        %s2730 = scalar_lea.vmem %s25, 1
        %v2731 = vld [vmem:[%s2730] sm:$0x1]
        %v2732 = vsel %vm1122, %v2727, 0.0
        %2733 = vadd.xlane.f32.xlu0 %v2732
        %v2734 = vpop.xlane.xlu0 %2733
        %v2735 = vmul.f32 %v2734, %v1126
        %v2736 = vsub.f32 %v2727, %v2735
        %v2737 = vmul.f32 %v2736, %v2736
        %v2738 = vsel %vm1122, %v2737, 0.0
        %2739 = vadd.xlane.f32.xlu0 %v2738
        %v2740 = vpop.xlane.xlu0 %2739
        %v2741 = vmul.f32 %v2740, %v1126
        %v2742 = vadd.f32 %v2741, 1e-06
        %v2743 = vrsqrt.pop %v2742
        %v2744 = vmul.f32 %v2736, %v2743
        %v2746 = vlaneseq
        %v2747 = vshrl.u32 %v2746, 7
        %v2748 = vsub.s32 0, %v2747
        %v2749 = vrot.slane %v2729, %v2748
        %v2751 = vmul.f32 %v2744, %v2749
        %v2753 = vlaneseq
        %v2754 = vshrl.u32 %v2753, 7
        %v2755 = vsub.s32 0, %v2754
        %v2756 = vrot.slane %v2731, %v2755
        %v2758 = vadd.f32 %v2751, %v2756
        %s2759 = scalar_lea.vmem %s27, 32
        %v2760 = vld [vmem:[%s2759] sm:$0xf]
        %v2761 = vld [vmem:[%s2759 + $0x4] sm:$0xf]
        %v2762 = vld [vmem:[%s2759 + $0x8] sm:$0xf]
        %v2763 = vld [vmem:[%s2759 + $0xc] sm:$0xf]
        %v2764 = vld [vmem:[%s2759 + $0x10] sm:$0xf]
        %v2765 = vld [vmem:[%s2759 + $0x14] sm:$0xf]
        %v2766 = vld [vmem:[%s2759 + $0x18] sm:$0xf]
        %v2767 = vld [vmem:[%s2759 + $0x1c] sm:$0xf]
        %v2768 = vpack.c.bf16 %v2758, %v2758
        %s2769 = scalar_lea.vmem %s29, 1
        %v2770 = vld [vmem:[%s2769] sm:$0x1]
        %v2772 = vlaneseq
        %v2773 = vshrl.u32 %v2772, 7
        %v2774 = vsub.s32 0, %v2773
        %v2775 = vrot.slane %v2770, %v2774
        %v2785 = vunpack.c.l.b16 %v2760
        %v2786 = vunpack.c.l.b16 %v2761
        %v2787 = vunpack.c.l.b16 %v2762
        %v2788 = vunpack.c.l.b16 %v2763
        %v2789 = vunpack.c.l.b16 %v2764
        %v2790 = vunpack.c.l.b16 %v2765
        %v2791 = vunpack.c.l.b16 %v2766
        %v2792 = vunpack.c.l.b16 %v2767
        %v2793 = vpack.c.b16 %v2786, %v2785
        %v2794 = vpack.c.b16 %v2788, %v2787
        %v2795 = vpack.c.b16 %v2790, %v2789
        %v2796 = vpack.c.b16 %v2792, %v2791
        %v2802 = vsel %vm1068, %v2768, 0
        %2804 = vmatprep.subr.bf16.mxu0 0
        %2805 = vmatpush1.bf16.msra.mxu0 %v2793
        %2806 = vmatprep.subr.bf16.mxu0 0
        %2807 = vmatpush1.bf16.msra.mxu0 %v2794
        %2808 = vmatprep.subr.bf16.mxu0 0
        %2809 = vmatpush1.bf16.msra.mxu0 %v2795
        %2810 = vmatprep.subr.bf16.mxu0 0
        %2811 = vmatpush1.bf16.msra.mxu0 %v2796
        %2812 = vmatprep.subr.bf16.mxu0 0
        %2813 = vmatpush1.bf16.msra.mxu0 0
        %2814 = vmatprep.subr.bf16.mxu0 0
        %2815 = vmatpush1.bf16.msra.mxu0 0
        %2816 = vmatprep.subr.bf16.mxu0 0
        %2817 = vmatpush1.bf16.msra.mxu0 0
        %2818 = vmatprep.subr.bf16.mxu0 0
        %2819 = vmatpush1.bf16.msra.mxu0 0
        %2820 = vmatprep.subr.bf16.mxu0 0
        %2821 = vmatpush1.bf16.msra.mxu0 0
        %2822 = vmatprep.subr.bf16.mxu0 0
        %2823 = vmatpush1.bf16.msra.mxu0 0
        %2824 = vmatprep.subr.bf16.mxu0 0
        %2825 = vmatpush1.bf16.msra.mxu0 0
        %2826 = vmatprep.subr.bf16.mxu0 0
        %2827 = vmatpush1.bf16.msra.mxu0 0
        %2828 = vmatprep.subr.bf16.mxu0 0
        %2829 = vmatpush1.bf16.msra.mxu0 0
        %2830 = vmatprep.subr.bf16.mxu0 0
        %2831 = vmatpush1.bf16.msra.mxu0 0
        %2832 = vmatprep.subr.bf16.mxu0 0
        %2833 = vmatpush1.bf16.msra.mxu0 0
        %2834 = vmatprep.subr.bf16.mxu0 0
        %2835 = vmatpush1.bf16.msra.mxu0 0
        %2836 = vmatprep.mubr.bf16.mxu0 0
        %2837 = vmatmul.mubr.bf16.gmra.mrb[0].mxu0 %v2802
        %v2838 = vpop.f32.mrb[0].mxu0
        %v2839 = vadd.f32 %v2775, %v2838
        %v2840 = vpop.f32.mrb[0].mxu0
        %v2841 = vpop.f32.mrb[0].mxu0
        %v2842 = vpop.f32.mrb[0].mxu0
        %2843 = vdwg.mxu0
        %v2844 = vmul.f32 %v2839, 0.5
        %v2845 = vmul.f32 %v2839, 0.044715
        %v2846 = vmul.f32 %v2845, %v2839
        %v2847 = vmul.f32 %v2846, %v2839
        %v2848 = vadd.f32 %v2839, %v2847
        %v2849 = vmul.f32 %v2848, 0.7978846
        %v2850 = vtanh.pop %v2849
        %v2851 = vadd.f32 %v2850, 1.0
        %v2852 = vmul.f32 %v2844, %v2851
        %s2853 = scalar_lea.vmem %s31, 64
        %v2854 = vld [vmem:[%s2853] sm:$0xf]
        %v2855 = vld [vmem:[%s2853 + $0x4] sm:$0xf]
        %v2856 = vld [vmem:[%s2853 + $0x8] sm:$0xf]
        %v2857 = vld [vmem:[%s2853 + $0xc] sm:$0xf]
        %v2858 = vld [vmem:[%s2853 + $0x10] sm:$0xf]
        %v2859 = vld [vmem:[%s2853 + $0x14] sm:$0xf]
        %v2860 = vld [vmem:[%s2853 + $0x18] sm:$0xf]
        %v2861 = vld [vmem:[%s2853 + $0x1c] sm:$0xf]
        %v2862 = vld [vmem:[%s2853 + $0x20] sm:$0xf]
        %v2863 = vld [vmem:[%s2853 + $0x24] sm:$0xf]
        %v2864 = vld [vmem:[%s2853 + $0x28] sm:$0xf]
        %v2865 = vld [vmem:[%s2853 + $0x2c] sm:$0xf]
        %v2866 = vld [vmem:[%s2853 + $0x30] sm:$0xf]
        %v2867 = vld [vmem:[%s2853 + $0x34] sm:$0xf]
        %v2868 = vld [vmem:[%s2853 + $0x38] sm:$0xf]
        %v2869 = vld [vmem:[%s2853 + $0x3c] sm:$0xf]
        %v2870 = vpack.c.bf16 %v2852, %v2852
        %v2887 = vunpack.c.l.b16 %v2854
        %v2888 = vunpack.c.l.b16 %v2855
        %v2889 = vunpack.c.l.b16 %v2856
        %v2890 = vunpack.c.l.b16 %v2857
        %v2891 = vunpack.c.l.b16 %v2858
        %v2892 = vunpack.c.l.b16 %v2859
        %v2893 = vunpack.c.l.b16 %v2860
        %v2894 = vunpack.c.l.b16 %v2861
        %v2895 = vunpack.c.l.b16 %v2862
        %v2896 = vunpack.c.l.b16 %v2863
        %v2897 = vunpack.c.l.b16 %v2864
        %v2898 = vunpack.c.l.b16 %v2865
        %v2899 = vunpack.c.l.b16 %v2866
        %v2900 = vunpack.c.l.b16 %v2867
        %v2901 = vunpack.c.l.b16 %v2868
        %v2902 = vunpack.c.l.b16 %v2869
        %v2903 = vpack.c.b16 %v2888, %v2887
        %v2904 = vpack.c.b16 %v2890, %v2889
        %v2905 = vpack.c.b16 %v2892, %v2891
        %v2906 = vpack.c.b16 %v2894, %v2893
        %v2907 = vpack.c.b16 %v2896, %v2895
        %v2908 = vpack.c.b16 %v2898, %v2897
        %v2909 = vpack.c.b16 %v2900, %v2899
        %v2910 = vpack.c.b16 %v2902, %v2901
        %2919 = vmatprep.subr.bf16.mxu0 0
        %2920 = vmatpush1.bf16.msra.mxu0 %v2903
        %2921 = vmatprep.subr.bf16.mxu0 0
        %2922 = vmatpush1.bf16.msra.mxu0 %v2904
        %2923 = vmatprep.subr.bf16.mxu0 0
        %2924 = vmatpush1.bf16.msra.mxu0 %v2905
        %2925 = vmatprep.subr.bf16.mxu0 0
        %2926 = vmatpush1.bf16.msra.mxu0 %v2906
        %2927 = vmatprep.subr.bf16.mxu0 0
        %2928 = vmatpush1.bf16.msra.mxu0 %v2907
        %2929 = vmatprep.subr.bf16.mxu0 0
        %2930 = vmatpush1.bf16.msra.mxu0 %v2908
        %2931 = vmatprep.subr.bf16.mxu0 0
        %2932 = vmatpush1.bf16.msra.mxu0 %v2909
        %2933 = vmatprep.subr.bf16.mxu0 0
        %2934 = vmatpush1.bf16.msra.mxu0 %v2910
        %2935 = vmatprep.subr.bf16.mxu0 0
        %2936 = vmatpush1.bf16.msra.mxu0 0
        %2937 = vmatprep.subr.bf16.mxu0 0
        %2938 = vmatpush1.bf16.msra.mxu0 0
        %2939 = vmatprep.subr.bf16.mxu0 0
        %2940 = vmatpush1.bf16.msra.mxu0 0
        %2941 = vmatprep.subr.bf16.mxu0 0
        %2942 = vmatpush1.bf16.msra.mxu0 0
        %2943 = vmatprep.subr.bf16.mxu0 0
        %2944 = vmatpush1.bf16.msra.mxu0 0
        %2945 = vmatprep.subr.bf16.mxu0 0
        %2946 = vmatpush1.bf16.msra.mxu0 0
        %2947 = vmatprep.subr.bf16.mxu0 0
        %2948 = vmatpush1.bf16.msra.mxu0 0
        %2949 = vmatprep.subr.bf16.mxu0 0
        %2950 = vmatpush1.bf16.msra.mxu0 0
        %2951 = vmatprep.mubr.bf16.mxu0 0
        %2952 = vmatmul.mubr.bf16.gmra.mrb[0].mxu0 %v2870
        %v2953 = vpop.f32.mrb[0].mxu0
        %v2954 = vadd.f32 0.0, %v2953
        %v2955 = vpop.f32.mrb[0].mxu0
        %v2956 = vpop.f32.mrb[0].mxu0
        %v2957 = vpop.f32.mrb[0].mxu0
        %2958 = vdwg.mxu0
        %v2959 = vadd.f32 %v2727, %v2954
        %s2960 = scalar_lea.vmem %s33, 1
        %v2961 = vld [vmem:[%s2960] sm:$0x1]
        %v2963 = vlaneseq
        %v2964 = vshrl.u32 %v2963, 7
        %v2965 = vsub.s32 0, %v2964
        %v2966 = vrot.slane %v2961, %v2965
        %v2968 = vadd.f32 %v2959, %v2966
        %v2969 = vld [vmem:[%s35] sm:$0x1]
        %v2970 = vld [vmem:[%s37] sm:$0x1]
        %vm2971 = vcmask 516096
        %v2972 = vsel %vm2971, %v2968, 0.0
        %2973 = vadd.xlane.f32.xlu0 %v2972
        %v2974 = vpop.xlane.xlu0 %2973
        %v2975 = vmul.f32 %v2974, %v1126
        %v2976 = vsub.f32 %v2968, %v2975
        %v2977 = vmul.f32 %v2976, %v2976
        %v2978 = vsel %vm2971, %v2977, 0.0
        %2979 = vadd.xlane.f32.xlu0 %v2978
        %v2980 = vpop.xlane.xlu0 %2979
        %v2981 = vmul.f32 %v2980, %v1126
        %v2982 = vadd.f32 %v2981, 1e-06
        %v2983 = vrsqrt.pop %v2982
        %v2984 = vmul.f32 %v2976, %v2983
        %v2985 = vmul.f32 %v2984, %v2969
        %v2986 = vadd.f32 %v2985, %v2970
        %v2987 = vld [vmem:[%s39] sm:$0xf]
        %v2988 = vld [vmem:[%s39 + $0x4] sm:$0xf]
        %v2989 = vld [vmem:[%s39 + $0x8] sm:$0xf]
        %v2990 = vld [vmem:[%s39 + $0xc] sm:$0xf]
        %v2991 = vld [vmem:[%s39 + $0x10] sm:$0xf]
        %v2992 = vld [vmem:[%s39 + $0x14] sm:$0xf]
        %v2993 = vld [vmem:[%s39 + $0x18] sm:$0xf]
        %v2994 = vld [vmem:[%s39 + $0x1c] sm:$0xf]
        %v2995 = vpack.c.bf16 %v2986, %v2986
        %v2996 = vld [vmem:[%s41] sm:$0x1]
        %v3005 = vunpack.c.l.b16 %v2987
        %v3006 = vunpack.c.l.b16 %v2988
        %v3007 = vunpack.c.l.b16 %v2989
        %v3008 = vunpack.c.l.b16 %v2990
        %v3009 = vunpack.c.l.b16 %v2991
        %v3010 = vunpack.c.l.b16 %v2992
        %v3011 = vunpack.c.l.b16 %v2993
        %v3012 = vunpack.c.l.b16 %v2994
        %v3013 = vpack.c.b16 %v3006, %v3005
        %v3014 = vpack.c.b16 %v3008, %v3007
        %v3015 = vpack.c.b16 %v3010, %v3009
        %v3016 = vpack.c.b16 %v3012, %v3011
        %v3022 = vsel %vm1068, %v2995, 0
        %3024 = vmatprep.subr.bf16.mxu0 0
        %3025 = vmatpush1.bf16.msra.mxu0 %v3013
        %3026 = vmatprep.subr.bf16.mxu0 0
        %3027 = vmatpush1.bf16.msra.mxu0 %v3014
        %3028 = vmatprep.subr.bf16.mxu0 0
        %3029 = vmatpush1.bf16.msra.mxu0 %v3015
        %3030 = vmatprep.subr.bf16.mxu0 0
        %3031 = vmatpush1.bf16.msra.mxu0 %v3016
        %3032 = vmatprep.subr.bf16.mxu0 0
        %3033 = vmatpush1.bf16.msra.mxu0 0
        %3034 = vmatprep.subr.bf16.mxu0 0
        %3035 = vmatpush1.bf16.msra.mxu0 0
        %3036 = vmatprep.subr.bf16.mxu0 0
        %3037 = vmatpush1.bf16.msra.mxu0 0
        %3038 = vmatprep.subr.bf16.mxu0 0
        %3039 = vmatpush1.bf16.msra.mxu0 0
        %3040 = vmatprep.subr.bf16.mxu0 0
        %3041 = vmatpush1.bf16.msra.mxu0 0
        %3042 = vmatprep.subr.bf16.mxu0 0
        %3043 = vmatpush1.bf16.msra.mxu0 0
        %3044 = vmatprep.subr.bf16.mxu0 0
        %3045 = vmatpush1.bf16.msra.mxu0 0
        %3046 = vmatprep.subr.bf16.mxu0 0
        %3047 = vmatpush1.bf16.msra.mxu0 0
        %3048 = vmatprep.subr.bf16.mxu0 0
        %3049 = vmatpush1.bf16.msra.mxu0 0
        %3050 = vmatprep.subr.bf16.mxu0 0
        %3051 = vmatpush1.bf16.msra.mxu0 0
        %3052 = vmatprep.subr.bf16.mxu0 0
        %3053 = vmatpush1.bf16.msra.mxu0 0
        %3054 = vmatprep.subr.bf16.mxu0 0
        %3055 = vmatpush1.bf16.msra.mxu0 0
        %3056 = vmatprep.mubr.bf16.mxu0 0
        %3057 = vmatmul.mubr.bf16.gmra.mrb[0].mxu0 %v3022
        %v3058 = vpop.f32.mrb[0].mxu0
        %v3059 = vadd.f32 %v2996, %v3058
        %v3060 = vpop.f32.mrb[0].mxu0
        %v3061 = vpop.f32.mrb[0].mxu0
        %v3062 = vpop.f32.mrb[0].mxu0
        %3063 = vdwg.mxu0
        %v3064 = vld [vmem:[%s47] sm:$0x1]
        %v3065 = vsub.f32 %v3059, %v3064
        %v3066 = vld [vmem:[%s49] sm:$0x1]
        %v3067 = vadd.f32 %v3066, 1e-05
        %v3068 = vrsqrt.pop %v3067
        %v3069 = vmul.f32 %v3065, %v3068
        %v3070 = vld [vmem:[%s43] sm:$0x1]
        %v3071 = vmul.f32 %v3069, %v3070
        %v3072 = vld [vmem:[%s45] sm:$0x1]
        %v3073 = vadd.f32 %v3071, %v3072
        %v3074 = vmax.f32 %v3073, 0.0
        %v3075 = vld [vmem:[%s51] sm:$0xf]
        %v3076 = vld [vmem:[%s51 + $0x4] sm:$0xf]
        %v3077 = vld [vmem:[%s51 + $0x8] sm:$0xf]
        %v3078 = vld [vmem:[%s51 + $0xc] sm:$0xf]
        %v3079 = vpack.c.bf16 %v3074, %v3074
        %v3080 = vld [vmem:[%s53] sm:$0x1]
        %v3085 = vunpack.c.l.b16 %v3075
        %v3086 = vunpack.c.l.b16 %v3076
        %v3087 = vunpack.c.l.b16 %v3077
        %v3088 = vunpack.c.l.b16 %v3078
        %v3089 = vpack.c.b16 %v3086, %v3085
        %v3090 = vpack.c.b16 %v3088, %v3087
        %v3094 = vsel %vm1720, %v3079, 0
        %3096 = vmatprep.subr.bf16.mxu0 0
        %3097 = vmatpush1.bf16.msra.mxu0 %v3089
        %3098 = vmatprep.subr.bf16.mxu0 0
        %3099 = vmatpush1.bf16.msra.mxu0 %v3090
        %3100 = vmatprep.subr.bf16.mxu0 0
        %3101 = vmatpush1.bf16.msra.mxu0 0
        %3102 = vmatprep.subr.bf16.mxu0 0
        %3103 = vmatpush1.bf16.msra.mxu0 0
        %3104 = vmatprep.subr.bf16.mxu0 0
        %3105 = vmatpush1.bf16.msra.mxu0 0
        %3106 = vmatprep.subr.bf16.mxu0 0
        %3107 = vmatpush1.bf16.msra.mxu0 0
        %3108 = vmatprep.subr.bf16.mxu0 0
        %3109 = vmatpush1.bf16.msra.mxu0 0
        %3110 = vmatprep.subr.bf16.mxu0 0
        %3111 = vmatpush1.bf16.msra.mxu0 0
        %3112 = vmatprep.subr.bf16.mxu0 0
        %3113 = vmatpush1.bf16.msra.mxu0 0
        %3114 = vmatprep.subr.bf16.mxu0 0
        %3115 = vmatpush1.bf16.msra.mxu0 0
        %3116 = vmatprep.subr.bf16.mxu0 0
        %3117 = vmatpush1.bf16.msra.mxu0 0
        %3118 = vmatprep.subr.bf16.mxu0 0
        %3119 = vmatpush1.bf16.msra.mxu0 0
        %3120 = vmatprep.subr.bf16.mxu0 0
        %3121 = vmatpush1.bf16.msra.mxu0 0
        %3122 = vmatprep.subr.bf16.mxu0 0
        %3123 = vmatpush1.bf16.msra.mxu0 0
        %3124 = vmatprep.subr.bf16.mxu0 0
        %3125 = vmatpush1.bf16.msra.mxu0 0
        %3126 = vmatprep.subr.bf16.mxu0 0
        %3127 = vmatpush1.bf16.msra.mxu0 0
        %3128 = vmatprep.mubr.bf16.mxu0 0
        %3129 = vmatmul.mubr.bf16.gmra.mrb[0].mxu0 %v3094
        %v3130 = vpop.f32.mrb[0].mxu0
        %v3131 = vadd.f32 %v3080, %v3130
        %v3132 = vpop.f32.mrb[0].mxu0
        %v3133 = vpop.f32.mrb[0].mxu0
        %v3134 = vpop.f32.mrb[0].mxu0
        %3135 = vdwg.mxu0
        %v3136 = vld [vmem:[%s55] sm:$0xff]
        %v3137 = vld [vmem:[%s55 + $0x8] sm:$0xff]
        %v3138 = vld [vmem:[#allocation2] sm:$0x1]
        %v3140 = vsel %vm1260, %v3131, 0
        %3142 = vmatprep.subr.mxu0 0.0
        %3143 = vmatpush1.msra.mxu0 %v3136
        %3144 = vmatprep.subr.mxu0 0.0
        %3145 = vmatpush1.msra.mxu0 %v3137
        %3146 = vmatprep.subr.mxu0 0.0
        %3147 = vmatpush1.msra.mxu0 0.0
        %3148 = vmatprep.subr.mxu0 0.0
        %3149 = vmatpush1.msra.mxu0 0.0
        %3150 = vmatprep.subr.mxu0 0.0
        %3151 = vmatpush1.msra.mxu0 0.0
        %3152 = vmatprep.subr.mxu0 0.0
        %3153 = vmatpush1.msra.mxu0 0.0
        %3154 = vmatprep.subr.mxu0 0.0
        %3155 = vmatpush1.msra.mxu0 0.0
        %3156 = vmatprep.subr.mxu0 0.0
        %3157 = vmatpush1.msra.mxu0 0.0
        %3158 = vmatprep.subr.mxu0 0.0
        %3159 = vmatpush1.msra.mxu0 0.0
        %3160 = vmatprep.subr.mxu0 0.0
        %3161 = vmatpush1.msra.mxu0 0.0
        %3162 = vmatprep.subr.mxu0 0.0
        %3163 = vmatpush1.msra.mxu0 0.0
        %3164 = vmatprep.subr.mxu0 0.0
        %3165 = vmatpush1.msra.mxu0 0.0
        %3166 = vmatprep.subr.mxu0 0.0
        %3167 = vmatpush1.msra.mxu0 0.0
        %3168 = vmatprep.subr.mxu0 0.0
        %3169 = vmatpush1.msra.mxu0 0.0
        %3170 = vmatprep.subr.mxu0 0.0
        %3171 = vmatpush1.msra.mxu0 0.0
        %3172 = vmatprep.subr.mxu0 0.0
        %3173 = vmatpush1.msra.mxu0 0.0
        %3174 = vmatprep.subr.mxu0 0.0
        %3175 = vmatpush1.msra.mxu0 0.0
        %3176 = vmatprep.subr.mxu0 0.0
        %3177 = vmatpush1.msra.mxu0 0.0
        %3178 = vmatprep.subr.mxu0 0.0
        %3179 = vmatpush1.msra.mxu0 0.0
        %3180 = vmatprep.subr.mxu0 0.0
        %3181 = vmatpush1.msra.mxu0 0.0
        %3182 = vmatprep.subr.mxu0 0.0
        %3183 = vmatpush1.msra.mxu0 0.0
        %3184 = vmatprep.subr.mxu0 0.0
        %3185 = vmatpush1.msra.mxu0 0.0
        %3186 = vmatprep.subr.mxu0 0.0
        %3187 = vmatpush1.msra.mxu0 0.0
        %3188 = vmatprep.subr.mxu0 0.0
        %3189 = vmatpush1.msra.mxu0 0.0
        %3190 = vmatprep.subr.mxu0 0.0
        %3191 = vmatpush1.msra.mxu0 0.0
        %3192 = vmatprep.subr.mxu0 0.0
        %3193 = vmatpush1.msra.mxu0 0.0
        %3194 = vmatprep.subr.mxu0 0.0
        %3195 = vmatpush1.msra.mxu0 0.0
        %3196 = vmatprep.subr.mxu0 0.0
        %3197 = vmatpush1.msra.mxu0 0.0
        %3198 = vmatprep.subr.mxu0 0.0
        %3199 = vmatpush1.msra.mxu0 0.0
        %3200 = vmatprep.subr.mxu0 0.0
        %3201 = vmatpush1.msra.mxu0 0.0
        %3202 = vmatprep.subr.mxu0 0.0
        %3203 = vmatpush1.msra.mxu0 0.0
        %3204 = vmatprep.subr.mxu0 0.0
        %3205 = vmatpush1.msra.mxu0 0.0
        %3206 = vmatprep.mubr.f32.mxu0 0.0
        %3207 = vmatmul.mubr.f32.gmra.mrb[0].mxu0 %v3140
        %v3208 = vpop.f32.mrb[0].mxu0
        %v3209 = vadd.f32 %v3138, %v3208
        %v3210 = vpop.f32.mrb[0].mxu0
        %3211 = vdwg.mxu0
        %v3212 = vmax.f32 %v3209, 0.0
        %v3213 = vld [vmem:[%s59] sm:$0x1]
        %v3214 = vld [vmem:[%s61] sm:$0x1]
        %vm3215 = vcmask 7168
        %v3217 = vsel %vm3215, %v3212, 0
        %v3220 = vsel %vm1116, %v3213, 0
        %3222 = vmatprep.subr.mxu0 0.0
        %3223 = vmatpush1.msra.mxu0 %v3220
        %3224 = vmatprep.subr.mxu0 0.0
        %3225 = vmatpush1.msra.mxu0 0.0
        %3226 = vmatprep.subr.mxu0 0.0
        %3227 = vmatpush1.msra.mxu0 0.0
        %3228 = vmatprep.subr.mxu0 0.0
        %3229 = vmatpush1.msra.mxu0 0.0
        %3230 = vmatprep.subr.mxu0 0.0
        %3231 = vmatpush1.msra.mxu0 0.0
        %3232 = vmatprep.subr.mxu0 0.0
        %3233 = vmatpush1.msra.mxu0 0.0
        %3234 = vmatprep.subr.mxu0 0.0
        %3235 = vmatpush1.msra.mxu0 0.0
        %3236 = vmatprep.subr.mxu0 0.0
        %3237 = vmatpush1.msra.mxu0 0.0
        %3238 = vmatprep.subr.mxu0 0.0
        %3239 = vmatpush1.msra.mxu0 0.0
        %3240 = vmatprep.subr.mxu0 0.0
        %3241 = vmatpush1.msra.mxu0 0.0
        %3242 = vmatprep.subr.mxu0 0.0
        %3243 = vmatpush1.msra.mxu0 0.0
        %3244 = vmatprep.subr.mxu0 0.0
        %3245 = vmatpush1.msra.mxu0 0.0
        %3246 = vmatprep.subr.mxu0 0.0
        %3247 = vmatpush1.msra.mxu0 0.0
        %3248 = vmatprep.subr.mxu0 0.0
        %3249 = vmatpush1.msra.mxu0 0.0
        %3250 = vmatprep.subr.mxu0 0.0
        %3251 = vmatpush1.msra.mxu0 0.0
        %3252 = vmatprep.subr.mxu0 0.0
        %3253 = vmatpush1.msra.mxu0 0.0
        %3254 = vmatprep.subr.mxu0 0.0
        %3255 = vmatpush1.msra.mxu0 0.0
        %3256 = vmatprep.subr.mxu0 0.0
        %3257 = vmatpush1.msra.mxu0 0.0
        %3258 = vmatprep.subr.mxu0 0.0
        %3259 = vmatpush1.msra.mxu0 0.0
        %3260 = vmatprep.subr.mxu0 0.0
        %3261 = vmatpush1.msra.mxu0 0.0
        %3262 = vmatprep.subr.mxu0 0.0
        %3263 = vmatpush1.msra.mxu0 0.0
        %3264 = vmatprep.subr.mxu0 0.0
        %3265 = vmatpush1.msra.mxu0 0.0
        %3266 = vmatprep.subr.mxu0 0.0
        %3267 = vmatpush1.msra.mxu0 0.0
        %3268 = vmatprep.subr.mxu0 0.0
        %3269 = vmatpush1.msra.mxu0 0.0
        %3270 = vmatprep.subr.mxu0 0.0
        %3271 = vmatpush1.msra.mxu0 0.0
        %3272 = vmatprep.subr.mxu0 0.0
        %3273 = vmatpush1.msra.mxu0 0.0
        %3274 = vmatprep.subr.mxu0 0.0
        %3275 = vmatpush1.msra.mxu0 0.0
        %3276 = vmatprep.subr.mxu0 0.0
        %3277 = vmatpush1.msra.mxu0 0.0
        %3278 = vmatprep.subr.mxu0 0.0
        %3279 = vmatpush1.msra.mxu0 0.0
        %3280 = vmatprep.subr.mxu0 0.0
        %3281 = vmatpush1.msra.mxu0 0.0
        %3282 = vmatprep.subr.mxu0 0.0
        %3283 = vmatpush1.msra.mxu0 0.0
        %3284 = vmatprep.subr.mxu0 0.0
        %3285 = vmatpush1.msra.mxu0 0.0
        %3286 = vmatprep.mubr.f32.mxu0 0.0
        %3287 = vmatmul.mubr.f32.gmra.mrb[0].mxu0 %v3217
        %v3288 = vpop.f32.mrb[0].mxu0
        %v3289 = vadd.f32 %v3214, %v3288
        %v3290 = vpop.f32.mrb[0].mxu0
        %3291 = vdwg.mxu0
        %v3292 = vsub.f32 0.0, %v3289
        %v3293 = vmul.f32 %v3292, 1.442695
        %v3294 = vpow.pop %v3293
        %v3295 = vadd.f32 %v3294, 1.0
        %v3296 = vrcp.pop %v3295
        %v3297 = vmul.f32 1.0, %v3296
        %v3298 = vmul.f32 %v3131, %v3297
        %vm3299 = vcmask 122880
        %3300 = vst.msk [vmem:[%s952] sm:$0x1] %vm3299, %v3298
        %s3301 = sand.u32 %s743, 1
        %s3302 = scalar_lea.sflag [#allocation4], %s3301
        %s3303 = sand.u32 %s743, 1
        %s3304 = scalar_lea.vmem [#allocation3], %s3303
        // Predicated region
        $region145: #{sp_model_forward.1} parent=143 // pred_check
          %p3305 = pneg %p753
        $region146: #{sp_model_forward.1} parent=143 // pred_check_branch
          %3307 = sbr.rel (%p3305) target = $region148
        $region147: #{sp_model_forward.1} parent=143 // pred_region
          %s3309 = ssub.s32 16, 16
          %3310 = vsyncadd %s3302, %s3309
          %s3311 = smul.addr %s79, 16
          %s3312 = scalar_lea.hbm %s63, %s3311
          %s3314 = sshll.u32 %s3304, 4
          %s3315 = int_to_ptr.vmem [resolvable:$true] %s3314
          %3317 = dma.vmem_to_hbm [thread:$0]  %s3315, 16, %s3312, %s3302
        $region148: #{sp_model_forward.1} parent=143 // pred_fallthru
          _
      $region144: #{sp_model_forward.1} parent=5 // pred_fallthru
        _
      %p3318 = scmp.le.s32.totalorder 2, %s74
      // Predicated region
      $region149: #{sp_model_forward.1} parent=5 // pred_check
        %p3319 = pneg %p3318
      $region150: #{sp_model_forward.1} parent=5 // pred_check_branch
        %3321 = sbr.rel (%p3319) target = $region152
      $region151: #{sp_model_forward.1} parent=5 // pred_region
        %s3322 = ssub.s32 %s74, 2
        // Predicated region
        $region153: #{sp_model_forward.1} parent=151 // pred_check
          %p3323 = pneg %p759
        $region154: #{sp_model_forward.1} parent=151 // pred_check_branch
          %3325 = sbr.rel (%p3323) target = $region156
        $region155: #{sp_model_forward.1} parent=151 // pred_region
          %s3326 = sand.u32 %s744, 1
          %s3327 = scalar_lea.sflag [#allocation4], %s3326
          %s3328 = sand.u32 %s744, 1
          %s3329 = scalar_lea.vmem [#allocation3], %s3328
          %3330 = dma.done %s3327, 16
        $region156: #{sp_model_forward.1} parent=151 // pred_fallthru
          _
      $region152: #{sp_model_forward.1} parent=5 // pred_fallthru
        _
    $region6: #{sp_model_forward.1} parent=1 // loop_footer
      %s78 = sadd.s32 1, %s74
    $region7: #{sp_model_forward.1} parent=1 // loop_footer_branch
      %73 = sbr.rel target = $region3
    $region8: #{sp_model_forward.1} parent=1 // loop_exit
      _
    %3331 = vsyncpa [#allocation4], 1
    %s3332 = scalar_lea.sflag [#allocation4], 1
    %3333 = vsyncpa %s3332, 1

</llo_original>
